<compile_context>
chip_gen: v6e
topology: v6e:2x2x1
jax: 0.10.0
libtpu: 0.0.40
codegen_flags: <defaults>
</compile_context>

<pallas_src>
import functools

import jax
import jax.numpy as jnp
from jax.experimental import pallas as pl
from jax.experimental.pallas import tpu as pltpu

HIDDEN = 128            # args['hidden_channels']
NUM_LAYERS = 4          # args['num_layers']=20 in the reference config; reduced for a small test
MLP_LAYERS = 3          # args['mlp_layers'] -> MLP channels [H, 2H, 2H, H] (last_lin=True)
NUM_CLASSES = 2         # args['nclasses']
EPS_MSG = 1e-7
BN_EPS = 1e-5

NODE_TILE = 1024        # rows per grid step (amortizes per-step overhead, ~1 MiB/block)
EDGE_TILE = 1024
VMEM_LIMIT_BYTES = 32 * 1024 * 1024

ATOM_FEATURE_DIMS = [119, 4, 12, 12, 10, 6, 6, 2, 2]   # get_atom_feature_dims()
BOND_FEATURE_DIMS = [5, 6, 2]                           # get_bond_feature_dims()


def _round_up(x, m):
    return ((x + m - 1) // m) * m


def _pick_tile(n_rows, max_tile):
    # >= 2 grid steps when possible (v7x megacore sharding), rows multiple of 16
    # (bf16 sublane packing), capped by max_tile.
    half = -(-n_rows // 2)
    return min(max_tile, _round_up(max(half, 16), 16))


def _cparams():
    return pltpu.CompilerParams(
        dimension_semantics=("parallel",),      # node/edge tiles are independent
        vmem_limit_bytes=VMEM_LIMIT_BYTES)


# ----------------------------- Pallas kernels -------------------------------

def _emit_stats(acc_f32, stats_ref, n_valid, tm):
    # Masked per-column sum / sum-of-squares of this tile (rows >= n_valid are
    # padding and must not contribute).  Written as rows 0/1 of an aligned
    # (8, C) block; the tiny cross-tile reduction finishes in JAX.
    cout = acc_f32.shape[-1]
    rows = pl.program_id(0) * tm + jax.lax.broadcasted_iota(jnp.int32, (tm, 1), 0)
    masked = jnp.where(rows < n_valid, acc_f32, 0.0)
    col_sum = jnp.sum(masked, axis=0, keepdims=True)            # (1, C)
    col_sq = jnp.sum(masked * masked, axis=0, keepdims=True)    # (1, C)
    rid = jax.lax.broadcasted_iota(jnp.int32, (8, cout), 0)
    stats_ref[...] = jnp.where(rid == 0, col_sum,
                               jnp.where(rid == 1, col_sq, 0.0))[None]


def _lin_add_kernel(x_ref, m_ref, w_ref, b_ref, out_ref, stats_ref, *, n_valid, tm):
    # y1 = (x + m) @ W1 + b1   (bf16 MXU, f32 accumulate) + fused BN partial stats
    h = (x_ref[...] + m_ref[...]).astype(jnp.bfloat16)
    acc = jnp.dot(h, w_ref[...], preferred_element_type=jnp.float32) + b_ref[...]
    out_ref[...] = acc.astype(out_ref.dtype)                    # bf16 intermediate
    _emit_stats(acc, stats_ref, n_valid, tm)


def _bn_relu_lin_kernel(y_ref, s_ref, t_ref, w_ref, b_ref, out_ref, stats_ref,
                        *, n_valid, tm):
    # out = relu(y * scale + shift) @ W + b   (scale/shift = folded BN stats)
    z = jnp.maximum(y_ref[...].astype(jnp.float32) * s_ref[...] + t_ref[...], 0.0)
    acc = jnp.dot(z.astype(jnp.bfloat16), w_ref[...],
                  preferred_element_type=jnp.float32) + b_ref[...]
    out_ref[...] = acc.astype(out_ref.dtype)
    _emit_stats(acc, stats_ref, n_valid, tm)


def _bn_relu_lin_res_kernel(y_ref, s_ref, t_ref, w_ref, b_ref, r_ref, out_ref,
                            stats_ref, *, n_valid, tm):
    # same as above with the 'res+' residual fused into the epilogue; the fused
    # stats of the output feed the NEXT layer's pre-activation BatchNorm.
    z = jnp.maximum(y_ref[...].astype(jnp.float32) * s_ref[...] + t_ref[...], 0.0)
    acc = (jnp.dot(z.astype(jnp.bfloat16), w_ref[...],
                   preferred_element_type=jnp.float32)
           + b_ref[...] + r_ref[...])
    out_ref[...] = acc.astype(out_ref.dtype)
    _emit_stats(acc, stats_ref, n_valid, tm)


def _scale_shift_act_kernel(h_ref, s_ref, t_ref, out_ref, *, apply_relu):
    # pre-activation BatchNorm (+ReLU) of the 'res+' block, stats precomputed
    y = h_ref[...] * s_ref[...] + t_ref[...]
    if apply_relu:
        y = jnp.maximum(y, 0.0)
    out_ref[...] = y


def _message_kernel(xsrc_ref, eemb_ref, msg_ref):
    # GENConv.message: relu(x_j + edge_attr) + eps   (single output; temperature
    # is applied later at the point of use — saves an ExC write+read)
    msg_ref[...] = jnp.maximum(xsrc_ref[...] + eemb_ref[...], 0.0) + EPS_MSG


# ----------------------------- Pallas wrappers ------------------------------

_ROW = lambda i: (i, 0)
_REP = lambda i: (0, 0)
_STATS = lambda i: (i, 0, 0)


def lin_add(x, m, w_bf16, b, tm, n_valid):
    n, cin = x.shape
    cout = w_bf16.shape[1]
    g = n // tm
    return pl.pallas_call(
        functools.partial(_lin_add_kernel, n_valid=n_valid, tm=tm),
        out_shape=(jax.ShapeDtypeStruct((n, cout), jnp.bfloat16),
                   jax.ShapeDtypeStruct((g, 8, cout), jnp.float32)),
        grid=(g,),
        in_specs=[pl.BlockSpec((tm, cin), _ROW),
                  pl.BlockSpec((tm, cin), _ROW),
                  pl.BlockSpec((cin, cout), _REP),
                  pl.BlockSpec((1, cout), _REP)],
        out_specs=(pl.BlockSpec((tm, cout), _ROW),
                   pl.BlockSpec((1, 8, cout), _STATS)),
        compiler_params=_cparams(),
    )(x, m, w_bf16, b)


def bn_relu_lin(y, scale, shift, w_bf16, b, tm, n_valid, out_dtype, res=None):
    n, cin = y.shape
    cout = w_bf16.shape[1]
    g = n // tm
    in_specs = [pl.BlockSpec((tm, cin), _ROW),
                pl.BlockSpec((1, cin), _REP),
                pl.BlockSpec((1, cin), _REP),
                pl.BlockSpec((cin, cout), _REP),
                pl.BlockSpec((1, cout), _REP)]
    operands = [y, scale, shift, w_bf16, b]
    aliases = {}
    if res is None:
        kernel = functools.partial(_bn_relu_lin_kernel, n_valid=n_valid, tm=tm)
    else:
        kernel = functools.partial(_bn_relu_lin_res_kernel, n_valid=n_valid, tm=tm)
        in_specs.append(pl.BlockSpec((tm, cout), _ROW))
        operands.append(res)
        aliases = {5: 0}   # res (f32, same shape/dtype as out) is dead after this call
    return pl.pallas_call(
        kernel,
        out_shape=(jax.ShapeDtypeStruct((n, cout), out_dtype),
                   jax.ShapeDtypeStruct((g, 8, cout), jnp.float32)),
        grid=(g,),
        in_specs=in_specs,
        out_specs=(pl.BlockSpec((tm, cout), _ROW),
                   pl.BlockSpec((1, 8, cout), _STATS)),
        input_output_aliases=aliases,
        compiler_params=_cparams(),
    )(*operands)


def scale_shift_act(h, scale, shift, apply_relu, tm):
    n, c = h.shape
    return pl.pallas_call(
        functools.partial(_scale_shift_act_kernel, apply_relu=apply_relu),
        out_shape=jax.ShapeDtypeStruct((n, c), jnp.float32),
        grid=(n // tm,),
        in_specs=[pl.BlockSpec((tm, c), _ROW),
                  pl.BlockSpec((1, c), _REP),
                  pl.BlockSpec((1, c), _REP)],
        out_specs=pl.BlockSpec((tm, c), _ROW),
        compiler_params=_cparams(),
    )(h, scale, shift)


def edge_message(x_src, e_emb, tm):
    e, c = x_src.shape
    return pl.pallas_call(
        _message_kernel,
        out_shape=jax.ShapeDtypeStruct((e, c), jnp.float32),
        grid=(e // tm,),
        in_specs=[pl.BlockSpec((tm, c), _ROW),
                  pl.BlockSpec((tm, c), _ROW)],
        out_specs=pl.BlockSpec((tm, c), _ROW),
        compiler_params=_cparams(),
    )(x_src, e_emb)


# ----------------------------- Parameters -----------------------------------

def _xavier_uniform(key, shape):
    fan_out, fan_in = shape
    a = (6.0 / (fan_in + fan_out)) ** 0.5
    return jax.random.uniform(key, shape, jnp.float32, -a, a)


def init_params(key):
    keys = iter(jax.random.split(key, 4096))
    params = {}
    params['atom_emb'] = [_xavier_uniform(next(keys), (d, HIDDEN)) for d in ATOM_FEATURE_DIMS]

    gcn_layers = []
    dims = [HIDDEN] + [2 * HIDDEN] * (MLP_LAYERS - 1) + [HIDDEN]
    for _ in range(NUM_LAYERS):
        lp = {}
        lp['bond_emb'] = [_xavier_uniform(next(keys), (d, HIDDEN)) for d in BOND_FEATURE_DIMS]
        lp['t'] = jnp.float32(1.0)     # learn_t=True, init t=1.0
        mlp = []
        for i in range(1, len(dims)):
            cin, cout = dims[i - 1], dims[i]
            w = (jax.random.normal(next(keys), (cin, cout), jnp.float32)
                 * (1.0 / cin) ** 0.5).astype(jnp.bfloat16)   # bf16 MXU weights
            b = jnp.zeros((1, cout), jnp.float32)
            mlp += [w, b]
            if i != len(dims) - 1:     # last_lin=True: no norm/act after the last Linear
                mlp += [jnp.ones((1, cout), jnp.float32), jnp.zeros((1, cout), jnp.float32)]
        lp['mlp'] = mlp
        gcn_layers.append(lp)
    params['gcns'] = gcn_layers
    params['norms'] = [(jnp.ones((1, HIDDEN), jnp.float32), jnp.zeros((1, HIDDEN), jnp.float32))
                       for _ in range(NUM_LAYERS)]
    params['pred_w'] = jax.random.normal(next(keys), (HIDDEN, NUM_CLASSES), jnp.float32) * (1.0 / HIDDEN) ** 0.5
    params['pred_b'] = jnp.zeros((NUM_CLASSES,), jnp.float32)
    return params


# ----------------------------- Forward pass ---------------------------------

def _sum_embeddings(tables, idx):
    # AtomEncoder / BondEncoder: sum of per-column embedding lookups.
    h = jnp.zeros((idx.shape[0], HIDDEN), jnp.float32)
    for i, tbl in enumerate(tables):
        h = h + jnp.take(tbl, idx[:, i], axis=0)
    return h


def _bn_from_partial(part, n_valid, gamma, beta):
    # Finish the fused per-tile partial stats (tiny: grid x 2 x C) and fold the
    # BatchNorm1d training-mode batch statistics (biased variance) into a
    # per-column scale/shift so the apply step can be tiled.
    sums = jnp.sum(part[:, 0, :], axis=0, keepdims=True)
    sqs = jnp.sum(part[:, 1, :], axis=0, keepdims=True)
    mean = sums / n_valid
    var = jnp.maximum(sqs / n_valid - mean * mean, 0.0)
    scale = gamma * jax.lax.rsqrt(var + BN_EPS)
    shift = beta - mean * scale
    return scale, shift


def genconv(lp, x_in, res, src, dst, edge_attr, n_valid, tm_n, tm_e):
    n_pad = x_in.shape[0]
    e_emb = _sum_embeddings(lp['bond_emb'], edge_attr)       # per-layer BondEncoder
    x_src = jnp.take(x_in, src, axis=0)                      # gather x_j
    msg = edge_message(x_src, e_emb, tm_e)                   # Pallas: relu(x_j+e)+eps

    # softmax aggregation: scatter_softmax(msg * t) then weighted scatter-sum.
    # Temperature applied here (sign-safe w.r.t. learn_t) rather than stored.
    # TODO(synk): move the dst-sorted gather + online-softmax + scatter (and the
    # x+m add) into a single CSR-style Pallas kernel with PrefetchScalarGridSpec.
    nseg = n_pad + 1                                          # last segment collects padded edges
    scaled = msg * lp['t']
    seg_max = jax.ops.segment_max(scaled, dst, num_segments=nseg)
    ex = jnp.exp(scaled - seg_max[dst])
    denom = jax.ops.segment_sum(ex, dst, num_segments=nseg)
    m = jax.ops.segment_sum(msg * (ex / denom[dst]), dst, num_segments=nseg)[:n_pad]

    # MLP(h = x + m): Lin -> BN -> ReLU -> Lin -> BN -> ReLU -> Lin (+ residual),
    # with BN batch-stat partials fused into each matmul's epilogue.
    w1, b1, g1, be1, w2, b2, g2, be2, w3, b3 = lp['mlp']
    y1, st1 = lin_add(x_in, m, w1, b1, tm_n, n_valid)                 # bf16 y1 + stats
    s1, t1 = _bn_from_partial(st1, n_valid, g1, be1)
    y2, st2 = bn_relu_lin(y1, s1, t1, w2, b2, tm_n, n_valid, jnp.bfloat16)
    s2, t2 = _bn_from_partial(st2, n_valid, g2, be2)
    h, sth = bn_relu_lin(y2, s2, t2, w3, b3, tm_n, n_valid, jnp.float32, res=res)
    return h, sth                                              # h stats feed the next pre-norm


def deeper_gcn_forward(params, x_atom, edge_index, edge_attr, batch, num_graphs):
    n = x_atom.shape[0]
    e = edge_attr.shape[0]

    # tile sizes / padding (padded node rows and padded edges never affect real rows)
    tm_n = _pick_tile(n, NODE_TILE)
    n_pad = _round_up(n, tm_n)
    tm_e = _pick_tile(e, EDGE_TILE)
    e_pad = _round_up(e, tm_e)

    src, dst = edge_index[0], edge_index[1]
    if e_pad > e:
        pad = e_pad - e
        src = jnp.concatenate([src, jnp.zeros((pad,), src.dtype)])
        dst = jnp.concatenate([dst, jnp.full((pad,), n_pad, dst.dtype)])  # dummy segment
        edge_attr = jnp.concatenate(
            [edge_attr, jnp.zeros((pad, edge_attr.shape[1]), edge_attr.dtype)])

    h = _sum_embeddings(params['atom_emb'], x_atom)           # AtomEncoder
    if n_pad > n:
        h = jnp.pad(h, ((0, n_pad - n), (0, 0)))
    # conv_encode_edge=True: raw edge_attr is handed to every GENConv (which bond-encodes it)

    # block == 'res+' : BN -> ReLU -> GraphConv -> Res
    h, sth = genconv(params['gcns'][0], h, None, src, dst, edge_attr, n, tm_n, tm_e)
    for layer in range(1, NUM_LAYERS):
        g, b = params['norms'][layer - 1]
        s, t = _bn_from_partial(sth, n, g, b)                 # stats fused in previous kernel
        h2 = scale_shift_act(h, s, t, True, tm_n)             # pre-activation BN + ReLU
        # TODO(synk): stochastic F.dropout (p=0.2, training=True) not replicated; dropout=False path
        h, sth = genconv(params['gcns'][layer], h2, h, src, dst, edge_attr, n, tm_n, tm_e)
    g, b = params['norms'][NUM_LAYERS - 1]
    s, t = _bn_from_partial(sth, n, g, b)
    h = scale_shift_act(h, s, t, False, tm_n)

    # global_mean_pool over the valid nodes
    h = h[:n]
    counts = jax.ops.segment_sum(jnp.ones((n,), jnp.float32), batch, num_segments=num_graphs)
    h_graph = jax.ops.segment_sum(h, batch, num_segments=num_graphs) / counts[:, None]

    # graph_pred_linear (tiny head, plain JAX)
    return h_graph @ params['pred_w'] + params['pred_b']


# ----------------------------- Main ------------------------------------------

if __name__ == "__main__":
    key = jax.random.PRNGKey(0)
    k_atom, k_bond, k_edge, k_param = jax.random.split(key, 4)

    N_NODES, N_EDGES, N_GRAPHS = 32, 64, 2
    graph_sizes = [14, 18]

    x_atom = jnp.stack(
        [jax.random.randint(jax.random.fold_in(k_atom, i), (N_NODES,), 0, d)
         for i, d in enumerate(ATOM_FEATURE_DIMS)], axis=1).astype(jnp.int32)
    edge_attr = jnp.stack(
        [jax.random.randint(jax.random.fold_in(k_bond, i), (N_EDGES,), 0, d)
         for i, d in enumerate(BOND_FEATURE_DIMS)], axis=1).astype(jnp.int32)

    batch = jnp.concatenate(
        [jnp.full((s,), g, jnp.int32) for g, s in enumerate(graph_sizes)])

    # within-graph random edges (32 per graph)
    src0 = jax.random.randint(jax.random.fold_in(k_edge, 0), (32,), 0, 14)
    dst0 = jax.random.randint(jax.random.fold_in(k_edge, 1), (32,), 0, 14)
    src1 = jax.random.randint(jax.random.fold_in(k_edge, 2), (32,), 14, 32)
    dst1 = jax.random.randint(jax.random.fold_in(k_edge, 3), (32,), 14, 32)
    edge_index = jnp.stack([jnp.concatenate([src0, src1]),
                            jnp.concatenate([dst0, dst1])]).astype(jnp.int32)

    params = init_params(k_param)

    fwd = jax.jit(deeper_gcn_forward, static_argnums=(5,))
    out = fwd(params, x_atom, edge_index, edge_attr, batch, N_GRAPHS)
    out = jax.block_until_ready(out)

    assert out.shape == (N_GRAPHS, NUM_CLASSES), out.shape
    assert bool(jnp.all(jnp.isfinite(out)))
    print("KERNEL_OK")
</pallas_src>

<mosaic_0001>
module attributes {stable_mosaic.version = 11 : i64} {
  func.func private @main(%arg0: i32) attributes {dimension_semantics = [#tpu.dimension_semantics<core_parallel>], iteration_bounds = array<i64: 2>, tpu.core_type = #tpu.core_type<sc_scalar_subcore>, window_params = []} {
    return
  }
}

module attributes {stable_mosaic.version = 11 : i64} {
  func.func private @main(%arg0: i32) attributes {dimension_semantics = [#tpu.dimension_semantics<core_parallel>], iteration_bounds = array<i64: 2>, tpu.core_type = #tpu.core_type<sc_scalar_subcore>, window_params = []} {
    return
  }
}

module attributes {stable_mosaic.version = 11 : i64} {
  func.func @_message_kernel(%arg0: i32, %arg1: memref<32x128xf32, #tpu.memory_space<vmem>>, %arg2: memref<32x128xf32, #tpu.memory_space<vmem>>, %arg3: memref<32x128xf32, #tpu.memory_space<vmem>>) attributes {dimension_semantics = [#tpu.dimension_semantics<parallel>], iteration_bounds = array<i64: 2>, scalar_prefetch = 0 : i64, scratch_operands = 0 : i64, tpu.core_type = #tpu.core_type<tc>, window_params = [{transform_indices = @transform_0, window_bounds = array<i64: 32, 128>}, {transform_indices = @transform_1, window_bounds = array<i64: 32, 128>}, {transform_indices = @transform_2, window_bounds = array<i64: 32, 128>}]} {
    %c0 = arith.constant 0 : index
    %c0_0 = arith.constant 0 : index
    %0 = vector.load %arg1[%c0, %c0_0] : memref<32x128xf32, #tpu.memory_space<vmem>>, vector<32x128xf32>
    %c0_1 = arith.constant 0 : index
    %c0_2 = arith.constant 0 : index
    %1 = vector.load %arg2[%c0_1, %c0_2] : memref<32x128xf32, #tpu.memory_space<vmem>>, vector<32x128xf32>
    %2 = arith.addf %0, %1 : vector<32x128xf32>
    %cst = arith.constant 0.000000e+00 : f32
    %3 = vector.broadcast %cst : f32 to vector<32x128xf32>
    %4 = arith.maximumf %2, %3 : vector<32x128xf32>
    %cst_3 = arith.constant 1.000000e-07 : f32
    %5 = vector.broadcast %cst_3 : f32 to vector<32x128xf32>
    %6 = arith.addf %4, %5 : vector<32x128xf32>
    %c0_4 = arith.constant 0 : index
    %c0_5 = arith.constant 0 : index
    %7 = vector.load %arg3[%c0_4, %c0_5] : memref<32x128xf32, #tpu.memory_space<vmem>>, vector<32x128xf32>
    tpu.vector_store %arg3[%c0_4, %c0_5], %6 {strides = array<i32>} : memref<32x128xf32, #tpu.memory_space<vmem>>, vector<32x128xf32>,
    return
  }
  func.func @transform_0(%arg0: i32) -> (i32, i32) {
    %c0_i32 = arith.constant 0 : i32
    %c0_i32_0 = arith.constant 0 : i32
    return %arg0, %c0_i32 : i32, i32
  }
  func.func @transform_1(%arg0: i32) -> (i32, i32) {
    %c0_i32 = arith.constant 0 : i32
    %c0_i32_0 = arith.constant 0 : i32
    return %arg0, %c0_i32 : i32, i32
  }
  func.func @transform_2(%arg0: i32) -> (i32, i32) {
    %c0_i32 = arith.constant 0 : i32
    %c0_i32_0 = arith.constant 0 : i32
    return %arg0, %c0_i32 : i32, i32
  }
}

module attributes {stable_mosaic.version = 11 : i64} {
  func.func @_lin_add_kernel(%arg0: i32, %arg1: memref<16x128xf32, #tpu.memory_space<vmem>>, %arg2: memref<16x128xf32, #tpu.memory_space<vmem>>, %arg3: memref<128x256xbf16, #tpu.memory_space<vmem>>, %arg4: memref<1x256xf32, #tpu.memory_space<vmem>>, %arg5: memref<16x256xbf16, #tpu.memory_space<vmem>>, %arg6: memref<1x8x256xf32, #tpu.memory_space<vmem>>) attributes {dimension_semantics = [#tpu.dimension_semantics<parallel>], iteration_bounds = array<i64: 2>, scalar_prefetch = 0 : i64, scratch_operands = 0 : i64, tpu.core_type = #tpu.core_type<tc>, window_params = [{transform_indices = @transform_0, window_bounds = array<i64: 16, 128>}, {transform_indices = @transform_1, window_bounds = array<i64: 16, 128>}, {pipeline_mode = #tpu.pipeline_mode<synchronous>, transform_indices = @transform_2, window_bounds = array<i64: 128, 256>}, {pipeline_mode = #tpu.pipeline_mode<synchronous>, transform_indices = @transform_3, window_bounds = array<i64: 1, 256>}, {transform_indices = @transform_4, window_bounds = array<i64: 16, 256>}, {transform_indices = @transform_5, window_bounds = array<i64: 1, 8, 256>}]} {
    %c0 = arith.constant 0 : index
    %c0_0 = arith.constant 0 : index
    %0 = vector.load %arg1[%c0, %c0_0] : memref<16x128xf32, #tpu.memory_space<vmem>>, vector<16x128xf32>
    %c0_1 = arith.constant 0 : index
    %c0_2 = arith.constant 0 : index
    %1 = vector.load %arg2[%c0_1, %c0_2] : memref<16x128xf32, #tpu.memory_space<vmem>>, vector<16x128xf32>
    %2 = arith.addf %0, %1 : vector<16x128xf32>
    %3 = arith.truncf %2 : vector<16x128xf32> to vector<16x128xbf16>
    %c0_3 = arith.constant 0 : index
    %c0_4 = arith.constant 0 : index
    %4 = vector.load %arg3[%c0_3, %c0_4] : memref<128x256xbf16, #tpu.memory_space<vmem>>, vector<128x256xbf16>
    %cst = arith.constant dense<0.000000e+00> : vector<16x256xf32>
    %5 = tpu.matmul %3, %4, %cst {dimension_numbers = #tpu.dot_dimension_numbers<[1], [0], [0], [1], [0, 0, 1, 1], [], []>} : vector<16x128xbf16>, vector<128x256xbf16>, vector<16x256xf32> -> vector<16x256xf32>
    %c0_5 = arith.constant 0 : index
    %c0_6 = arith.constant 0 : index
    %6 = vector.load %arg4[%c0_5, %c0_6] : memref<1x256xf32, #tpu.memory_space<vmem>>, vector<1x256xf32>
    %7 = vector.broadcast %6 : vector<1x256xf32> to vector<16x256xf32>
    %8 = arith.addf %5, %7 : vector<16x256xf32>
    %9 = arith.truncf %8 : vector<16x256xf32> to vector<16x256xbf16>
    %c0_7 = arith.constant 0 : index
    %c0_8 = arith.constant 0 : index
    %10 = vector.load %arg5[%c0_7, %c0_8] : memref<16x256xbf16, #tpu.memory_space<vmem>>, vector<16x256xbf16>
    tpu.vector_store %arg5[%c0_7, %c0_8], %9 {strides = array<i32>} : memref<16x256xbf16, #tpu.memory_space<vmem>>, vector<16x256xbf16>,
    %c16_i32 = arith.constant 16 : i32
    %11 = arith.muli %arg0, %c16_i32 : i32
    %12 = tpu.iota {dimensions = array<i32: 0>} : vector<16x1xi32>
    %13 = vector.broadcast %11 : i32 to vector<16x1xi32>
    %14 = arith.addi %13, %12 : vector<16x1xi32>
    %c32_i32 = arith.constant 32 : i32
    %15 = vector.broadcast %c32_i32 : i32 to vector<16x1xi32>
    %16 = arith.cmpi slt, %14, %15 : vector<16x1xi32>
    %cst_9 = arith.constant 0.000000e+00 : f32
    %17 = vector.shape_cast %16 : vector<16x1xi1> to vector<16x1xi1>
    %18 = vector.broadcast %17 : vector<16x1xi1> to vector<16x256xi1>
    %19 = vector.broadcast %cst_9 : f32 to vector<16x256xf32>
    %20 = arith.select %18, %8, %19 : vector<16x256xi1>, vector<16x256xf32>
    %cst_10 = arith.constant dense<0.000000e+00> : vector<256xf32>
    %21 = vector.multi_reduction <add>, %20, %cst_10 [0] : vector<16x256xf32> to vector<256xf32>
    %22 = vector.shape_cast %21 : vector<256xf32> to vector<1x256xf32>
    %23 = arith.mulf %20, %20 : vector<16x256xf32>
    %cst_11 = arith.constant dense<0.000000e+00> : vector<256xf32>
    %24 = vector.multi_reduction <add>, %23, %cst_11 [0] : vector<16x256xf32> to vector<256xf32>
    %25 = vector.shape_cast %24 : vector<256xf32> to vector<1x256xf32>
    %26 = tpu.iota {dimensions = array<i32: 0>} : vector<8x256xi32>
    %c0_i32 = arith.constant 0 : i32
    %27 = vector.broadcast %c0_i32 : i32 to vector<8x256xi32>
    %28 = arith.cmpi eq, %26, %27 : vector<8x256xi32>
    %c1_i32 = arith.constant 1 : i32
    %29 = vector.broadcast %c1_i32 : i32 to vector<8x256xi32>
    %30 = arith.cmpi eq, %26, %29 : vector<8x256xi32>
    %cst_12 = arith.constant 0.000000e+00 : f32
    %31 = vector.shape_cast %25 : vector<1x256xf32> to vector<1x256xf32>
    %32 = vector.broadcast %31 : vector<1x256xf32> to vector<8x256xf32>
    %33 = vector.broadcast %cst_12 : f32 to vector<8x256xf32>
    %34 = arith.select %30, %32, %33 : vector<8x256xi1>, vector<8x256xf32>
    %35 = vector.shape_cast %22 : vector<1x256xf32> to vector<1x256xf32>
    %36 = vector.broadcast %35 : vector<1x256xf32> to vector<8x256xf32>
    %37 = arith.select %28, %36, %34 : vector<8x256xi1>, vector<8x256xf32>
    %38 = vector.shape_cast %37 : vector<8x256xf32> to vector<1x8x256xf32>
    %c0_13 = arith.constant 0 : index
    %c0_14 = arith.constant 0 : index
    %c0_15 = arith.constant 0 : index
    %39 = vector.load %arg6[%c0_13, %c0_14, %c0_15] : memref<1x8x256xf32, #tpu.memory_space<vmem>>, vector<1x8x256xf32>
    tpu.vector_store %arg6[%c0_13, %c0_14, %c0_15], %38 {strides = array<i32>} : memref<1x8x256xf32, #tpu.memory_space<vmem>>, vector<1x8x256xf32>,
    return
  }
  func.func @transform_0(%arg0: i32) -> (i32, i32) {
    %c0_i32 = arith.constant 0 : i32
    %c0_i32_0 = arith.constant 0 : i32
    return %arg0, %c0_i32 : i32, i32
  }
  func.func @transform_1(%arg0: i32) -> (i32, i32) {
    %c0_i32 = arith.constant 0 : i32
    %c0_i32_0 = arith.constant 0 : i32
    return %arg0, %c0_i32 : i32, i32
  }
  func.func @transform_2(%arg0: i32) -> (i32, i32) {
    %c0_i32 = arith.constant 0 : i32
    %c0_i32_0 = arith.constant 0 : i32
    %c0_i32_1 = arith.constant 0 : i32
    return %c0_i32, %c0_i32_0 : i32, i32
  }
  func.func @transform_3(%arg0: i32) -> (i32, i32) {
    %c0_i32 = arith.constant 0 : i32
    %c0_i32_0 = arith.constant 0 : i32
    %c0_i32_1 = arith.constant 0 : i32
    return %c0_i32, %c0_i32_0 : i32, i32
  }
  func.func @transform_4(%arg0: i32) -> (i32, i32) {
    %c0_i32 = arith.constant 0 : i32
    %c0_i32_0 = arith.constant 0 : i32
    return %arg0, %c0_i32 : i32, i32
  }
  func.func @transform_5(%arg0: i32) -> (i32, i32, i32) {
    %c0_i32 = arith.constant 0 : i32
    %c0_i32_0 = arith.constant 0 : i32
    %c0_i32_1 = arith.constant 0 : i32
    return %arg0, %c0_i32, %c0_i32_0 : i32, i32, i32
  }
}

module attributes {stable_mosaic.version = 11 : i64} {
  func.func @_bn_relu_lin_kernel(%arg0: i32, %arg1: memref<16x256xbf16, #tpu.memory_space<vmem>>, %arg2: memref<1x256xf32, #tpu.memory_space<vmem>>, %arg3: memref<1x256xf32, #tpu.memory_space<vmem>>, %arg4: memref<256x256xbf16, #tpu.memory_space<vmem>>, %arg5: memref<1x256xf32, #tpu.memory_space<vmem>>, %arg6: memref<16x256xbf16, #tpu.memory_space<vmem>>, %arg7: memref<1x8x256xf32, #tpu.memory_space<vmem>>) attributes {dimension_semantics = [#tpu.dimension_semantics<parallel>], iteration_bounds = array<i64: 2>, scalar_prefetch = 0 : i64, scratch_operands = 0 : i64, tpu.core_type = #tpu.core_type<tc>, window_params = [{transform_indices = @transform_0, window_bounds = array<i64: 16, 256>}, {pipeline_mode = #tpu.pipeline_mode<synchronous>, transform_indices = @transform_1, window_bounds = array<i64: 1, 256>}, {pipeline_mode = #tpu.pipeline_mode<synchronous>, transform_indices = @transform_2, window_bounds = array<i64: 1, 256>}, {pipeline_mode = #tpu.pipeline_mode<synchronous>, transform_indices = @transform_3, window_bounds = array<i64: 256, 256>}, {pipeline_mode = #tpu.pipeline_mode<synchronous>, transform_indices = @transform_4, window_bounds = array<i64: 1, 256>}, {transform_indices = @transform_5, window_bounds = array<i64: 16, 256>}, {transform_indices = @transform_6, window_bounds = array<i64: 1, 8, 256>}]} {
    %c0 = arith.constant 0 : index
    %c0_0 = arith.constant 0 : index
    %0 = vector.load %arg1[%c0, %c0_0] : memref<16x256xbf16, #tpu.memory_space<vmem>>, vector<16x256xbf16>
    %1 = arith.extf %0 : vector<16x256xbf16> to vector<16x256xf32>
    %c0_1 = arith.constant 0 : index
    %c0_2 = arith.constant 0 : index
    %2 = vector.load %arg2[%c0_1, %c0_2] : memref<1x256xf32, #tpu.memory_space<vmem>>, vector<1x256xf32>
    %3 = vector.broadcast %2 : vector<1x256xf32> to vector<16x256xf32>
    %4 = arith.mulf %1, %3 : vector<16x256xf32>
    %c0_3 = arith.constant 0 : index
    %c0_4 = arith.constant 0 : index
    %5 = vector.load %arg3[%c0_3, %c0_4] : memref<1x256xf32, #tpu.memory_space<vmem>>, vector<1x256xf32>
    %6 = vector.broadcast %5 : vector<1x256xf32> to vector<16x256xf32>
    %7 = arith.addf %4, %6 : vector<16x256xf32>
    %cst = arith.constant 0.000000e+00 : f32
    %8 = vector.broadcast %cst : f32 to vector<16x256xf32>
    %9 = arith.maximumf %7, %8 : vector<16x256xf32>
    %10 = arith.truncf %9 : vector<16x256xf32> to vector<16x256xbf16>
    %c0_5 = arith.constant 0 : index
    %c0_6 = arith.constant 0 : index
    %11 = vector.load %arg4[%c0_5, %c0_6] : memref<256x256xbf16, #tpu.memory_space<vmem>>, vector<256x256xbf16>
    %cst_7 = arith.constant dense<0.000000e+00> : vector<16x256xf32>
    %12 = tpu.matmul %10, %11, %cst_7 {dimension_numbers = #tpu.dot_dimension_numbers<[1], [0], [0], [1], [0, 0, 1, 1], [], []>} : vector<16x256xbf16>, vector<256x256xbf16>, vector<16x256xf32> -> vector<16x256xf32>
    %c0_8 = arith.constant 0 : index
    %c0_9 = arith.constant 0 : index
    %13 = vector.load %arg5[%c0_8, %c0_9] : memref<1x256xf32, #tpu.memory_space<vmem>>, vector<1x256xf32>
    %14 = vector.broadcast %13 : vector<1x256xf32> to vector<16x256xf32>
    %15 = arith.addf %12, %14 : vector<16x256xf32>
    %16 = arith.truncf %15 : vector<16x256xf32> to vector<16x256xbf16>
    %c0_10 = arith.constant 0 : index
    %c0_11 = arith.constant 0 : index
    %17 = vector.load %arg6[%c0_10, %c0_11] : memref<16x256xbf16, #tpu.memory_space<vmem>>, vector<16x256xbf16>
    tpu.vector_store %arg6[%c0_10, %c0_11], %16 {strides = array<i32>} : memref<16x256xbf16, #tpu.memory_space<vmem>>, vector<16x256xbf16>,
    %c16_i32 = arith.constant 16 : i32
    %18 = arith.muli %arg0, %c16_i32 : i32
    %19 = tpu.iota {dimensions = array<i32: 0>} : vector<16x1xi32>
    %20 = vector.broadcast %18 : i32 to vector<16x1xi32>
    %21 = arith.addi %20, %19 : vector<16x1xi32>
    %c32_i32 = arith.constant 32 : i32
    %22 = vector.broadcast %c32_i32 : i32 to vector<16x1xi32>
    %23 = arith.cmpi slt, %21, %22 : vector<16x1xi32>
    %cst_12 = arith.constant 0.000000e+00 : f32
    %24 = vector.shape_cast %23 : vector<16x1xi1> to vector<16x1xi1>
    %25 = vector.broadcast %24 : vector<16x1xi1> to vector<16x256xi1>
    %26 = vector.broadcast %cst_12 : f32 to vector<16x256xf32>
    %27 = arith.select %25, %15, %26 : vector<16x256xi1>, vector<16x256xf32>
    %cst_13 = arith.constant dense<0.000000e+00> : vector<256xf32>
    %28 = vector.multi_reduction <add>, %27, %cst_13 [0] : vector<16x256xf32> to vector<256xf32>
    %29 = vector.shape_cast %28 : vector<256xf32> to vector<1x256xf32>
    %30 = arith.mulf %27, %27 : vector<16x256xf32>
    %cst_14 = arith.constant dense<0.000000e+00> : vector<256xf32>
    %31 = vector.multi_reduction <add>, %30, %cst_14 [0] : vector<16x256xf32> to vector<256xf32>
    %32 = vector.shape_cast %31 : vector<256xf32> to vector<1x256xf32>
    %33 = tpu.iota {dimensions = array<i32: 0>} : vector<8x256xi32>
    %c0_i32 = arith.constant 0 : i32
    %34 = vector.broadcast %c0_i32 : i32 to vector<8x256xi32>
    %35 = arith.cmpi eq, %33, %34 : vector<8x256xi32>
    %c1_i32 = arith.constant 1 : i32
    %36 = vector.broadcast %c1_i32 : i32 to vector<8x256xi32>
    %37 = arith.cmpi eq, %33, %36 : vector<8x256xi32>
    %cst_15 = arith.constant 0.000000e+00 : f32
    %38 = vector.shape_cast %32 : vector<1x256xf32> to vector<1x256xf32>
    %39 = vector.broadcast %38 : vector<1x256xf32> to vector<8x256xf32>
    %40 = vector.broadcast %cst_15 : f32 to vector<8x256xf32>
    %41 = arith.select %37, %39, %40 : vector<8x256xi1>, vector<8x256xf32>
    %42 = vector.shape_cast %29 : vector<1x256xf32> to vector<1x256xf32>
    %43 = vector.broadcast %42 : vector<1x256xf32> to vector<8x256xf32>
    %44 = arith.select %35, %43, %41 : vector<8x256xi1>, vector<8x256xf32>
    %45 = vector.shape_cast %44 : vector<8x256xf32> to vector<1x8x256xf32>
    %c0_16 = arith.constant 0 : index
    %c0_17 = arith.constant 0 : index
    %c0_18 = arith.constant 0 : index
    %46 = vector.load %arg7[%c0_16, %c0_17, %c0_18] : memref<1x8x256xf32, #tpu.memory_space<vmem>>, vector<1x8x256xf32>
    tpu.vector_store %arg7[%c0_16, %c0_17, %c0_18], %45 {strides = array<i32>} : memref<1x8x256xf32, #tpu.memory_space<vmem>>, vector<1x8x256xf32>,
    return
  }
  func.func @transform_0(%arg0: i32) -> (i32, i32) {
    %c0_i32 = arith.constant 0 : i32
    %c0_i32_0 = arith.constant 0 : i32
    return %arg0, %c0_i32 : i32, i32
  }
  func.func @transform_1(%arg0: i32) -> (i32, i32) {
    %c0_i32 = arith.constant 0 : i32
    %c0_i32_0 = arith.constant 0 : i32
    %c0_i32_1 = arith.constant 0 : i32
    return %c0_i32, %c0_i32_0 : i32, i32
  }
  func.func @transform_2(%arg0: i32) -> (i32, i32) {
    %c0_i32 = arith.constant 0 : i32
    %c0_i32_0 = arith.constant 0 : i32
    %c0_i32_1 = arith.constant 0 : i32
    return %c0_i32, %c0_i32_0 : i32, i32
  }
  func.func @transform_3(%arg0: i32) -> (i32, i32) {
    %c0_i32 = arith.constant 0 : i32
    %c0_i32_0 = arith.constant 0 : i32
    %c0_i32_1 = arith.constant 0 : i32
    return %c0_i32, %c0_i32_0 : i32, i32
  }
  func.func @transform_4(%arg0: i32) -> (i32, i32) {
    %c0_i32 = arith.constant 0 : i32
    %c0_i32_0 = arith.constant 0 : i32
    %c0_i32_1 = arith.constant 0 : i32
    return %c0_i32, %c0_i32_0 : i32, i32
  }
  func.func @transform_5(%arg0: i32) -> (i32, i32) {
    %c0_i32 = arith.constant 0 : i32
    %c0_i32_0 = arith.constant 0 : i32
    return %arg0, %c0_i32 : i32, i32
  }
  func.func @transform_6(%arg0: i32) -> (i32, i32, i32) {
    %c0_i32 = arith.constant 0 : i32
    %c0_i32_0 = arith.constant 0 : i32
    %c0_i32_1 = arith.constant 0 : i32
    return %arg0, %c0_i32, %c0_i32_0 : i32, i32, i32
  }
}

module attributes {stable_mosaic.version = 11 : i64} {
  func.func @_bn_relu_lin_kernel(%arg0: i32, %arg1: memref<16x256xbf16, #tpu.memory_space<vmem>>, %arg2: memref<1x256xf32, #tpu.memory_space<vmem>>, %arg3: memref<1x256xf32, #tpu.memory_space<vmem>>, %arg4: memref<256x128xbf16, #tpu.memory_space<vmem>>, %arg5: memref<1x128xf32, #tpu.memory_space<vmem>>, %arg6: memref<16x128xf32, #tpu.memory_space<vmem>>, %arg7: memref<1x8x128xf32, #tpu.memory_space<vmem>>) attributes {dimension_semantics = [#tpu.dimension_semantics<parallel>], iteration_bounds = array<i64: 2>, scalar_prefetch = 0 : i64, scratch_operands = 0 : i64, tpu.core_type = #tpu.core_type<tc>, window_params = [{transform_indices = @transform_0, window_bounds = array<i64: 16, 256>}, {pipeline_mode = #tpu.pipeline_mode<synchronous>, transform_indices = @transform_1, window_bounds = array<i64: 1, 256>}, {pipeline_mode = #tpu.pipeline_mode<synchronous>, transform_indices = @transform_2, window_bounds = array<i64: 1, 256>}, {pipeline_mode = #tpu.pipeline_mode<synchronous>, transform_indices = @transform_3, window_bounds = array<i64: 256, 128>}, {pipeline_mode = #tpu.pipeline_mode<synchronous>, transform_indices = @transform_4, window_bounds = array<i64: 1, 128>}, {transform_indices = @transform_5, window_bounds = array<i64: 16, 128>}, {transform_indices = @transform_6, window_bounds = array<i64: 1, 8, 128>}]} {
    %c0 = arith.constant 0 : index
    %c0_0 = arith.constant 0 : index
    %0 = vector.load %arg1[%c0, %c0_0] : memref<16x256xbf16, #tpu.memory_space<vmem>>, vector<16x256xbf16>
    %1 = arith.extf %0 : vector<16x256xbf16> to vector<16x256xf32>
    %c0_1 = arith.constant 0 : index
    %c0_2 = arith.constant 0 : index
    %2 = vector.load %arg2[%c0_1, %c0_2] : memref<1x256xf32, #tpu.memory_space<vmem>>, vector<1x256xf32>
    %3 = vector.broadcast %2 : vector<1x256xf32> to vector<16x256xf32>
    %4 = arith.mulf %1, %3 : vector<16x256xf32>
    %c0_3 = arith.constant 0 : index
    %c0_4 = arith.constant 0 : index
    %5 = vector.load %arg3[%c0_3, %c0_4] : memref<1x256xf32, #tpu.memory_space<vmem>>, vector<1x256xf32>
    %6 = vector.broadcast %5 : vector<1x256xf32> to vector<16x256xf32>
    %7 = arith.addf %4, %6 : vector<16x256xf32>
    %cst = arith.constant 0.000000e+00 : f32
    %8 = vector.broadcast %cst : f32 to vector<16x256xf32>
    %9 = arith.maximumf %7, %8 : vector<16x256xf32>
    %10 = arith.truncf %9 : vector<16x256xf32> to vector<16x256xbf16>
    %c0_5 = arith.constant 0 : index
    %c0_6 = arith.constant 0 : index
    %11 = vector.load %arg4[%c0_5, %c0_6] : memref<256x128xbf16, #tpu.memory_space<vmem>>, vector<256x128xbf16>
    %cst_7 = arith.constant dense<0.000000e+00> : vector<16x128xf32>
    %12 = tpu.matmul %10, %11, %cst_7 {dimension_numbers = #tpu.dot_dimension_numbers<[1], [0], [0], [1], [0, 0, 1, 1], [], []>} : vector<16x256xbf16>, vector<256x128xbf16>, vector<16x128xf32> -> vector<16x128xf32>
    %c0_8 = arith.constant 0 : index
    %c0_9 = arith.constant 0 : index
    %13 = vector.load %arg5[%c0_8, %c0_9] : memref<1x128xf32, #tpu.memory_space<vmem>>, vector<1x128xf32>
    %14 = vector.broadcast %13 : vector<1x128xf32> to vector<16x128xf32>
    %15 = arith.addf %12, %14 : vector<16x128xf32>
    %c0_10 = arith.constant 0 : index
    %c0_11 = arith.constant 0 : index
    %16 = vector.load %arg6[%c0_10, %c0_11] : memref<16x128xf32, #tpu.memory_space<vmem>>, vector<16x128xf32>
    tpu.vector_store %arg6[%c0_10, %c0_11], %15 {strides = array<i32>} : memref<16x128xf32, #tpu.memory_space<vmem>>, vector<16x128xf32>,
    %c16_i32 = arith.constant 16 : i32
    %17 = arith.muli %arg0, %c16_i32 : i32
    %18 = tpu.iota {dimensions = array<i32: 0>} : vector<16x1xi32>
    %19 = vector.broadcast %17 : i32 to vector<16x1xi32>
    %20 = arith.addi %19, %18 : vector<16x1xi32>
    %c32_i32 = arith.constant 32 : i32
    %21 = vector.broadcast %c32_i32 : i32 to vector<16x1xi32>
    %22 = arith.cmpi slt, %20, %21 : vector<16x1xi32>
    %cst_12 = arith.constant 0.000000e+00 : f32
    %23 = vector.shape_cast %22 : vector<16x1xi1> to vector<16x1xi1>
    %24 = vector.broadcast %23 : vector<16x1xi1> to vector<16x128xi1>
    %25 = vector.broadcast %cst_12 : f32 to vector<16x128xf32>
    %26 = arith.select %24, %15, %25 : vector<16x128xi1>, vector<16x128xf32>
    %cst_13 = arith.constant dense<0.000000e+00> : vector<128xf32>
    %27 = vector.multi_reduction <add>, %26, %cst_13 [0] : vector<16x128xf32> to vector<128xf32>
    %28 = vector.shape_cast %27 : vector<128xf32> to vector<1x128xf32>
    %29 = arith.mulf %26, %26 : vector<16x128xf32>
    %cst_14 = arith.constant dense<0.000000e+00> : vector<128xf32>
    %30 = vector.multi_reduction <add>, %29, %cst_14 [0] : vector<16x128xf32> to vector<128xf32>
    %31 = vector.shape_cast %30 : vector<128xf32> to vector<1x128xf32>
    %32 = tpu.iota {dimensions = array<i32: 0>} : vector<8x128xi32>
    %c0_i32 = arith.constant 0 : i32
    %33 = vector.broadcast %c0_i32 : i32 to vector<8x128xi32>
    %34 = arith.cmpi eq, %32, %33 : vector<8x128xi32>
    %c1_i32 = arith.constant 1 : i32
    %35 = vector.broadcast %c1_i32 : i32 to vector<8x128xi32>
    %36 = arith.cmpi eq, %32, %35 : vector<8x128xi32>
    %cst_15 = arith.constant 0.000000e+00 : f32
    %37 = vector.shape_cast %31 : vector<1x128xf32> to vector<1x128xf32>
    %38 = vector.broadcast %37 : vector<1x128xf32> to vector<8x128xf32>
    %39 = vector.broadcast %cst_15 : f32 to vector<8x128xf32>
    %40 = arith.select %36, %38, %39 : vector<8x128xi1>, vector<8x128xf32>
    %41 = vector.shape_cast %28 : vector<1x128xf32> to vector<1x128xf32>
    %42 = vector.broadcast %41 : vector<1x128xf32> to vector<8x128xf32>
    %43 = arith.select %34, %42, %40 : vector<8x128xi1>, vector<8x128xf32>
    %44 = vector.shape_cast %43 : vector<8x128xf32> to vector<1x8x128xf32>
    %c0_16 = arith.constant 0 : index
    %c0_17 = arith.constant 0 : index
    %c0_18 = arith.constant 0 : index
    %45 = vector.load %arg7[%c0_16, %c0_17, %c0_18] : memref<1x8x128xf32, #tpu.memory_space<vmem>>, vector<1x8x128xf32>
    tpu.vector_store %arg7[%c0_16, %c0_17, %c0_18], %44 {strides = array<i32>} : memref<1x8x128xf32, #tpu.memory_space<vmem>>, vector<1x8x128xf32>,
    return
  }
  func.func @transform_0(%arg0: i32) -> (i32, i32) {
    %c0_i32 = arith.constant 0 : i32
    %c0_i32_0 = arith.constant 0 : i32
    return %arg0, %c0_i32 : i32, i32
  }
  func.func @transform_1(%arg0: i32) -> (i32, i32) {
    %c0_i32 = arith.constant 0 : i32
    %c0_i32_0 = arith.constant 0 : i32
    %c0_i32_1 = arith.constant 0 : i32
    return %c0_i32, %c0_i32_0 : i32, i32
  }
  func.func @transform_2(%arg0: i32) -> (i32, i32) {
    %c0_i32 = arith.constant 0 : i32
    %c0_i32_0 = arith.constant 0 : i32
    %c0_i32_1 = arith.constant 0 : i32
    return %c0_i32, %c0_i32_0 : i32, i32
  }
  func.func @transform_3(%arg0: i32) -> (i32, i32) {
    %c0_i32 = arith.constant 0 : i32
    %c0_i32_0 = arith.constant 0 : i32
    %c0_i32_1 = arith.constant 0 : i32
    return %c0_i32, %c0_i32_0 : i32, i32
  }
  func.func @transform_4(%arg0: i32) -> (i32, i32) {
    %c0_i32 = arith.constant 0 : i32
    %c0_i32_0 = arith.constant 0 : i32
    %c0_i32_1 = arith.constant 0 : i32
    return %c0_i32, %c0_i32_0 : i32, i32
  }
  func.func @transform_5(%arg0: i32) -> (i32, i32) {
    %c0_i32 = arith.constant 0 : i32
    %c0_i32_0 = arith.constant 0 : i32
    return %arg0, %c0_i32 : i32, i32
  }
  func.func @transform_6(%arg0: i32) -> (i32, i32, i32) {
    %c0_i32 = arith.constant 0 : i32
    %c0_i32_0 = arith.constant 0 : i32
    %c0_i32_1 = arith.constant 0 : i32
    return %arg0, %c0_i32, %c0_i32_0 : i32, i32, i32
  }
}

module attributes {stable_mosaic.version = 11 : i64} {
  func.func @_scale_shift_act_kernel(%arg0: i32, %arg1: memref<16x128xf32, #tpu.memory_space<vmem>>, %arg2: memref<1x128xf32, #tpu.memory_space<vmem>>, %arg3: memref<1x128xf32, #tpu.memory_space<vmem>>, %arg4: memref<16x128xf32, #tpu.memory_space<vmem>>) attributes {dimension_semantics = [#tpu.dimension_semantics<parallel>], iteration_bounds = array<i64: 2>, scalar_prefetch = 0 : i64, scratch_operands = 0 : i64, tpu.core_type = #tpu.core_type<tc>, window_params = [{transform_indices = @transform_0, window_bounds = array<i64: 16, 128>}, {pipeline_mode = #tpu.pipeline_mode<synchronous>, transform_indices = @transform_1, window_bounds = array<i64: 1, 128>}, {pipeline_mode = #tpu.pipeline_mode<synchronous>, transform_indices = @transform_2, window_bounds = array<i64: 1, 128>}, {transform_indices = @transform_3, window_bounds = array<i64: 16, 128>}]} {
    %c0 = arith.constant 0 : index
    %c0_0 = arith.constant 0 : index
    %0 = vector.load %arg1[%c0, %c0_0] : memref<16x128xf32, #tpu.memory_space<vmem>>, vector<16x128xf32>
    %c0_1 = arith.constant 0 : index
    %c0_2 = arith.constant 0 : index
    %1 = vector.load %arg2[%c0_1, %c0_2] : memref<1x128xf32, #tpu.memory_space<vmem>>, vector<1x128xf32>
    %2 = vector.broadcast %1 : vector<1x128xf32> to vector<16x128xf32>
    %3 = arith.mulf %0, %2 : vector<16x128xf32>
    %c0_3 = arith.constant 0 : index
    %c0_4 = arith.constant 0 : index
    %4 = vector.load %arg3[%c0_3, %c0_4] : memref<1x128xf32, #tpu.memory_space<vmem>>, vector<1x128xf32>
    %5 = vector.broadcast %4 : vector<1x128xf32> to vector<16x128xf32>
    %6 = arith.addf %3, %5 : vector<16x128xf32>
    %cst = arith.constant 0.000000e+00 : f32
    %7 = vector.broadcast %cst : f32 to vector<16x128xf32>
    %8 = arith.maximumf %6, %7 : vector<16x128xf32>
    %c0_5 = arith.constant 0 : index
    %c0_6 = arith.constant 0 : index
    %9 = vector.load %arg4[%c0_5, %c0_6] : memref<16x128xf32, #tpu.memory_space<vmem>>, vector<16x128xf32>
    tpu.vector_store %arg4[%c0_5, %c0_6], %8 {strides = array<i32>} : memref<16x128xf32, #tpu.memory_space<vmem>>, vector<16x128xf32>,
    return
  }
  func.func @transform_0(%arg0: i32) -> (i32, i32) {
    %c0_i32 = arith.constant 0 : i32
    %c0_i32_0 = arith.constant 0 : i32
    return %arg0, %c0_i32 : i32, i32
  }
  func.func @transform_1(%arg0: i32) -> (i32, i32) {
    %c0_i32 = arith.constant 0 : i32
    %c0_i32_0 = arith.constant 0 : i32
    %c0_i32_1 = arith.constant 0 : i32
    return %c0_i32, %c0_i32_0 : i32, i32
  }
  func.func @transform_2(%arg0: i32) -> (i32, i32) {
    %c0_i32 = arith.constant 0 : i32
    %c0_i32_0 = arith.constant 0 : i32
    %c0_i32_1 = arith.constant 0 : i32
    return %c0_i32, %c0_i32_0 : i32, i32
  }
  func.func @transform_3(%arg0: i32) -> (i32, i32) {
    %c0_i32 = arith.constant 0 : i32
    %c0_i32_0 = arith.constant 0 : i32
    return %arg0, %c0_i32 : i32, i32
  }
}

module attributes {stable_mosaic.version = 11 : i64} {
  func.func @_bn_relu_lin_res_kernel(%arg0: i32, %arg1: memref<16x256xbf16, #tpu.memory_space<vmem>>, %arg2: memref<1x256xf32, #tpu.memory_space<vmem>>, %arg3: memref<1x256xf32, #tpu.memory_space<vmem>>, %arg4: memref<256x128xbf16, #tpu.memory_space<vmem>>, %arg5: memref<1x128xf32, #tpu.memory_space<vmem>>, %arg6: memref<16x128xf32, #tpu.memory_space<vmem>>, %arg7: memref<16x128xf32, #tpu.memory_space<vmem>>, %arg8: memref<1x8x128xf32, #tpu.memory_space<vmem>>) attributes {dimension_semantics = [#tpu.dimension_semantics<parallel>], iteration_bounds = array<i64: 2>, scalar_prefetch = 0 : i64, scratch_operands = 0 : i64, tpu.core_type = #tpu.core_type<tc>, window_params = [{transform_indices = @transform_0, window_bounds = array<i64: 16, 256>}, {pipeline_mode = #tpu.pipeline_mode<synchronous>, transform_indices = @transform_1, window_bounds = array<i64: 1, 256>}, {pipeline_mode = #tpu.pipeline_mode<synchronous>, transform_indices = @transform_2, window_bounds = array<i64: 1, 256>}, {pipeline_mode = #tpu.pipeline_mode<synchronous>, transform_indices = @transform_3, window_bounds = array<i64: 256, 128>}, {pipeline_mode = #tpu.pipeline_mode<synchronous>, transform_indices = @transform_4, window_bounds = array<i64: 1, 128>}, {transform_indices = @transform_5, window_bounds = array<i64: 16, 128>}, {transform_indices = @transform_6, window_bounds = array<i64: 16, 128>}, {transform_indices = @transform_7, window_bounds = array<i64: 1, 8, 128>}]} {
    %c0 = arith.constant 0 : index
    %c0_0 = arith.constant 0 : index
    %0 = vector.load %arg1[%c0, %c0_0] : memref<16x256xbf16, #tpu.memory_space<vmem>>, vector<16x256xbf16>
    %1 = arith.extf %0 : vector<16x256xbf16> to vector<16x256xf32>
    %c0_1 = arith.constant 0 : index
    %c0_2 = arith.constant 0 : index
    %2 = vector.load %arg2[%c0_1, %c0_2] : memref<1x256xf32, #tpu.memory_space<vmem>>, vector<1x256xf32>
    %3 = vector.broadcast %2 : vector<1x256xf32> to vector<16x256xf32>
    %4 = arith.mulf %1, %3 : vector<16x256xf32>
    %c0_3 = arith.constant 0 : index
    %c0_4 = arith.constant 0 : index
    %5 = vector.load %arg3[%c0_3, %c0_4] : memref<1x256xf32, #tpu.memory_space<vmem>>, vector<1x256xf32>
    %6 = vector.broadcast %5 : vector<1x256xf32> to vector<16x256xf32>
    %7 = arith.addf %4, %6 : vector<16x256xf32>
    %cst = arith.constant 0.000000e+00 : f32
    %8 = vector.broadcast %cst : f32 to vector<16x256xf32>
    %9 = arith.maximumf %7, %8 : vector<16x256xf32>
    %10 = arith.truncf %9 : vector<16x256xf32> to vector<16x256xbf16>
    %c0_5 = arith.constant 0 : index
    %c0_6 = arith.constant 0 : index
    %11 = vector.load %arg4[%c0_5, %c0_6] : memref<256x128xbf16, #tpu.memory_space<vmem>>, vector<256x128xbf16>
    %cst_7 = arith.constant dense<0.000000e+00> : vector<16x128xf32>
    %12 = tpu.matmul %10, %11, %cst_7 {dimension_numbers = #tpu.dot_dimension_numbers<[1], [0], [0], [1], [0, 0, 1, 1], [], []>} : vector<16x256xbf16>, vector<256x128xbf16>, vector<16x128xf32> -> vector<16x128xf32>
    %c0_8 = arith.constant 0 : index
    %c0_9 = arith.constant 0 : index
    %13 = vector.load %arg5[%c0_8, %c0_9] : memref<1x128xf32, #tpu.memory_space<vmem>>, vector<1x128xf32>
    %14 = vector.broadcast %13 : vector<1x128xf32> to vector<16x128xf32>
    %15 = arith.addf %12, %14 : vector<16x128xf32>
    %c0_10 = arith.constant 0 : index
    %c0_11 = arith.constant 0 : index
    %16 = vector.load %arg6[%c0_10, %c0_11] : memref<16x128xf32, #tpu.memory_space<vmem>>, vector<16x128xf32>
    %17 = arith.addf %15, %16 : vector<16x128xf32>
    %c0_12 = arith.constant 0 : index
    %c0_13 = arith.constant 0 : index
    %18 = vector.load %arg7[%c0_12, %c0_13] : memref<16x128xf32, #tpu.memory_space<vmem>>, vector<16x128xf32>
    tpu.vector_store %arg7[%c0_12, %c0_13], %17 {strides = array<i32>} : memref<16x128xf32, #tpu.memory_space<vmem>>, vector<16x128xf32>,
    %c16_i32 = arith.constant 16 : i32
    %19 = arith.muli %arg0, %c16_i32 : i32
    %20 = tpu.iota {dimensions = array<i32: 0>} : vector<16x1xi32>
    %21 = vector.broadcast %19 : i32 to vector<16x1xi32>
    %22 = arith.addi %21, %20 : vector<16x1xi32>
    %c32_i32 = arith.constant 32 : i32
    %23 = vector.broadcast %c32_i32 : i32 to vector<16x1xi32>
    %24 = arith.cmpi slt, %22, %23 : vector<16x1xi32>
    %cst_14 = arith.constant 0.000000e+00 : f32
    %25 = vector.shape_cast %24 : vector<16x1xi1> to vector<16x1xi1>
    %26 = vector.broadcast %25 : vector<16x1xi1> to vector<16x128xi1>
    %27 = vector.broadcast %cst_14 : f32 to vector<16x128xf32>
    %28 = arith.select %26, %17, %27 : vector<16x128xi1>, vector<16x128xf32>
    %cst_15 = arith.constant dense<0.000000e+00> : vector<128xf32>
    %29 = vector.multi_reduction <add>, %28, %cst_15 [0] : vector<16x128xf32> to vector<128xf32>
    %30 = vector.shape_cast %29 : vector<128xf32> to vector<1x128xf32>
    %31 = arith.mulf %28, %28 : vector<16x128xf32>
    %cst_16 = arith.constant dense<0.000000e+00> : vector<128xf32>
    %32 = vector.multi_reduction <add>, %31, %cst_16 [0] : vector<16x128xf32> to vector<128xf32>
    %33 = vector.shape_cast %32 : vector<128xf32> to vector<1x128xf32>
    %34 = tpu.iota {dimensions = array<i32: 0>} : vector<8x128xi32>
    %c0_i32 = arith.constant 0 : i32
    %35 = vector.broadcast %c0_i32 : i32 to vector<8x128xi32>
    %36 = arith.cmpi eq, %34, %35 : vector<8x128xi32>
    %c1_i32 = arith.constant 1 : i32
    %37 = vector.broadcast %c1_i32 : i32 to vector<8x128xi32>
    %38 = arith.cmpi eq, %34, %37 : vector<8x128xi32>
    %cst_17 = arith.constant 0.000000e+00 : f32
    %39 = vector.shape_cast %33 : vector<1x128xf32> to vector<1x128xf32>
    %40 = vector.broadcast %39 : vector<1x128xf32> to vector<8x128xf32>
    %41 = vector.broadcast %cst_17 : f32 to vector<8x128xf32>
    %42 = arith.select %38, %40, %41 : vector<8x128xi1>, vector<8x128xf32>
    %43 = vector.shape_cast %30 : vector<1x128xf32> to vector<1x128xf32>
    %44 = vector.broadcast %43 : vector<1x128xf32> to vector<8x128xf32>
    %45 = arith.select %36, %44, %42 : vector<8x128xi1>, vector<8x128xf32>
    %46 = vector.shape_cast %45 : vector<8x128xf32> to vector<1x8x128xf32>
    %c0_18 = arith.constant 0 : index
    %c0_19 = arith.constant 0 : index
    %c0_20 = arith.constant 0 : index
    %47 = vector.load %arg8[%c0_18, %c0_19, %c0_20] : memref<1x8x128xf32, #tpu.memory_space<vmem>>, vector<1x8x128xf32>
    tpu.vector_store %arg8[%c0_18, %c0_19, %c0_20], %46 {strides = array<i32>} : memref<1x8x128xf32, #tpu.memory_space<vmem>>, vector<1x8x128xf32>,
    return
  }
  func.func @transform_0(%arg0: i32) -> (i32, i32) {
    %c0_i32 = arith.constant 0 : i32
    %c0_i32_0 = arith.constant 0 : i32
    return %arg0, %c0_i32 : i32, i32
  }
  func.func @transform_1(%arg0: i32) -> (i32, i32) {
    %c0_i32 = arith.constant 0 : i32
    %c0_i32_0 = arith.constant 0 : i32
    %c0_i32_1 = arith.constant 0 : i32
    return %c0_i32, %c0_i32_0 : i32, i32
  }
  func.func @transform_2(%arg0: i32) -> (i32, i32) {
    %c0_i32 = arith.constant 0 : i32
    %c0_i32_0 = arith.constant 0 : i32
    %c0_i32_1 = arith.constant 0 : i32
    return %c0_i32, %c0_i32_0 : i32, i32
  }
  func.func @transform_3(%arg0: i32) -> (i32, i32) {
    %c0_i32 = arith.constant 0 : i32
    %c0_i32_0 = arith.constant 0 : i32
    %c0_i32_1 = arith.constant 0 : i32
    return %c0_i32, %c0_i32_0 : i32, i32
  }
  func.func @transform_4(%arg0: i32) -> (i32, i32) {
    %c0_i32 = arith.constant 0 : i32
    %c0_i32_0 = arith.constant 0 : i32
    %c0_i32_1 = arith.constant 0 : i32
    return %c0_i32, %c0_i32_0 : i32, i32
  }
  func.func @transform_5(%arg0: i32) -> (i32, i32) {
    %c0_i32 = arith.constant 0 : i32
    %c0_i32_0 = arith.constant 0 : i32
    return %arg0, %c0_i32 : i32, i32
  }
  func.func @transform_6(%arg0: i32) -> (i32, i32) {
    %c0_i32 = arith.constant 0 : i32
    %c0_i32_0 = arith.constant 0 : i32
    return %arg0, %c0_i32 : i32, i32
  }
  func.func @transform_7(%arg0: i32) -> (i32, i32, i32) {
    %c0_i32 = arith.constant 0 : i32
    %c0_i32_0 = arith.constant 0 : i32
    %c0_i32_1 = arith.constant 0 : i32
    return %arg0, %c0_i32, %c0_i32_0 : i32, i32, i32
  }
}

module attributes {stable_mosaic.version = 11 : i64} {
  func.func @_scale_shift_act_kernel(%arg0: i32, %arg1: memref<16x128xf32, #tpu.memory_space<vmem>>, %arg2: memref<1x128xf32, #tpu.memory_space<vmem>>, %arg3: memref<1x128xf32, #tpu.memory_space<vmem>>, %arg4: memref<16x128xf32, #tpu.memory_space<vmem>>) attributes {dimension_semantics = [#tpu.dimension_semantics<parallel>], iteration_bounds = array<i64: 2>, scalar_prefetch = 0 : i64, scratch_operands = 0 : i64, tpu.core_type = #tpu.core_type<tc>, window_params = [{transform_indices = @transform_0, window_bounds = array<i64: 16, 128>}, {pipeline_mode = #tpu.pipeline_mode<synchronous>, transform_indices = @transform_1, window_bounds = array<i64: 1, 128>}, {pipeline_mode = #tpu.pipeline_mode<synchronous>, transform_indices = @transform_2, window_bounds = array<i64: 1, 128>}, {transform_indices = @transform_3, window_bounds = array<i64: 16, 128>}]} {
    %c0 = arith.constant 0 : index
    %c0_0 = arith.constant 0 : index
    %0 = vector.load %arg1[%c0, %c0_0] : memref<16x128xf32, #tpu.memory_space<vmem>>, vector<16x128xf32>
    %c0_1 = arith.constant 0 : index
    %c0_2 = arith.constant 0 : index
    %1 = vector.load %arg2[%c0_1, %c0_2] : memref<1x128xf32, #tpu.memory_space<vmem>>, vector<1x128xf32>
    %2 = vector.broadcast %1 : vector<1x128xf32> to vector<16x128xf32>
    %3 = arith.mulf %0, %2 : vector<16x128xf32>
    %c0_3 = arith.constant 0 : index
    %c0_4 = arith.constant 0 : index
    %4 = vector.load %arg3[%c0_3, %c0_4] : memref<1x128xf32, #tpu.memory_space<vmem>>, vector<1x128xf32>
    %5 = vector.broadcast %4 : vector<1x128xf32> to vector<16x128xf32>
    %6 = arith.addf %3, %5 : vector<16x128xf32>
    %c0_5 = arith.constant 0 : index
    %c0_6 = arith.constant 0 : index
    %7 = vector.load %arg4[%c0_5, %c0_6] : memref<16x128xf32, #tpu.memory_space<vmem>>, vector<16x128xf32>
    tpu.vector_store %arg4[%c0_5, %c0_6], %6 {strides = array<i32>} : memref<16x128xf32, #tpu.memory_space<vmem>>, vector<16x128xf32>,
    return
  }
  func.func @transform_0(%arg0: i32) -> (i32, i32) {
    %c0_i32 = arith.constant 0 : i32
    %c0_i32_0 = arith.constant 0 : i32
    return %arg0, %c0_i32 : i32, i32
  }
  func.func @transform_1(%arg0: i32) -> (i32, i32) {
    %c0_i32 = arith.constant 0 : i32
    %c0_i32_0 = arith.constant 0 : i32
    %c0_i32_1 = arith.constant 0 : i32
    return %c0_i32, %c0_i32_0 : i32, i32
  }
  func.func @transform_2(%arg0: i32) -> (i32, i32) {
    %c0_i32 = arith.constant 0 : i32
    %c0_i32_0 = arith.constant 0 : i32
    %c0_i32_1 = arith.constant 0 : i32
    return %c0_i32, %c0_i32_0 : i32, i32
  }
  func.func @transform_3(%arg0: i32) -> (i32, i32) {
    %c0_i32 = arith.constant 0 : i32
    %c0_i32_0 = arith.constant 0 : i32
    return %arg0, %c0_i32 : i32, i32
  }
}

</mosaic_0001>

<llo_original>
// kernel: deeper_gcn_forward.20
$region0: #{deeper_gcn_forward.20}
  #allocation0 [shape = 'u32[]', space=smem, size = 0x4, offset = 0x4, fixed_abs, tag = 'smem constant byte address 0x4 - core index']
  #allocation1 [shape = 'u32[144,128]{1,0:T(1,128)}', space=vmem, size = 0x12000, scoped, tag = 'internal scratch']
  %s0 = inlined_call_operand.vmem [shape: f32[64,128], index: 0, kind: input, shape index: {}]
  %s1 = inlined_call_operand.vmem [shape: f32[64,128], index: 1, kind: input, shape index: {}]
  %s2 = inlined_call_operand.vmem [shape: f32[64,128], index: 2, kind: output, shape index: {}]
  %s3 = sld [smem:[#allocation0]]
  $region41: #{deeper_gcn_forward.20} parent=0
    _
  %s5 = ssub.s32 1, %s3
  %s6 = scalar_select 0, %s5, %s3
  loop: start=0, step=1, limit=4
  $region2: #{deeper_gcn_forward.20} parent=0 // loop_pre_header
    _
  $region3: #{deeper_gcn_forward.20} parent=0 // loop_header
    %s8 = sphi 0, %s12
    %p9 = scmp.ge.s32.totalorder %s8, 4
    %s18 = sphi 0, %s20
    %s21 = sphi 0, %s18
    %s22 = sphi 0, %s21
    %s38 = sphi 0, %s22
    %s44 = sphi 0, %s46
    %s47 = sphi 0, %s44
    %s48 = sphi 0, %s47
    %s64 = sphi 0, %s48
    %s70 = sphi 0, %s72
    %s73 = sphi 0, %s70
    %s74 = sphi 0, %s73
    %s90 = sphi 0, %s74
  $region4: #{deeper_gcn_forward.20} parent=0 // loop_header_branch
    %11 = sbr.rel (%p9) target = $region8
  $region5: #{deeper_gcn_forward.20} parent=0 // loop_body
    %s13 = ssub.s32 %s8, 1
    %s14 = ssub.s32 %s8, 2
    %s15 = sadd.s32 %s8, 1
    %s16 = ssub.s32 %s8, %s15
    %p17 = scmp.eq.s32.totalorder %s16, 0
    %s19 = sadd.s32 %s18, 1
    %s20 = scalar_select %p17, %s18, %s19
    %p23 = pneg %p17
    %p24 = scmp.eq.s32.totalorder %s8, 1
    %p25 = por %p23, %p24
    %p26 = scmp.ne.s32.totalorder %s18, %s21
    %p27 = scmp.eq.s32.totalorder %s8, 0
    %p28 = por %p26, %p27
    %p29 = scmp.ne.s32.totalorder %s18, %s21
    %p30 = scmp.eq.s32.totalorder %s13, 1
    %p31 = por %p29, %p30
    %p32 = scmp.ne.s32.totalorder %s21, %s22
    %p33 = scmp.eq.s32.totalorder %s13, 0
    %p34 = por %p32, %p33
    %p35 = scmp.ne.s32.totalorder %s21, %s22
    %p36 = scmp.eq.s32.totalorder %s14, 1
    %p37 = por %p35, %p36
    %p39 = scmp.ne.s32.totalorder %s22, %s38
    %p40 = scmp.eq.s32.totalorder %s14, 0
    %p41 = por %p39, %p40
    %s42 = ssub.s32 %s8, %s15
    %p43 = scmp.eq.s32.totalorder %s42, 0
    %s45 = sadd.s32 %s44, 1
    %s46 = scalar_select %p43, %s44, %s45
    %p49 = pneg %p43
    %p50 = scmp.eq.s32.totalorder %s8, 1
    %p51 = por %p49, %p50
    %p52 = scmp.ne.s32.totalorder %s44, %s47
    %p53 = scmp.eq.s32.totalorder %s8, 0
    %p54 = por %p52, %p53
    %p55 = scmp.ne.s32.totalorder %s44, %s47
    %p56 = scmp.eq.s32.totalorder %s13, 1
    %p57 = por %p55, %p56
    %p58 = scmp.ne.s32.totalorder %s47, %s48
    %p59 = scmp.eq.s32.totalorder %s13, 0
    %p60 = por %p58, %p59
    %p61 = scmp.ne.s32.totalorder %s47, %s48
    %p62 = scmp.eq.s32.totalorder %s14, 1
    %p63 = por %p61, %p62
    %p65 = scmp.ne.s32.totalorder %s48, %s64
    %p66 = scmp.eq.s32.totalorder %s14, 0
    %p67 = por %p65, %p66
    %s68 = ssub.s32 %s8, %s15
    %p69 = scmp.eq.s32.totalorder %s68, 0
    %s71 = sadd.s32 %s70, 1
    %s72 = scalar_select %p69, %s70, %s71
    %p75 = pneg %p69
    %p76 = scmp.eq.s32.totalorder %s8, 1
    %p77 = por %p75, %p76
    %p78 = scmp.ne.s32.totalorder %s70, %s73
    %p79 = scmp.eq.s32.totalorder %s8, 0
    %p80 = por %p78, %p79
    %p81 = scmp.ne.s32.totalorder %s70, %s73
    %p82 = scmp.eq.s32.totalorder %s13, 1
    %p83 = por %p81, %p82
    %p84 = scmp.ne.s32.totalorder %s73, %s74
    %p85 = scmp.eq.s32.totalorder %s13, 0
    %p86 = por %p84, %p85
    %p87 = scmp.ne.s32.totalorder %s73, %s74
    %p88 = scmp.eq.s32.totalorder %s14, 1
    %p89 = por %p87, %p88
    %p91 = scmp.ne.s32.totalorder %s74, %s90
    %p92 = scmp.eq.s32.totalorder %s14, 0
    %p93 = por %p91, %p92
    %p94 = scmp.le.s32.totalorder 1, %s8
    %p95 = scmp.lt.s32.totalorder %s8, 3
    %p96 = pnand %p94, %p95
    %p97 = pneg %p96
    // Predicated region
    $region9: #{deeper_gcn_forward.20} parent=5 // pred_check
      _
    $region10: #{deeper_gcn_forward.20} parent=5 // pred_check_branch
      %99 = sbr.rel (%p96) target = $region12
    $region11: #{deeper_gcn_forward.20} parent=5 // pred_region
      %s100 = ssub.s32 %s8, 1
    $region12: #{deeper_gcn_forward.20} parent=5 // pred_fallthru
      _
    %p101 = scmp.lt.s32.totalorder %s8, 2
    // Predicated region
    $region13: #{deeper_gcn_forward.20} parent=5 // pred_check
      %p102 = pneg %p101
    $region14: #{deeper_gcn_forward.20} parent=5 // pred_check_branch
      %104 = sbr.rel (%p102) target = $region16
    $region15: #{deeper_gcn_forward.20} parent=5 // pred_region
      // Predicated region
      $region17: #{deeper_gcn_forward.20} parent=15 // pred_check
        %p105 = pneg %p28
      $region18: #{deeper_gcn_forward.20} parent=15 // pred_check_branch
        %107 = sbr.rel (%p105) target = $region20
      $region19: #{deeper_gcn_forward.20} parent=15 // pred_region
        %s108 = smul.u32 4, %s8
        %p109 = scmp.lt.s32.totalorder %s108, 7
        %s110 = scalar_select %p109, %s108, 7
        %s111 = smul.addr %s110, 8
        %s112 = scalar_lea.vmem %s0, %s111
        %s113 = smul.u32 4, %s8
      $region20: #{deeper_gcn_forward.20} parent=15 // pred_fallthru
        _
      // Predicated region
      $region21: #{deeper_gcn_forward.20} parent=15 // pred_check
        %p114 = pneg %p54
      $region22: #{deeper_gcn_forward.20} parent=15 // pred_check_branch
        %116 = sbr.rel (%p114) target = $region24
      $region23: #{deeper_gcn_forward.20} parent=15 // pred_region
        %s117 = smul.u32 4, %s8
        %p118 = scmp.lt.s32.totalorder %s117, 7
        %s119 = scalar_select %p118, %s117, 7
        %s120 = smul.addr %s119, 8
        %s121 = scalar_lea.vmem %s1, %s120
        %s122 = smul.u32 4, %s8
      $region24: #{deeper_gcn_forward.20} parent=15 // pred_fallthru
        _
    $region16: #{deeper_gcn_forward.20} parent=5 // pred_fallthru
      _
    %p123 = scmp.le.s32.totalorder 1, %s8
    %p124 = scmp.lt.s32.totalorder %s8, 3
    %p125 = pnand %p123, %p124
    %p126 = pneg %p125
    // Predicated region
    $region25: #{deeper_gcn_forward.20} parent=5 // pred_check
      _
    $region26: #{deeper_gcn_forward.20} parent=5 // pred_check_branch
      %128 = sbr.rel (%p125) target = $region28
    $region27: #{deeper_gcn_forward.20} parent=5 // pred_region
      %s129 = ssub.s32 %s8, 1
      %s130 = smul.u32 4, %s13
      %p131 = scmp.lt.s32.totalorder %s130, 7
      %s132 = scalar_select %p131, %s130, 7
      %s133 = smul.addr %s132, 8
      %s134 = scalar_lea.vmem %s0, %s133
      %p135 = pneg %p34
      %p136 = pneg %p31
      %s137 = smul.u32 4, %s13
      %p138 = scmp.lt.s32.totalorder %s137, 7
      %s139 = scalar_select %p138, %s137, 7
      %s140 = smul.addr %s139, 8
      %s141 = scalar_lea.vmem %s1, %s140
      %p142 = pneg %p60
      %p143 = pneg %p57
      %p144 = pneg %p86
      %p145 = pneg %p83
      %s146 = smul.u32 4, %s13
      %p147 = scmp.lt.s32.totalorder %s146, 7
      %s148 = scalar_select %p147, %s146, 7
      %s149 = smul.addr %s148, 8
      %s150 = scalar_lea.vmem %s2, %s149
      %s151 = smul.u32 4, %s13
      %p152 = scmp.lt.s32.totalorder %s151, 7
      %s153 = scalar_select %p152, %s151, 7
      %s154 = smul.addr %s153, 8
      %s155 = scalar_lea.vmem %s0, %s154
      %s156 = smul.u32 4, %s13
      %s157 = smul.u32 4, %s13
      %p158 = scmp.lt.s32.totalorder %s157, 7
      %s159 = scalar_select %p158, %s157, 7
      %s160 = smul.addr %s159, 8
      %s161 = scalar_lea.vmem %s1, %s160
      %s162 = smul.u32 4, %s13
      %s163 = smul.u32 4, %s13
      %p164 = scmp.lt.s32.totalorder %s163, 7
      %s165 = scalar_select %p164, %s163, 7
      %s166 = smul.addr %s165, 8
      %s167 = scalar_lea.vmem %s2, %s166
      %s168 = smul.u32 4, %s13
      %v169 = vld [vmem:[%s155] sm:$0xff]
      %v170 = vld [vmem:[%s155 + $0x8] sm:$0xff]
      %v171 = vld [vmem:[%s155 + $0x10] sm:$0xff]
      %v172 = vld [vmem:[%s155 + $0x18] sm:$0xff]
      %v173 = vld [vmem:[%s161] sm:$0xff]
      %v174 = vld [vmem:[%s161 + $0x8] sm:$0xff]
      %v175 = vld [vmem:[%s161 + $0x10] sm:$0xff]
      %v176 = vld [vmem:[%s161 + $0x18] sm:$0xff]
      %v177 = vadd.f32 %v169, %v173
      %v178 = vadd.f32 %v170, %v174
      %v179 = vadd.f32 %v171, %v175
      %v180 = vadd.f32 %v172, %v176
      %v181 = vmax.f32 %v177, 0.0
      %v182 = vmax.f32 %v178, 0.0
      %v183 = vmax.f32 %v179, 0.0
      %v184 = vmax.f32 %v180, 0.0
      %v185 = vadd.f32 %v181, 1e-07
      %v186 = vadd.f32 %v182, 1e-07
      %v187 = vadd.f32 %v183, 1e-07
      %v188 = vadd.f32 %v184, 1e-07
      %189 = vst [vmem:[%s167] sm:$0xff] %v185
      %190 = vst [vmem:[%s167 + $0x8] sm:$0xff] %v186
      %191 = vst [vmem:[%s167 + $0x10] sm:$0xff] %v187
      %192 = vst [vmem:[%s167 + $0x18] sm:$0xff] %v188
      %s193 = smul.u32 4, %s13
      %p194 = scmp.lt.s32.totalorder %s193, 7
      %s195 = scalar_select %p194, %s193, 7
      %s196 = smul.addr %s195, 8
      %s197 = scalar_lea.vmem %s2, %s196
      // Predicated region
      $region29: #{deeper_gcn_forward.20} parent=27 // pred_check
        %p198 = pneg %p83
      $region30: #{deeper_gcn_forward.20} parent=27 // pred_check_branch
        %200 = sbr.rel (%p198) target = $region32
      $region31: #{deeper_gcn_forward.20} parent=27 // pred_region
        %s201 = smul.u32 4, %s13
      $region32: #{deeper_gcn_forward.20} parent=27 // pred_fallthru
        _
    $region28: #{deeper_gcn_forward.20} parent=5 // pred_fallthru
      _
    %p202 = scmp.le.s32.totalorder 2, %s8
    // Predicated region
    $region33: #{deeper_gcn_forward.20} parent=5 // pred_check
      %p203 = pneg %p202
    $region34: #{deeper_gcn_forward.20} parent=5 // pred_check_branch
      %205 = sbr.rel (%p203) target = $region36
    $region35: #{deeper_gcn_forward.20} parent=5 // pred_region
      %s206 = ssub.s32 %s8, 2
      // Predicated region
      $region37: #{deeper_gcn_forward.20} parent=35 // pred_check
        %p207 = pneg %p89
      $region38: #{deeper_gcn_forward.20} parent=35 // pred_check_branch
        %209 = sbr.rel (%p207) target = $region40
      $region39: #{deeper_gcn_forward.20} parent=35 // pred_region
        %s210 = smul.u32 4, %s14
        %p211 = scmp.lt.s32.totalorder %s210, 7
        %s212 = scalar_select %p211, %s210, 7
        %s213 = smul.addr %s212, 8
        %s214 = scalar_lea.vmem %s2, %s213
      $region40: #{deeper_gcn_forward.20} parent=35 // pred_fallthru
        _
    $region36: #{deeper_gcn_forward.20} parent=5 // pred_fallthru
      _
  $region6: #{deeper_gcn_forward.20} parent=0 // loop_footer
    %s12 = sadd.s32 1, %s8
  $region7: #{deeper_gcn_forward.20} parent=0 // loop_footer_branch
    %7 = sbr.rel target = $region3
  $region8: #{deeper_gcn_forward.20} parent=0 // loop_exit
    _

// kernel: deeper_gcn_forward.21
$region0: #{deeper_gcn_forward.21}
  #allocation0 [shape = 'u32[]', space=smem, size = 0x4, offset = 0x4, fixed_abs, tag = 'smem constant byte address 0x4 - core index']
  #allocation1 [shape = 'u32[144,128]{1,0:T(1,128)}', space=vmem, size = 0x12000, scoped, tag = 'internal scratch']
  %s0 = inlined_call_operand.vmem [shape: f32[32,128], index: 0, kind: input, shape index: {}]
  %s1 = inlined_call_operand.vmem [shape: f32[32,128], index: 1, kind: input, shape index: {}]
  %s2 = inlined_call_operand.vmem [shape: bf16[128,256], index: 2, kind: input, shape index: {}]
  %s3 = inlined_call_operand.vmem [shape: f32[1,256], index: 3, kind: input, shape index: {}]
  %s4 = inlined_call_operand.vmem [shape: bf16[32,256], index: 4, kind: output, shape index: {0}]
  %s5 = inlined_call_operand.vmem [shape: f32[2,8,256], index: 5, kind: output, shape index: {1}]
  %6 = xla_tuple %s4, %s5
  %s7 = sld [smem:[#allocation0]]
  $region57: #{deeper_gcn_forward.21} parent=0
    _
  %s9 = ssub.s32 1, %s7
  %s10 = scalar_select 0, %s9, %s7
  loop: start=0, step=1, limit=4
  $region2: #{deeper_gcn_forward.21} parent=0 // loop_pre_header
    _
  $region3: #{deeper_gcn_forward.21} parent=0 // loop_header
    %s12 = sphi 0, %s16
    %p13 = scmp.ge.s32.totalorder %s12, 4
    %s22 = sphi 0, %s24
    %s25 = sphi 0, %s22
    %s26 = sphi 0, %s25
    %s42 = sphi 0, %s26
    %s48 = sphi 0, %s50
    %s51 = sphi 0, %s48
    %s52 = sphi 0, %s51
    %s68 = sphi 0, %s52
    %s72 = sphi 0, %s72
    %s74 = sphi 0, %s72
    %s75 = sphi 0, %s74
    %s89 = sphi 0, %s75
    %s93 = sphi 0, %s93
    %s95 = sphi 0, %s93
    %s96 = sphi 0, %s95
    %s110 = sphi 0, %s96
    %s116 = sphi 0, %s118
    %s119 = sphi 0, %s116
    %s120 = sphi 0, %s119
    %s136 = sphi 0, %s120
    %s142 = sphi 0, %s144
    %s145 = sphi 0, %s142
    %s146 = sphi 0, %s145
    %s162 = sphi 0, %s146
  $region4: #{deeper_gcn_forward.21} parent=0 // loop_header_branch
    %15 = sbr.rel (%p13) target = $region8
  $region5: #{deeper_gcn_forward.21} parent=0 // loop_body
    %s17 = ssub.s32 %s12, 1
    %s18 = ssub.s32 %s12, 2
    %s19 = sadd.s32 %s12, 1
    %s20 = ssub.s32 %s12, %s19
    %p21 = scmp.eq.s32.totalorder %s20, 0
    %s23 = sadd.s32 %s22, 1
    %s24 = scalar_select %p21, %s22, %s23
    %p27 = pneg %p21
    %p28 = scmp.eq.s32.totalorder %s12, 1
    %p29 = por %p27, %p28
    %p30 = scmp.ne.s32.totalorder %s22, %s25
    %p31 = scmp.eq.s32.totalorder %s12, 0
    %p32 = por %p30, %p31
    %p33 = scmp.ne.s32.totalorder %s22, %s25
    %p34 = scmp.eq.s32.totalorder %s17, 1
    %p35 = por %p33, %p34
    %p36 = scmp.ne.s32.totalorder %s25, %s26
    %p37 = scmp.eq.s32.totalorder %s17, 0
    %p38 = por %p36, %p37
    %p39 = scmp.ne.s32.totalorder %s25, %s26
    %p40 = scmp.eq.s32.totalorder %s18, 1
    %p41 = por %p39, %p40
    %p43 = scmp.ne.s32.totalorder %s26, %s42
    %p44 = scmp.eq.s32.totalorder %s18, 0
    %p45 = por %p43, %p44
    %s46 = ssub.s32 %s12, %s19
    %p47 = scmp.eq.s32.totalorder %s46, 0
    %s49 = sadd.s32 %s48, 1
    %s50 = scalar_select %p47, %s48, %s49
    %p53 = pneg %p47
    %p54 = scmp.eq.s32.totalorder %s12, 1
    %p55 = por %p53, %p54
    %p56 = scmp.ne.s32.totalorder %s48, %s51
    %p57 = scmp.eq.s32.totalorder %s12, 0
    %p58 = por %p56, %p57
    %p59 = scmp.ne.s32.totalorder %s48, %s51
    %p60 = scmp.eq.s32.totalorder %s17, 1
    %p61 = por %p59, %p60
    %p62 = scmp.ne.s32.totalorder %s51, %s52
    %p63 = scmp.eq.s32.totalorder %s17, 0
    %p64 = por %p62, %p63
    %p65 = scmp.ne.s32.totalorder %s51, %s52
    %p66 = scmp.eq.s32.totalorder %s18, 1
    %p67 = por %p65, %p66
    %p69 = scmp.ne.s32.totalorder %s52, %s68
    %p70 = scmp.eq.s32.totalorder %s18, 0
    %p71 = por %p69, %p70
    %s73 = sadd.s32 %s72, 1
    %p76 = scmp.eq.s32.totalorder %s12, 1
    %p77 = scmp.ne.s32.totalorder %s72, %s74
    %p78 = scmp.eq.s32.totalorder %s12, 0
    %p79 = por %p77, %p78
    %p80 = scmp.ne.s32.totalorder %s72, %s74
    %p81 = scmp.eq.s32.totalorder %s17, 1
    %p82 = por %p80, %p81
    %p83 = scmp.ne.s32.totalorder %s74, %s75
    %p84 = scmp.eq.s32.totalorder %s17, 0
    %p85 = por %p83, %p84
    %p86 = scmp.ne.s32.totalorder %s74, %s75
    %p87 = scmp.eq.s32.totalorder %s18, 1
    %p88 = por %p86, %p87
    %p90 = scmp.ne.s32.totalorder %s75, %s89
    %p91 = scmp.eq.s32.totalorder %s18, 0
    %p92 = por %p90, %p91
    %s94 = sadd.s32 %s93, 1
    %p97 = scmp.eq.s32.totalorder %s12, 1
    %p98 = scmp.ne.s32.totalorder %s93, %s95
    %p99 = scmp.eq.s32.totalorder %s12, 0
    %p100 = por %p98, %p99
    %p101 = scmp.ne.s32.totalorder %s93, %s95
    %p102 = scmp.eq.s32.totalorder %s17, 1
    %p103 = por %p101, %p102
    %p104 = scmp.ne.s32.totalorder %s95, %s96
    %p105 = scmp.eq.s32.totalorder %s17, 0
    %p106 = por %p104, %p105
    %p107 = scmp.ne.s32.totalorder %s95, %s96
    %p108 = scmp.eq.s32.totalorder %s18, 1
    %p109 = por %p107, %p108
    %p111 = scmp.ne.s32.totalorder %s96, %s110
    %p112 = scmp.eq.s32.totalorder %s18, 0
    %p113 = por %p111, %p112
    %s114 = ssub.s32 %s12, %s19
    %p115 = scmp.eq.s32.totalorder %s114, 0
    %s117 = sadd.s32 %s116, 1
    %s118 = scalar_select %p115, %s116, %s117
    %p121 = pneg %p115
    %p122 = scmp.eq.s32.totalorder %s12, 1
    %p123 = por %p121, %p122
    %p124 = scmp.ne.s32.totalorder %s116, %s119
    %p125 = scmp.eq.s32.totalorder %s12, 0
    %p126 = por %p124, %p125
    %p127 = scmp.ne.s32.totalorder %s116, %s119
    %p128 = scmp.eq.s32.totalorder %s17, 1
    %p129 = por %p127, %p128
    %p130 = scmp.ne.s32.totalorder %s119, %s120
    %p131 = scmp.eq.s32.totalorder %s17, 0
    %p132 = por %p130, %p131
    %p133 = scmp.ne.s32.totalorder %s119, %s120
    %p134 = scmp.eq.s32.totalorder %s18, 1
    %p135 = por %p133, %p134
    %p137 = scmp.ne.s32.totalorder %s120, %s136
    %p138 = scmp.eq.s32.totalorder %s18, 0
    %p139 = por %p137, %p138
    %s140 = ssub.s32 %s12, %s19
    %p141 = scmp.eq.s32.totalorder %s140, 0
    %s143 = sadd.s32 %s142, 1
    %s144 = scalar_select %p141, %s142, %s143
    %p147 = pneg %p141
    %p148 = scmp.eq.s32.totalorder %s12, 1
    %p149 = por %p147, %p148
    %p150 = scmp.ne.s32.totalorder %s142, %s145
    %p151 = scmp.eq.s32.totalorder %s12, 0
    %p152 = por %p150, %p151
    %p153 = scmp.ne.s32.totalorder %s142, %s145
    %p154 = scmp.eq.s32.totalorder %s17, 1
    %p155 = por %p153, %p154
    %p156 = scmp.ne.s32.totalorder %s145, %s146
    %p157 = scmp.eq.s32.totalorder %s17, 0
    %p158 = por %p156, %p157
    %p159 = scmp.ne.s32.totalorder %s145, %s146
    %p160 = scmp.eq.s32.totalorder %s18, 1
    %p161 = por %p159, %p160
    %p163 = scmp.ne.s32.totalorder %s146, %s162
    %p164 = scmp.eq.s32.totalorder %s18, 0
    %p165 = por %p163, %p164
    %p166 = scmp.le.s32.totalorder 1, %s12
    %p167 = scmp.lt.s32.totalorder %s12, 3
    %p168 = pnand %p166, %p167
    %p169 = pneg %p168
    // Predicated region
    $region9: #{deeper_gcn_forward.21} parent=5 // pred_check
      _
    $region10: #{deeper_gcn_forward.21} parent=5 // pred_check_branch
      %171 = sbr.rel (%p168) target = $region12
    $region11: #{deeper_gcn_forward.21} parent=5 // pred_region
      %s172 = ssub.s32 %s12, 1
      // Predicated region
      $region13: #{deeper_gcn_forward.21} parent=11 // pred_check
        %p173 = pneg %p85
      $region14: #{deeper_gcn_forward.21} parent=11 // pred_check_branch
        %175 = sbr.rel (%p173) target = $region16
      $region15: #{deeper_gcn_forward.21} parent=11 // pred_region
        _
      $region16: #{deeper_gcn_forward.21} parent=11 // pred_fallthru
        _
      // Predicated region
      $region17: #{deeper_gcn_forward.21} parent=11 // pred_check
        %p176 = pneg %p106
      $region18: #{deeper_gcn_forward.21} parent=11 // pred_check_branch
        %178 = sbr.rel (%p176) target = $region20
      $region19: #{deeper_gcn_forward.21} parent=11 // pred_region
        _
      $region20: #{deeper_gcn_forward.21} parent=11 // pred_fallthru
        _
    $region12: #{deeper_gcn_forward.21} parent=5 // pred_fallthru
      _
    %p179 = scmp.lt.s32.totalorder %s12, 2
    // Predicated region
    $region21: #{deeper_gcn_forward.21} parent=5 // pred_check
      %p180 = pneg %p179
    $region22: #{deeper_gcn_forward.21} parent=5 // pred_check_branch
      %182 = sbr.rel (%p180) target = $region24
    $region23: #{deeper_gcn_forward.21} parent=5 // pred_region
      // Predicated region
      $region25: #{deeper_gcn_forward.21} parent=23 // pred_check
        %p183 = pneg %p32
      $region26: #{deeper_gcn_forward.21} parent=23 // pred_check_branch
        %185 = sbr.rel (%p183) target = $region28
      $region27: #{deeper_gcn_forward.21} parent=23 // pred_region
        %s186 = smul.u32 2, %s12
        %p187 = scmp.lt.s32.totalorder %s186, 3
        %s188 = scalar_select %p187, %s186, 3
        %s189 = smul.addr %s188, 8
        %s190 = scalar_lea.vmem %s0, %s189
        %s191 = smul.u32 2, %s12
      $region28: #{deeper_gcn_forward.21} parent=23 // pred_fallthru
        _
      // Predicated region
      $region29: #{deeper_gcn_forward.21} parent=23 // pred_check
        %p192 = pneg %p58
      $region30: #{deeper_gcn_forward.21} parent=23 // pred_check_branch
        %194 = sbr.rel (%p192) target = $region32
      $region31: #{deeper_gcn_forward.21} parent=23 // pred_region
        %s195 = smul.u32 2, %s12
        %p196 = scmp.lt.s32.totalorder %s195, 3
        %s197 = scalar_select %p196, %s195, 3
        %s198 = smul.addr %s197, 8
        %s199 = scalar_lea.vmem %s1, %s198
        %s200 = smul.u32 2, %s12
      $region32: #{deeper_gcn_forward.21} parent=23 // pred_fallthru
        _
    $region24: #{deeper_gcn_forward.21} parent=5 // pred_fallthru
      _
    %p201 = scmp.le.s32.totalorder 1, %s12
    %p202 = scmp.lt.s32.totalorder %s12, 3
    %p203 = pnand %p201, %p202
    %p204 = pneg %p203
    // Predicated region
    $region33: #{deeper_gcn_forward.21} parent=5 // pred_check
      _
    $region34: #{deeper_gcn_forward.21} parent=5 // pred_check_branch
      %206 = sbr.rel (%p203) target = $region36
    $region35: #{deeper_gcn_forward.21} parent=5 // pred_region
      %s207 = ssub.s32 %s12, 1
      %s208 = smul.u32 2, %s17
      %p209 = scmp.lt.s32.totalorder %s208, 3
      %s210 = scalar_select %p209, %s208, 3
      %s211 = smul.addr %s210, 8
      %s212 = scalar_lea.vmem %s0, %s211
      %p213 = pneg %p38
      %p214 = pneg %p35
      %s215 = smul.u32 2, %s17
      %p216 = scmp.lt.s32.totalorder %s215, 3
      %s217 = scalar_select %p216, %s215, 3
      %s218 = smul.addr %s217, 8
      %s219 = scalar_lea.vmem %s1, %s218
      %p220 = pneg %p64
      %p221 = pneg %p61
      %p222 = pneg %p85
      %p223 = pneg %p82
      %p224 = pneg %p106
      %p225 = pneg %p103
      %p226 = pneg %p132
      %p227 = pneg %p129
      %s228 = smul.u32 2, %s17
      %p229 = scmp.lt.s32.totalorder %s228, 3
      %s230 = scalar_select %p229, %s228, 3
      %s231 = smul.addr %s230, 2
      %s232 = smul.addr %s231, 4
      %s233 = scalar_lea.vmem %s4, %s232
      %p234 = pneg %p158
      %p235 = pneg %p155
      %p236 = scmp.lt.s32.totalorder %s17, 1
      %s237 = scalar_select %p236, %s17, 1
      %s238 = smul.addr %s237, 2
      %s239 = smul.addr %s238, 8
      %s240 = scalar_lea.vmem %s5, %s239
      %s241 = smul.u32 2, %s17
      %p242 = scmp.lt.s32.totalorder %s241, 3
      %s243 = scalar_select %p242, %s241, 3
      %s244 = smul.addr %s243, 8
      %s245 = scalar_lea.vmem %s0, %s244
      %s246 = smul.u32 2, %s17
      %s247 = smul.u32 2, %s17
      %p248 = scmp.lt.s32.totalorder %s247, 3
      %s249 = scalar_select %p248, %s247, 3
      %s250 = smul.addr %s249, 8
      %s251 = scalar_lea.vmem %s1, %s250
      %s252 = smul.u32 2, %s17
      %s253 = smul.u32 2, %s17
      %p254 = scmp.lt.s32.totalorder %s253, 3
      %s255 = scalar_select %p254, %s253, 3
      %s256 = smul.addr %s255, 2
      %s257 = smul.addr %s256, 4
      %s258 = scalar_lea.vmem %s4, %s257
      %s259 = smul.u32 2, %s17
      %p260 = scmp.lt.s32.totalorder %s17, 1
      %s261 = scalar_select %p260, %s17, 1
      %s262 = smul.addr %s261, 2
      %s263 = smul.addr %s262, 8
      %s264 = scalar_lea.vmem %s5, %s263
      %v266 = vld [vmem:[%s245] sm:$0xff]
      %v267 = vld [vmem:[%s245 + $0x8] sm:$0xff]
      %v268 = vld [vmem:[%s251] sm:$0xff]
      %v269 = vld [vmem:[%s251 + $0x8] sm:$0xff]
      %v270 = vadd.f32 %v266, %v268
      %v271 = vadd.f32 %v267, %v269
      %v272 = vpack.c.bf16 %v271, %v270
      %v273 = vld [vmem:[%s2] sm:$0xff]
      %v274 = vld [vmem:[%s2 + $0x8] sm:$0xff]
      %v275 = vld [vmem:[%s2 + $0x10] sm:$0xff]
      %v276 = vld [vmem:[%s2 + $0x18] sm:$0xff]
      %v277 = vld [vmem:[%s2 + $0x20] sm:$0xff]
      %v278 = vld [vmem:[%s2 + $0x28] sm:$0xff]
      %v279 = vld [vmem:[%s2 + $0x30] sm:$0xff]
      %v280 = vld [vmem:[%s2 + $0x38] sm:$0xff]
      %v281 = vld [vmem:[%s2 + $0x40] sm:$0xff]
      %v282 = vld [vmem:[%s2 + $0x48] sm:$0xff]
      %v283 = vld [vmem:[%s2 + $0x50] sm:$0xff]
      %v284 = vld [vmem:[%s2 + $0x58] sm:$0xff]
      %v285 = vld [vmem:[%s2 + $0x60] sm:$0xff]
      %v286 = vld [vmem:[%s2 + $0x68] sm:$0xff]
      %v287 = vld [vmem:[%s2 + $0x70] sm:$0xff]
      %v288 = vld [vmem:[%s2 + $0x78] sm:$0xff]
      %v289 = vld [vmem:[%s3] sm:$0x3]
      %v291 = vlaneseq
      %v292 = vshrl.u32 %v291, 7
      %v293 = vsub.s32 0, %v292
      %v294 = vrot.slane %v289, %v293
      %v295 = vlaneseq
      %v296 = vshrl.u32 %v295, 7
      %v297 = vsub.s32 1, %v296
      %v298 = vrot.slane %v289, %v297
      %v317 = vunpack.c.l.b16 %v273
      %v318 = vunpack.c.h.b16 %v273
      %v319 = vunpack.c.l.b16 %v274
      %v320 = vunpack.c.h.b16 %v274
      %v321 = vunpack.c.l.b16 %v275
      %v322 = vunpack.c.h.b16 %v275
      %v323 = vunpack.c.l.b16 %v276
      %v324 = vunpack.c.h.b16 %v276
      %v325 = vunpack.c.l.b16 %v277
      %v326 = vunpack.c.h.b16 %v277
      %v327 = vunpack.c.l.b16 %v278
      %v328 = vunpack.c.h.b16 %v278
      %v329 = vunpack.c.l.b16 %v279
      %v330 = vunpack.c.h.b16 %v279
      %v331 = vunpack.c.l.b16 %v280
      %v332 = vunpack.c.h.b16 %v280
      %v333 = vunpack.c.l.b16 %v281
      %v334 = vunpack.c.h.b16 %v281
      %v335 = vunpack.c.l.b16 %v282
      %v336 = vunpack.c.h.b16 %v282
      %v337 = vunpack.c.l.b16 %v283
      %v338 = vunpack.c.h.b16 %v283
      %v339 = vunpack.c.l.b16 %v284
      %v340 = vunpack.c.h.b16 %v284
      %v341 = vunpack.c.l.b16 %v285
      %v342 = vunpack.c.h.b16 %v285
      %v343 = vunpack.c.l.b16 %v286
      %v344 = vunpack.c.h.b16 %v286
      %v345 = vunpack.c.l.b16 %v287
      %v346 = vunpack.c.h.b16 %v287
      %v347 = vunpack.c.l.b16 %v288
      %v348 = vunpack.c.h.b16 %v288
      %v349 = vpack.c.b16 %v319, %v317
      %v350 = vpack.c.b16 %v320, %v318
      %v351 = vpack.c.b16 %v323, %v321
      %v352 = vpack.c.b16 %v324, %v322
      %v353 = vpack.c.b16 %v327, %v325
      %v354 = vpack.c.b16 %v328, %v326
      %v355 = vpack.c.b16 %v331, %v329
      %v356 = vpack.c.b16 %v332, %v330
      %v357 = vpack.c.b16 %v335, %v333
      %v358 = vpack.c.b16 %v336, %v334
      %v359 = vpack.c.b16 %v339, %v337
      %v360 = vpack.c.b16 %v340, %v338
      %v361 = vpack.c.b16 %v343, %v341
      %v362 = vpack.c.b16 %v344, %v342
      %v363 = vpack.c.b16 %v347, %v345
      %v364 = vpack.c.b16 %v348, %v346
      %381 = vmatprep.subr.bf16.mxu0 %v364
      %382 = vmatpush1.bf16.msra.mxu0 %v363
      %383 = vmatprep.subr.bf16.mxu0 %v362
      %384 = vmatpush1.bf16.msra.mxu0 %v361
      %385 = vmatprep.subr.bf16.mxu0 %v360
      %386 = vmatpush1.bf16.msra.mxu0 %v359
      %387 = vmatprep.subr.bf16.mxu0 %v358
      %388 = vmatpush1.bf16.msra.mxu0 %v357
      %389 = vmatprep.subr.bf16.mxu0 %v356
      %390 = vmatpush1.bf16.msra.mxu0 %v355
      %391 = vmatprep.subr.bf16.mxu0 %v354
      %392 = vmatpush1.bf16.msra.mxu0 %v353
      %393 = vmatprep.subr.bf16.mxu0 %v352
      %394 = vmatpush1.bf16.msra.mxu0 %v351
      %395 = vmatprep.subr.bf16.mxu0 %v350
      %396 = vmatpush1.bf16.msra.mxu0 %v349
      %397 = vmatprep.subr.bf16.mxu0 0
      %398 = vmatpush2.bf16.msra.mxu0 0
      %399 = vmatprep.subr.bf16.mxu0 0
      %400 = vmatpush2.bf16.msra.mxu0 0
      %401 = vmatprep.subr.bf16.mxu0 0
      %402 = vmatpush2.bf16.msra.mxu0 0
      %403 = vmatprep.subr.bf16.mxu0 0
      %404 = vmatpush2.bf16.msra.mxu0 0
      %405 = vmatprep.subr.bf16.mxu0 0
      %406 = vmatpush2.bf16.msra.mxu0 0
      %407 = vmatprep.subr.bf16.mxu0 0
      %408 = vmatpush2.bf16.msra.mxu0 0
      %409 = vmatprep.subr.bf16.mxu0 0
      %410 = vmatpush2.bf16.msra.mxu0 0
      %411 = vmatprep.subr.bf16.mxu0 0
      %412 = vmatpush2.bf16.msra.mxu0 0
      %413 = vmatprep.mubr.bf16.mxu0 0
      %414 = vmatmul.mubr.bf16.gmra.mxu0 %v272
      %v415 = vpop.f32.mrf.mxu0
      %v416 = vadd.f32 %v294, %v415
      %v417 = vpop.f32.mrf.mxu0
      %v418 = vadd.f32 %v298, %v417
      %v419 = vpop.f32.mrf.mxu0
      %v420 = vadd.f32 %v294, %v419
      %v421 = vpop.f32.mrf.mxu0
      %v422 = vadd.f32 %v298, %v421
      %423 = vdwg.mxu0
      %v424 = vpack.c.bf16 %v420, %v416
      %v425 = vpack.c.bf16 %v422, %v418
      %v428 = vunpack.c.l.b16 %v424
      %v429 = vunpack.c.l.b16 %v425
      %v430 = vunpack.c.h.b16 %v424
      %v431 = vunpack.c.h.b16 %v425
      %v432 = vpack.c.b16 %v429, %v428
      %v433 = vpack.c.b16 %v431, %v430
      %436 = vst [vmem:[%s258] sm:$0xff] %v432
      %437 = vst [vmem:[%s258 + $0x8] sm:$0xff] %v433
      %s438 = smul.u32 %s17, 16
      %v439 = vlaneseq
      %v440 = vshrl.u32 %v439, 7
      %v441 = vadd.s32 %v440, 8
      %v442 = vstv %s438
      %v443 = vadd.s32 %v442, %v440
      %v444 = vadd.s32 %v442, %v441
      %vm445 = vcmp.lt.s32.totalorder %v443, 32
      %vm446 = vcmp.lt.s32.totalorder %v444, 32
      %v447 = vsel %vm445, 1, 0
      %v448 = vsel %vm446, 1, 0
      %vm449 = vcmp.eq.s32.totalorder %v447, 1
      %vm450 = vcmp.eq.s32.totalorder %v448, 1
      %v451 = vsel %vm449, %v416, 0.0
      %v452 = vsel %vm449, %v418, 0.0
      %v453 = vsel %vm450, %v420, 0.0
      %v454 = vsel %vm450, %v422, 0.0
      %v455 = vadd.f32 %v451, %v453
      %v456 = vrot.slane %v455, 4
      %v457 = vadd.f32 %v455, %v456
      %v458 = vrot.slane %v457, 2
      %v459 = vadd.f32 %v457, %v458
      %v460 = vrot.slane %v459, 1
      %v461 = vadd.f32 %v459, %v460
      %v462 = vadd.f32 %v452, %v454
      %v463 = vrot.slane %v462, 4
      %v464 = vadd.f32 %v462, %v463
      %v465 = vrot.slane %v464, 2
      %v466 = vadd.f32 %v464, %v465
      %v467 = vrot.slane %v466, 1
      %v468 = vadd.f32 %v466, %v467
      %v469 = vmul.f32 %v451, %v451
      %v470 = vmul.f32 %v452, %v452
      %v471 = vmul.f32 %v453, %v453
      %v472 = vmul.f32 %v454, %v454
      %v473 = vadd.f32 %v469, %v471
      %v474 = vrot.slane %v473, 4
      %v475 = vadd.f32 %v473, %v474
      %v476 = vrot.slane %v475, 2
      %v477 = vadd.f32 %v475, %v476
      %v478 = vrot.slane %v477, 1
      %v479 = vadd.f32 %v477, %v478
      %v480 = vadd.f32 %v470, %v472
      %v481 = vrot.slane %v480, 4
      %v482 = vadd.f32 %v480, %v481
      %v483 = vrot.slane %v482, 2
      %v484 = vadd.f32 %v482, %v483
      %v485 = vrot.slane %v484, 1
      %v486 = vadd.f32 %v484, %v485
      %vm487 = vcmp.eq.s32.totalorder %v440, 0
      %vm488 = vcmp.eq.s32.totalorder %v440, 1
      %v489 = vsel %vm488, %v479, 0.0
      %v490 = vsel %vm488, %v486, 0.0
      %v491 = vsel %vm487, %v461, %v489
      %v492 = vsel %vm487, %v468, %v490
      %493 = vst [vmem:[%s264] sm:$0xff] %v491
      %494 = vst [vmem:[%s264 + $0x8] sm:$0xff] %v492
      %s495 = smul.u32 2, %s17
      %p496 = scmp.lt.s32.totalorder %s495, 3
      %s497 = scalar_select %p496, %s495, 3
      %s498 = smul.addr %s497, 2
      %s499 = smul.addr %s498, 4
      %s500 = scalar_lea.vmem %s4, %s499
      %p501 = scmp.lt.s32.totalorder %s17, 1
      %s502 = scalar_select %p501, %s17, 1
      %s503 = smul.addr %s502, 2
      %s504 = smul.addr %s503, 8
      %s505 = scalar_lea.vmem %s5, %s504
      // Predicated region
      $region37: #{deeper_gcn_forward.21} parent=35 // pred_check
        %p506 = pneg %p129
      $region38: #{deeper_gcn_forward.21} parent=35 // pred_check_branch
        %508 = sbr.rel (%p506) target = $region40
      $region39: #{deeper_gcn_forward.21} parent=35 // pred_region
        %s509 = smul.u32 2, %s17
      $region40: #{deeper_gcn_forward.21} parent=35 // pred_fallthru
        _
      // Predicated region
      $region41: #{deeper_gcn_forward.21} parent=35 // pred_check
        %p510 = pneg %p155
      $region42: #{deeper_gcn_forward.21} parent=35 // pred_check_branch
        %512 = sbr.rel (%p510) target = $region44
      $region43: #{deeper_gcn_forward.21} parent=35 // pred_region
        _
      $region44: #{deeper_gcn_forward.21} parent=35 // pred_fallthru
        _
    $region36: #{deeper_gcn_forward.21} parent=5 // pred_fallthru
      _
    %p513 = scmp.le.s32.totalorder 2, %s12
    // Predicated region
    $region45: #{deeper_gcn_forward.21} parent=5 // pred_check
      %p514 = pneg %p513
    $region46: #{deeper_gcn_forward.21} parent=5 // pred_check_branch
      %516 = sbr.rel (%p514) target = $region48
    $region47: #{deeper_gcn_forward.21} parent=5 // pred_region
      %s517 = ssub.s32 %s12, 2
      // Predicated region
      $region49: #{deeper_gcn_forward.21} parent=47 // pred_check
        %p518 = pneg %p135
      $region50: #{deeper_gcn_forward.21} parent=47 // pred_check_branch
        %520 = sbr.rel (%p518) target = $region52
      $region51: #{deeper_gcn_forward.21} parent=47 // pred_region
        %s521 = smul.u32 2, %s18
        %p522 = scmp.lt.s32.totalorder %s521, 3
        %s523 = scalar_select %p522, %s521, 3
        %s524 = smul.addr %s523, 2
        %s525 = smul.addr %s524, 4
        %s526 = scalar_lea.vmem %s4, %s525
      $region52: #{deeper_gcn_forward.21} parent=47 // pred_fallthru
        _
      // Predicated region
      $region53: #{deeper_gcn_forward.21} parent=47 // pred_check
        %p527 = pneg %p161
      $region54: #{deeper_gcn_forward.21} parent=47 // pred_check_branch
        %529 = sbr.rel (%p527) target = $region56
      $region55: #{deeper_gcn_forward.21} parent=47 // pred_region
        %p530 = scmp.lt.s32.totalorder %s18, 1
        %s531 = scalar_select %p530, %s18, 1
        %s532 = smul.addr %s531, 2
        %s533 = smul.addr %s532, 8
        %s534 = scalar_lea.vmem %s5, %s533
      $region56: #{deeper_gcn_forward.21} parent=47 // pred_fallthru
        _
    $region48: #{deeper_gcn_forward.21} parent=5 // pred_fallthru
      _
  $region6: #{deeper_gcn_forward.21} parent=0 // loop_footer
    %s16 = sadd.s32 1, %s12
  $region7: #{deeper_gcn_forward.21} parent=0 // loop_footer_branch
    %11 = sbr.rel target = $region3
  $region8: #{deeper_gcn_forward.21} parent=0 // loop_exit
    _

// kernel: deeper_gcn_forward.22
$region0: #{deeper_gcn_forward.22}
  #allocation0 [shape = 'u32[]', space=smem, size = 0x4, offset = 0x4, fixed_abs, tag = 'smem constant byte address 0x4 - core index']
  #allocation1 [shape = 'u32[144,128]{1,0:T(1,128)}', space=vmem, size = 0x12000, scoped, tag = 'internal scratch']
  %s0 = inlined_call_operand.vmem [shape: bf16[32,256], index: 0, kind: input, shape index: {}]
  %s1 = inlined_call_operand.vmem [shape: f32[1,256], index: 1, kind: input, shape index: {}]
  %s2 = inlined_call_operand.vmem [shape: f32[1,256], index: 2, kind: input, shape index: {}]
  %s3 = inlined_call_operand.vmem [shape: bf16[256,256], index: 3, kind: input, shape index: {}]
  %s4 = inlined_call_operand.vmem [shape: f32[1,256], index: 4, kind: input, shape index: {}]
  %s5 = inlined_call_operand.vmem [shape: bf16[32,256], index: 5, kind: output, shape index: {0}]
  %s6 = inlined_call_operand.vmem [shape: f32[2,8,256], index: 6, kind: output, shape index: {1}]
  %7 = xla_tuple %s5, %s6
  %s8 = sld [smem:[#allocation0]]
  $region61: #{deeper_gcn_forward.22} parent=0
    _
  %s10 = ssub.s32 1, %s8
  %s11 = scalar_select 0, %s10, %s8
  loop: start=0, step=1, limit=4
  $region2: #{deeper_gcn_forward.22} parent=0 // loop_pre_header
    _
  $region3: #{deeper_gcn_forward.22} parent=0 // loop_header
    %s13 = sphi 0, %s17
    %p14 = scmp.ge.s32.totalorder %s13, 4
    %s23 = sphi 0, %s25
    %s26 = sphi 0, %s23
    %s27 = sphi 0, %s26
    %s43 = sphi 0, %s27
    %s47 = sphi 0, %s47
    %s49 = sphi 0, %s47
    %s50 = sphi 0, %s49
    %s64 = sphi 0, %s50
    %s68 = sphi 0, %s68
    %s70 = sphi 0, %s68
    %s71 = sphi 0, %s70
    %s85 = sphi 0, %s71
    %s89 = sphi 0, %s89
    %s91 = sphi 0, %s89
    %s92 = sphi 0, %s91
    %s106 = sphi 0, %s92
    %s110 = sphi 0, %s110
    %s112 = sphi 0, %s110
    %s113 = sphi 0, %s112
    %s127 = sphi 0, %s113
    %s133 = sphi 0, %s135
    %s136 = sphi 0, %s133
    %s137 = sphi 0, %s136
    %s153 = sphi 0, %s137
    %s159 = sphi 0, %s161
    %s162 = sphi 0, %s159
    %s163 = sphi 0, %s162
    %s179 = sphi 0, %s163
  $region4: #{deeper_gcn_forward.22} parent=0 // loop_header_branch
    %16 = sbr.rel (%p14) target = $region8
  $region5: #{deeper_gcn_forward.22} parent=0 // loop_body
    %s18 = ssub.s32 %s13, 1
    %s19 = ssub.s32 %s13, 2
    %s20 = sadd.s32 %s13, 1
    %s21 = ssub.s32 %s13, %s20
    %p22 = scmp.eq.s32.totalorder %s21, 0
    %s24 = sadd.s32 %s23, 1
    %s25 = scalar_select %p22, %s23, %s24
    %p28 = pneg %p22
    %p29 = scmp.eq.s32.totalorder %s13, 1
    %p30 = por %p28, %p29
    %p31 = scmp.ne.s32.totalorder %s23, %s26
    %p32 = scmp.eq.s32.totalorder %s13, 0
    %p33 = por %p31, %p32
    %p34 = scmp.ne.s32.totalorder %s23, %s26
    %p35 = scmp.eq.s32.totalorder %s18, 1
    %p36 = por %p34, %p35
    %p37 = scmp.ne.s32.totalorder %s26, %s27
    %p38 = scmp.eq.s32.totalorder %s18, 0
    %p39 = por %p37, %p38
    %p40 = scmp.ne.s32.totalorder %s26, %s27
    %p41 = scmp.eq.s32.totalorder %s19, 1
    %p42 = por %p40, %p41
    %p44 = scmp.ne.s32.totalorder %s27, %s43
    %p45 = scmp.eq.s32.totalorder %s19, 0
    %p46 = por %p44, %p45
    %s48 = sadd.s32 %s47, 1
    %p51 = scmp.eq.s32.totalorder %s13, 1
    %p52 = scmp.ne.s32.totalorder %s47, %s49
    %p53 = scmp.eq.s32.totalorder %s13, 0
    %p54 = por %p52, %p53
    %p55 = scmp.ne.s32.totalorder %s47, %s49
    %p56 = scmp.eq.s32.totalorder %s18, 1
    %p57 = por %p55, %p56
    %p58 = scmp.ne.s32.totalorder %s49, %s50
    %p59 = scmp.eq.s32.totalorder %s18, 0
    %p60 = por %p58, %p59
    %p61 = scmp.ne.s32.totalorder %s49, %s50
    %p62 = scmp.eq.s32.totalorder %s19, 1
    %p63 = por %p61, %p62
    %p65 = scmp.ne.s32.totalorder %s50, %s64
    %p66 = scmp.eq.s32.totalorder %s19, 0
    %p67 = por %p65, %p66
    %s69 = sadd.s32 %s68, 1
    %p72 = scmp.eq.s32.totalorder %s13, 1
    %p73 = scmp.ne.s32.totalorder %s68, %s70
    %p74 = scmp.eq.s32.totalorder %s13, 0
    %p75 = por %p73, %p74
    %p76 = scmp.ne.s32.totalorder %s68, %s70
    %p77 = scmp.eq.s32.totalorder %s18, 1
    %p78 = por %p76, %p77
    %p79 = scmp.ne.s32.totalorder %s70, %s71
    %p80 = scmp.eq.s32.totalorder %s18, 0
    %p81 = por %p79, %p80
    %p82 = scmp.ne.s32.totalorder %s70, %s71
    %p83 = scmp.eq.s32.totalorder %s19, 1
    %p84 = por %p82, %p83
    %p86 = scmp.ne.s32.totalorder %s71, %s85
    %p87 = scmp.eq.s32.totalorder %s19, 0
    %p88 = por %p86, %p87
    %s90 = sadd.s32 %s89, 1
    %p93 = scmp.eq.s32.totalorder %s13, 1
    %p94 = scmp.ne.s32.totalorder %s89, %s91
    %p95 = scmp.eq.s32.totalorder %s13, 0
    %p96 = por %p94, %p95
    %p97 = scmp.ne.s32.totalorder %s89, %s91
    %p98 = scmp.eq.s32.totalorder %s18, 1
    %p99 = por %p97, %p98
    %p100 = scmp.ne.s32.totalorder %s91, %s92
    %p101 = scmp.eq.s32.totalorder %s18, 0
    %p102 = por %p100, %p101
    %p103 = scmp.ne.s32.totalorder %s91, %s92
    %p104 = scmp.eq.s32.totalorder %s19, 1
    %p105 = por %p103, %p104
    %p107 = scmp.ne.s32.totalorder %s92, %s106
    %p108 = scmp.eq.s32.totalorder %s19, 0
    %p109 = por %p107, %p108
    %s111 = sadd.s32 %s110, 1
    %p114 = scmp.eq.s32.totalorder %s13, 1
    %p115 = scmp.ne.s32.totalorder %s110, %s112
    %p116 = scmp.eq.s32.totalorder %s13, 0
    %p117 = por %p115, %p116
    %p118 = scmp.ne.s32.totalorder %s110, %s112
    %p119 = scmp.eq.s32.totalorder %s18, 1
    %p120 = por %p118, %p119
    %p121 = scmp.ne.s32.totalorder %s112, %s113
    %p122 = scmp.eq.s32.totalorder %s18, 0
    %p123 = por %p121, %p122
    %p124 = scmp.ne.s32.totalorder %s112, %s113
    %p125 = scmp.eq.s32.totalorder %s19, 1
    %p126 = por %p124, %p125
    %p128 = scmp.ne.s32.totalorder %s113, %s127
    %p129 = scmp.eq.s32.totalorder %s19, 0
    %p130 = por %p128, %p129
    %s131 = ssub.s32 %s13, %s20
    %p132 = scmp.eq.s32.totalorder %s131, 0
    %s134 = sadd.s32 %s133, 1
    %s135 = scalar_select %p132, %s133, %s134
    %p138 = pneg %p132
    %p139 = scmp.eq.s32.totalorder %s13, 1
    %p140 = por %p138, %p139
    %p141 = scmp.ne.s32.totalorder %s133, %s136
    %p142 = scmp.eq.s32.totalorder %s13, 0
    %p143 = por %p141, %p142
    %p144 = scmp.ne.s32.totalorder %s133, %s136
    %p145 = scmp.eq.s32.totalorder %s18, 1
    %p146 = por %p144, %p145
    %p147 = scmp.ne.s32.totalorder %s136, %s137
    %p148 = scmp.eq.s32.totalorder %s18, 0
    %p149 = por %p147, %p148
    %p150 = scmp.ne.s32.totalorder %s136, %s137
    %p151 = scmp.eq.s32.totalorder %s19, 1
    %p152 = por %p150, %p151
    %p154 = scmp.ne.s32.totalorder %s137, %s153
    %p155 = scmp.eq.s32.totalorder %s19, 0
    %p156 = por %p154, %p155
    %s157 = ssub.s32 %s13, %s20
    %p158 = scmp.eq.s32.totalorder %s157, 0
    %s160 = sadd.s32 %s159, 1
    %s161 = scalar_select %p158, %s159, %s160
    %p164 = pneg %p158
    %p165 = scmp.eq.s32.totalorder %s13, 1
    %p166 = por %p164, %p165
    %p167 = scmp.ne.s32.totalorder %s159, %s162
    %p168 = scmp.eq.s32.totalorder %s13, 0
    %p169 = por %p167, %p168
    %p170 = scmp.ne.s32.totalorder %s159, %s162
    %p171 = scmp.eq.s32.totalorder %s18, 1
    %p172 = por %p170, %p171
    %p173 = scmp.ne.s32.totalorder %s162, %s163
    %p174 = scmp.eq.s32.totalorder %s18, 0
    %p175 = por %p173, %p174
    %p176 = scmp.ne.s32.totalorder %s162, %s163
    %p177 = scmp.eq.s32.totalorder %s19, 1
    %p178 = por %p176, %p177
    %p180 = scmp.ne.s32.totalorder %s163, %s179
    %p181 = scmp.eq.s32.totalorder %s19, 0
    %p182 = por %p180, %p181
    %p183 = scmp.le.s32.totalorder 1, %s13
    %p184 = scmp.lt.s32.totalorder %s13, 3
    %p185 = pnand %p183, %p184
    %p186 = pneg %p185
    // Predicated region
    $region9: #{deeper_gcn_forward.22} parent=5 // pred_check
      _
    $region10: #{deeper_gcn_forward.22} parent=5 // pred_check_branch
      %188 = sbr.rel (%p185) target = $region12
    $region11: #{deeper_gcn_forward.22} parent=5 // pred_region
      %s189 = ssub.s32 %s13, 1
      // Predicated region
      $region13: #{deeper_gcn_forward.22} parent=11 // pred_check
        %p190 = pneg %p60
      $region14: #{deeper_gcn_forward.22} parent=11 // pred_check_branch
        %192 = sbr.rel (%p190) target = $region16
      $region15: #{deeper_gcn_forward.22} parent=11 // pred_region
        _
      $region16: #{deeper_gcn_forward.22} parent=11 // pred_fallthru
        _
      // Predicated region
      $region17: #{deeper_gcn_forward.22} parent=11 // pred_check
        %p193 = pneg %p81
      $region18: #{deeper_gcn_forward.22} parent=11 // pred_check_branch
        %195 = sbr.rel (%p193) target = $region20
      $region19: #{deeper_gcn_forward.22} parent=11 // pred_region
        _
      $region20: #{deeper_gcn_forward.22} parent=11 // pred_fallthru
        _
      // Predicated region
      $region21: #{deeper_gcn_forward.22} parent=11 // pred_check
        %p196 = pneg %p102
      $region22: #{deeper_gcn_forward.22} parent=11 // pred_check_branch
        %198 = sbr.rel (%p196) target = $region24
      $region23: #{deeper_gcn_forward.22} parent=11 // pred_region
        _
      $region24: #{deeper_gcn_forward.22} parent=11 // pred_fallthru
        _
      // Predicated region
      $region25: #{deeper_gcn_forward.22} parent=11 // pred_check
        %p199 = pneg %p123
      $region26: #{deeper_gcn_forward.22} parent=11 // pred_check_branch
        %201 = sbr.rel (%p199) target = $region28
      $region27: #{deeper_gcn_forward.22} parent=11 // pred_region
        _
      $region28: #{deeper_gcn_forward.22} parent=11 // pred_fallthru
        _
    $region12: #{deeper_gcn_forward.22} parent=5 // pred_fallthru
      _
    %p202 = scmp.lt.s32.totalorder %s13, 2
    // Predicated region
    $region29: #{deeper_gcn_forward.22} parent=5 // pred_check
      %p203 = pneg %p202
    $region30: #{deeper_gcn_forward.22} parent=5 // pred_check_branch
      %205 = sbr.rel (%p203) target = $region32
    $region31: #{deeper_gcn_forward.22} parent=5 // pred_region
      // Predicated region
      $region33: #{deeper_gcn_forward.22} parent=31 // pred_check
        %p206 = pneg %p33
      $region34: #{deeper_gcn_forward.22} parent=31 // pred_check_branch
        %208 = sbr.rel (%p206) target = $region36
      $region35: #{deeper_gcn_forward.22} parent=31 // pred_region
        %s209 = smul.u32 2, %s13
        %p210 = scmp.lt.s32.totalorder %s209, 3
        %s211 = scalar_select %p210, %s209, 3
        %s212 = smul.addr %s211, 2
        %s213 = smul.addr %s212, 4
        %s214 = scalar_lea.vmem %s0, %s213
        %s215 = smul.u32 2, %s13
      $region36: #{deeper_gcn_forward.22} parent=31 // pred_fallthru
        _
    $region32: #{deeper_gcn_forward.22} parent=5 // pred_fallthru
      _
    %p216 = scmp.le.s32.totalorder 1, %s13
    %p217 = scmp.lt.s32.totalorder %s13, 3
    %p218 = pnand %p216, %p217
    %p219 = pneg %p218
    // Predicated region
    $region37: #{deeper_gcn_forward.22} parent=5 // pred_check
      _
    $region38: #{deeper_gcn_forward.22} parent=5 // pred_check_branch
      %221 = sbr.rel (%p218) target = $region40
    $region39: #{deeper_gcn_forward.22} parent=5 // pred_region
      %s222 = ssub.s32 %s13, 1
      %s223 = smul.u32 2, %s18
      %p224 = scmp.lt.s32.totalorder %s223, 3
      %s225 = scalar_select %p224, %s223, 3
      %s226 = smul.addr %s225, 2
      %s227 = smul.addr %s226, 4
      %s228 = scalar_lea.vmem %s0, %s227
      %p229 = pneg %p39
      %p230 = pneg %p36
      %p231 = pneg %p60
      %p232 = pneg %p57
      %p233 = pneg %p81
      %p234 = pneg %p78
      %p235 = pneg %p102
      %p236 = pneg %p99
      %p237 = pneg %p123
      %p238 = pneg %p120
      %p239 = pneg %p149
      %p240 = pneg %p146
      %s241 = smul.u32 2, %s18
      %p242 = scmp.lt.s32.totalorder %s241, 3
      %s243 = scalar_select %p242, %s241, 3
      %s244 = smul.addr %s243, 2
      %s245 = smul.addr %s244, 4
      %s246 = scalar_lea.vmem %s5, %s245
      %p247 = pneg %p175
      %p248 = pneg %p172
      %p249 = scmp.lt.s32.totalorder %s18, 1
      %s250 = scalar_select %p249, %s18, 1
      %s251 = smul.addr %s250, 2
      %s252 = smul.addr %s251, 8
      %s253 = scalar_lea.vmem %s6, %s252
      %s254 = smul.u32 2, %s18
      %p255 = scmp.lt.s32.totalorder %s254, 3
      %s256 = scalar_select %p255, %s254, 3
      %s257 = smul.addr %s256, 2
      %s258 = smul.addr %s257, 4
      %s259 = scalar_lea.vmem %s0, %s258
      %s260 = smul.u32 2, %s18
      %s261 = smul.u32 2, %s18
      %p262 = scmp.lt.s32.totalorder %s261, 3
      %s263 = scalar_select %p262, %s261, 3
      %s264 = smul.addr %s263, 2
      %s265 = smul.addr %s264, 4
      %s266 = scalar_lea.vmem %s5, %s265
      %s267 = smul.u32 2, %s18
      %p268 = scmp.lt.s32.totalorder %s18, 1
      %s269 = scalar_select %p268, %s18, 1
      %s270 = smul.addr %s269, 2
      %s271 = smul.addr %s270, 8
      %s272 = scalar_lea.vmem %s6, %s271
      %v273 = vld [vmem:[%s259] sm:$0xff]
      %v274 = vld [vmem:[%s259 + $0x8] sm:$0xff]
      %v275 = vunpack.c.l.bf16 %v273
      %v276 = vunpack.c.h.bf16 %v273
      %v277 = vunpack.c.l.bf16 %v274
      %v278 = vunpack.c.h.bf16 %v274
      %v279 = vld [vmem:[%s1] sm:$0x3]
      %v281 = vlaneseq
      %v282 = vshrl.u32 %v281, 7
      %v283 = vsub.s32 0, %v282
      %v284 = vrot.slane %v279, %v283
      %v285 = vlaneseq
      %v286 = vshrl.u32 %v285, 7
      %v287 = vsub.s32 1, %v286
      %v288 = vrot.slane %v279, %v287
      %v291 = vmul.f32 %v275, %v284
      %v292 = vmul.f32 %v276, %v288
      %v293 = vmul.f32 %v277, %v284
      %v294 = vmul.f32 %v278, %v288
      %v295 = vld [vmem:[%s2] sm:$0x3]
      %v297 = vlaneseq
      %v298 = vshrl.u32 %v297, 7
      %v299 = vsub.s32 0, %v298
      %v300 = vrot.slane %v295, %v299
      %v301 = vlaneseq
      %v302 = vshrl.u32 %v301, 7
      %v303 = vsub.s32 1, %v302
      %v304 = vrot.slane %v295, %v303
      %v307 = vadd.f32 %v291, %v300
      %v308 = vadd.f32 %v292, %v304
      %v309 = vadd.f32 %v293, %v300
      %v310 = vadd.f32 %v294, %v304
      %v311 = vmax.f32 %v307, 0.0
      %v312 = vmax.f32 %v308, 0.0
      %v313 = vmax.f32 %v309, 0.0
      %v314 = vmax.f32 %v310, 0.0
      %v315 = vpack.c.bf16 %v313, %v311
      %v316 = vpack.c.bf16 %v314, %v312
      %v317 = vld [vmem:[%s3] sm:$0xff]
      %v318 = vld [vmem:[%s3 + $0x8] sm:$0xff]
      %v319 = vld [vmem:[%s3 + $0x10] sm:$0xff]
      %v320 = vld [vmem:[%s3 + $0x18] sm:$0xff]
      %v321 = vld [vmem:[%s3 + $0x20] sm:$0xff]
      %v322 = vld [vmem:[%s3 + $0x28] sm:$0xff]
      %v323 = vld [vmem:[%s3 + $0x30] sm:$0xff]
      %v324 = vld [vmem:[%s3 + $0x38] sm:$0xff]
      %v325 = vld [vmem:[%s3 + $0x40] sm:$0xff]
      %v326 = vld [vmem:[%s3 + $0x48] sm:$0xff]
      %v327 = vld [vmem:[%s3 + $0x50] sm:$0xff]
      %v328 = vld [vmem:[%s3 + $0x58] sm:$0xff]
      %v329 = vld [vmem:[%s3 + $0x60] sm:$0xff]
      %v330 = vld [vmem:[%s3 + $0x68] sm:$0xff]
      %v331 = vld [vmem:[%s3 + $0x70] sm:$0xff]
      %v332 = vld [vmem:[%s3 + $0x78] sm:$0xff]
      %v333 = vld [vmem:[%s3 + $0x80] sm:$0xff]
      %v334 = vld [vmem:[%s3 + $0x88] sm:$0xff]
      %v335 = vld [vmem:[%s3 + $0x90] sm:$0xff]
      %v336 = vld [vmem:[%s3 + $0x98] sm:$0xff]
      %v337 = vld [vmem:[%s3 + $0xa0] sm:$0xff]
      %v338 = vld [vmem:[%s3 + $0xa8] sm:$0xff]
      %v339 = vld [vmem:[%s3 + $0xb0] sm:$0xff]
      %v340 = vld [vmem:[%s3 + $0xb8] sm:$0xff]
      %v341 = vld [vmem:[%s3 + $0xc0] sm:$0xff]
      %v342 = vld [vmem:[%s3 + $0xc8] sm:$0xff]
      %v343 = vld [vmem:[%s3 + $0xd0] sm:$0xff]
      %v344 = vld [vmem:[%s3 + $0xd8] sm:$0xff]
      %v345 = vld [vmem:[%s3 + $0xe0] sm:$0xff]
      %v346 = vld [vmem:[%s3 + $0xe8] sm:$0xff]
      %v347 = vld [vmem:[%s3 + $0xf0] sm:$0xff]
      %v348 = vld [vmem:[%s3 + $0xf8] sm:$0xff]
      %v349 = vld [vmem:[%s4] sm:$0x3]
      %v351 = vlaneseq
      %v352 = vshrl.u32 %v351, 7
      %v353 = vsub.s32 0, %v352
      %v354 = vrot.slane %v349, %v353
      %v355 = vlaneseq
      %v356 = vshrl.u32 %v355, 7
      %v357 = vsub.s32 1, %v356
      %v358 = vrot.slane %v349, %v357
      %v393 = vunpack.c.l.b16 %v317
      %v394 = vunpack.c.h.b16 %v317
      %v395 = vunpack.c.l.b16 %v318
      %v396 = vunpack.c.h.b16 %v318
      %v397 = vunpack.c.l.b16 %v319
      %v398 = vunpack.c.h.b16 %v319
      %v399 = vunpack.c.l.b16 %v320
      %v400 = vunpack.c.h.b16 %v320
      %v401 = vunpack.c.l.b16 %v321
      %v402 = vunpack.c.h.b16 %v321
      %v403 = vunpack.c.l.b16 %v322
      %v404 = vunpack.c.h.b16 %v322
      %v405 = vunpack.c.l.b16 %v323
      %v406 = vunpack.c.h.b16 %v323
      %v407 = vunpack.c.l.b16 %v324
      %v408 = vunpack.c.h.b16 %v324
      %v409 = vunpack.c.l.b16 %v325
      %v410 = vunpack.c.h.b16 %v325
      %v411 = vunpack.c.l.b16 %v326
      %v412 = vunpack.c.h.b16 %v326
      %v413 = vunpack.c.l.b16 %v327
      %v414 = vunpack.c.h.b16 %v327
      %v415 = vunpack.c.l.b16 %v328
      %v416 = vunpack.c.h.b16 %v328
      %v417 = vunpack.c.l.b16 %v329
      %v418 = vunpack.c.h.b16 %v329
      %v419 = vunpack.c.l.b16 %v330
      %v420 = vunpack.c.h.b16 %v330
      %v421 = vunpack.c.l.b16 %v331
      %v422 = vunpack.c.h.b16 %v331
      %v423 = vunpack.c.l.b16 %v332
      %v424 = vunpack.c.h.b16 %v332
      %v425 = vunpack.c.l.b16 %v333
      %v426 = vunpack.c.h.b16 %v333
      %v427 = vunpack.c.l.b16 %v334
      %v428 = vunpack.c.h.b16 %v334
      %v429 = vunpack.c.l.b16 %v335
      %v430 = vunpack.c.h.b16 %v335
      %v431 = vunpack.c.l.b16 %v336
      %v432 = vunpack.c.h.b16 %v336
      %v433 = vunpack.c.l.b16 %v337
      %v434 = vunpack.c.h.b16 %v337
      %v435 = vunpack.c.l.b16 %v338
      %v436 = vunpack.c.h.b16 %v338
      %v437 = vunpack.c.l.b16 %v339
      %v438 = vunpack.c.h.b16 %v339
      %v439 = vunpack.c.l.b16 %v340
      %v440 = vunpack.c.h.b16 %v340
      %v441 = vunpack.c.l.b16 %v341
      %v442 = vunpack.c.h.b16 %v341
      %v443 = vunpack.c.l.b16 %v342
      %v444 = vunpack.c.h.b16 %v342
      %v445 = vunpack.c.l.b16 %v343
      %v446 = vunpack.c.h.b16 %v343
      %v447 = vunpack.c.l.b16 %v344
      %v448 = vunpack.c.h.b16 %v344
      %v449 = vunpack.c.l.b16 %v345
      %v450 = vunpack.c.h.b16 %v345
      %v451 = vunpack.c.l.b16 %v346
      %v452 = vunpack.c.h.b16 %v346
      %v453 = vunpack.c.l.b16 %v347
      %v454 = vunpack.c.h.b16 %v347
      %v455 = vunpack.c.l.b16 %v348
      %v456 = vunpack.c.h.b16 %v348
      %v457 = vpack.c.b16 %v395, %v393
      %v458 = vpack.c.b16 %v396, %v394
      %v459 = vpack.c.b16 %v399, %v397
      %v460 = vpack.c.b16 %v400, %v398
      %v461 = vpack.c.b16 %v403, %v401
      %v462 = vpack.c.b16 %v404, %v402
      %v463 = vpack.c.b16 %v407, %v405
      %v464 = vpack.c.b16 %v408, %v406
      %v465 = vpack.c.b16 %v411, %v409
      %v466 = vpack.c.b16 %v412, %v410
      %v467 = vpack.c.b16 %v415, %v413
      %v468 = vpack.c.b16 %v416, %v414
      %v469 = vpack.c.b16 %v419, %v417
      %v470 = vpack.c.b16 %v420, %v418
      %v471 = vpack.c.b16 %v423, %v421
      %v472 = vpack.c.b16 %v424, %v422
      %v473 = vpack.c.b16 %v427, %v425
      %v474 = vpack.c.b16 %v428, %v426
      %v475 = vpack.c.b16 %v431, %v429
      %v476 = vpack.c.b16 %v432, %v430
      %v477 = vpack.c.b16 %v435, %v433
      %v478 = vpack.c.b16 %v436, %v434
      %v479 = vpack.c.b16 %v439, %v437
      %v480 = vpack.c.b16 %v440, %v438
      %v481 = vpack.c.b16 %v443, %v441
      %v482 = vpack.c.b16 %v444, %v442
      %v483 = vpack.c.b16 %v447, %v445
      %v484 = vpack.c.b16 %v448, %v446
      %v485 = vpack.c.b16 %v451, %v449
      %v486 = vpack.c.b16 %v452, %v450
      %v487 = vpack.c.b16 %v455, %v453
      %v488 = vpack.c.b16 %v456, %v454
      %521 = vmatprep.subr.bf16.mxu0 %v472
      %522 = vmatpush1.bf16.msra.mxu0 %v471
      %523 = vmatprep.subr.bf16.mxu0 %v470
      %524 = vmatpush1.bf16.msra.mxu0 %v469
      %525 = vmatprep.subr.bf16.mxu0 %v468
      %526 = vmatpush1.bf16.msra.mxu0 %v467
      %527 = vmatprep.subr.bf16.mxu0 %v466
      %528 = vmatpush1.bf16.msra.mxu0 %v465
      %529 = vmatprep.subr.bf16.mxu0 %v464
      %530 = vmatpush1.bf16.msra.mxu0 %v463
      %531 = vmatprep.subr.bf16.mxu0 %v462
      %532 = vmatpush1.bf16.msra.mxu0 %v461
      %533 = vmatprep.subr.bf16.mxu0 %v460
      %534 = vmatpush1.bf16.msra.mxu0 %v459
      %535 = vmatprep.subr.bf16.mxu0 %v458
      %536 = vmatpush1.bf16.msra.mxu0 %v457
      %537 = vmatprep.subr.bf16.mxu0 %v488
      %538 = vmatpush2.bf16.msra.mxu0 %v487
      %539 = vmatprep.subr.bf16.mxu0 %v486
      %540 = vmatpush2.bf16.msra.mxu0 %v485
      %541 = vmatprep.subr.bf16.mxu0 %v484
      %542 = vmatpush2.bf16.msra.mxu0 %v483
      %543 = vmatprep.subr.bf16.mxu0 %v482
      %544 = vmatpush2.bf16.msra.mxu0 %v481
      %545 = vmatprep.subr.bf16.mxu0 %v480
      %546 = vmatpush2.bf16.msra.mxu0 %v479
      %547 = vmatprep.subr.bf16.mxu0 %v478
      %548 = vmatpush2.bf16.msra.mxu0 %v477
      %549 = vmatprep.subr.bf16.mxu0 %v476
      %550 = vmatpush2.bf16.msra.mxu0 %v475
      %551 = vmatprep.subr.bf16.mxu0 %v474
      %552 = vmatpush2.bf16.msra.mxu0 %v473
      %553 = vmatprep.mubr.bf16.mxu0 %v316
      %554 = vmatmul.mubr.bf16.gmra.mxu0 %v315
      %v555 = vpop.f32.mrf.mxu0
      %v556 = vadd.f32 %v354, %v555
      %v557 = vpop.f32.mrf.mxu0
      %v558 = vadd.f32 %v358, %v557
      %v559 = vpop.f32.mrf.mxu0
      %v560 = vadd.f32 %v354, %v559
      %v561 = vpop.f32.mrf.mxu0
      %v562 = vadd.f32 %v358, %v561
      %563 = vdwg.mxu0
      %v564 = vpack.c.bf16 %v560, %v556
      %v565 = vpack.c.bf16 %v562, %v558
      %v568 = vunpack.c.l.b16 %v564
      %v569 = vunpack.c.l.b16 %v565
      %v570 = vunpack.c.h.b16 %v564
      %v571 = vunpack.c.h.b16 %v565
      %v572 = vpack.c.b16 %v569, %v568
      %v573 = vpack.c.b16 %v571, %v570
      %576 = vst [vmem:[%s266] sm:$0xff] %v572
      %577 = vst [vmem:[%s266 + $0x8] sm:$0xff] %v573
      %s578 = smul.u32 %s18, 16
      %v579 = vlaneseq
      %v580 = vshrl.u32 %v579, 7
      %v581 = vadd.s32 %v580, 8
      %v582 = vstv %s578
      %v583 = vadd.s32 %v582, %v580
      %v584 = vadd.s32 %v582, %v581
      %vm585 = vcmp.lt.s32.totalorder %v583, 32
      %vm586 = vcmp.lt.s32.totalorder %v584, 32
      %v587 = vsel %vm585, 1, 0
      %v588 = vsel %vm586, 1, 0
      %vm589 = vcmp.eq.s32.totalorder %v587, 1
      %vm590 = vcmp.eq.s32.totalorder %v588, 1
      %v591 = vsel %vm589, %v556, 0.0
      %v592 = vsel %vm589, %v558, 0.0
      %v593 = vsel %vm590, %v560, 0.0
      %v594 = vsel %vm590, %v562, 0.0
      %v595 = vadd.f32 %v591, %v593
      %v596 = vrot.slane %v595, 4
      %v597 = vadd.f32 %v595, %v596
      %v598 = vrot.slane %v597, 2
      %v599 = vadd.f32 %v597, %v598
      %v600 = vrot.slane %v599, 1
      %v601 = vadd.f32 %v599, %v600
      %v602 = vadd.f32 %v592, %v594
      %v603 = vrot.slane %v602, 4
      %v604 = vadd.f32 %v602, %v603
      %v605 = vrot.slane %v604, 2
      %v606 = vadd.f32 %v604, %v605
      %v607 = vrot.slane %v606, 1
      %v608 = vadd.f32 %v606, %v607
      %v609 = vmul.f32 %v591, %v591
      %v610 = vmul.f32 %v592, %v592
      %v611 = vmul.f32 %v593, %v593
      %v612 = vmul.f32 %v594, %v594
      %v613 = vadd.f32 %v609, %v611
      %v614 = vrot.slane %v613, 4
      %v615 = vadd.f32 %v613, %v614
      %v616 = vrot.slane %v615, 2
      %v617 = vadd.f32 %v615, %v616
      %v618 = vrot.slane %v617, 1
      %v619 = vadd.f32 %v617, %v618
      %v620 = vadd.f32 %v610, %v612
      %v621 = vrot.slane %v620, 4
      %v622 = vadd.f32 %v620, %v621
      %v623 = vrot.slane %v622, 2
      %v624 = vadd.f32 %v622, %v623
      %v625 = vrot.slane %v624, 1
      %v626 = vadd.f32 %v624, %v625
      %vm627 = vcmp.eq.s32.totalorder %v580, 0
      %vm628 = vcmp.eq.s32.totalorder %v580, 1
      %v629 = vsel %vm628, %v619, 0.0
      %v630 = vsel %vm628, %v626, 0.0
      %v631 = vsel %vm627, %v601, %v629
      %v632 = vsel %vm627, %v608, %v630
      %633 = vst [vmem:[%s272] sm:$0xff] %v631
      %634 = vst [vmem:[%s272 + $0x8] sm:$0xff] %v632
      %s635 = smul.u32 2, %s18
      %p636 = scmp.lt.s32.totalorder %s635, 3
      %s637 = scalar_select %p636, %s635, 3
      %s638 = smul.addr %s637, 2
      %s639 = smul.addr %s638, 4
      %s640 = scalar_lea.vmem %s5, %s639
      %p641 = scmp.lt.s32.totalorder %s18, 1
      %s642 = scalar_select %p641, %s18, 1
      %s643 = smul.addr %s642, 2
      %s644 = smul.addr %s643, 8
      %s645 = scalar_lea.vmem %s6, %s644
      // Predicated region
      $region41: #{deeper_gcn_forward.22} parent=39 // pred_check
        %p646 = pneg %p146
      $region42: #{deeper_gcn_forward.22} parent=39 // pred_check_branch
        %648 = sbr.rel (%p646) target = $region44
      $region43: #{deeper_gcn_forward.22} parent=39 // pred_region
        %s649 = smul.u32 2, %s18
      $region44: #{deeper_gcn_forward.22} parent=39 // pred_fallthru
        _
      // Predicated region
      $region45: #{deeper_gcn_forward.22} parent=39 // pred_check
        %p650 = pneg %p172
      $region46: #{deeper_gcn_forward.22} parent=39 // pred_check_branch
        %652 = sbr.rel (%p650) target = $region48
      $region47: #{deeper_gcn_forward.22} parent=39 // pred_region
        _
      $region48: #{deeper_gcn_forward.22} parent=39 // pred_fallthru
        _
    $region40: #{deeper_gcn_forward.22} parent=5 // pred_fallthru
      _
    %p653 = scmp.le.s32.totalorder 2, %s13
    // Predicated region
    $region49: #{deeper_gcn_forward.22} parent=5 // pred_check
      %p654 = pneg %p653
    $region50: #{deeper_gcn_forward.22} parent=5 // pred_check_branch
      %656 = sbr.rel (%p654) target = $region52
    $region51: #{deeper_gcn_forward.22} parent=5 // pred_region
      %s657 = ssub.s32 %s13, 2
      // Predicated region
      $region53: #{deeper_gcn_forward.22} parent=51 // pred_check
        %p658 = pneg %p152
      $region54: #{deeper_gcn_forward.22} parent=51 // pred_check_branch
        %660 = sbr.rel (%p658) target = $region56
      $region55: #{deeper_gcn_forward.22} parent=51 // pred_region
        %s661 = smul.u32 2, %s19
        %p662 = scmp.lt.s32.totalorder %s661, 3
        %s663 = scalar_select %p662, %s661, 3
        %s664 = smul.addr %s663, 2
        %s665 = smul.addr %s664, 4
        %s666 = scalar_lea.vmem %s5, %s665
      $region56: #{deeper_gcn_forward.22} parent=51 // pred_fallthru
        _
      // Predicated region
      $region57: #{deeper_gcn_forward.22} parent=51 // pred_check
        %p667 = pneg %p178
      $region58: #{deeper_gcn_forward.22} parent=51 // pred_check_branch
        %669 = sbr.rel (%p667) target = $region60
      $region59: #{deeper_gcn_forward.22} parent=51 // pred_region
        %p670 = scmp.lt.s32.totalorder %s19, 1
        %s671 = scalar_select %p670, %s19, 1
        %s672 = smul.addr %s671, 2
        %s673 = smul.addr %s672, 8
        %s674 = scalar_lea.vmem %s6, %s673
      $region60: #{deeper_gcn_forward.22} parent=51 // pred_fallthru
        _
    $region52: #{deeper_gcn_forward.22} parent=5 // pred_fallthru
      _
  $region6: #{deeper_gcn_forward.22} parent=0 // loop_footer
    %s17 = sadd.s32 1, %s13
  $region7: #{deeper_gcn_forward.22} parent=0 // loop_footer_branch
    %12 = sbr.rel target = $region3
  $region8: #{deeper_gcn_forward.22} parent=0 // loop_exit
    _

// kernel: deeper_gcn_forward.23
$region0: #{deeper_gcn_forward.23}
  #allocation0 [shape = 'u32[]', space=smem, size = 0x4, offset = 0x4, fixed_abs, tag = 'smem constant byte address 0x4 - core index']
  #allocation1 [shape = 'u32[144,128]{1,0:T(1,128)}', space=vmem, size = 0x12000, scoped, tag = 'internal scratch']
  %s0 = inlined_call_operand.vmem [shape: bf16[32,256], index: 0, kind: input, shape index: {}]
  %s1 = inlined_call_operand.vmem [shape: f32[1,256], index: 1, kind: input, shape index: {}]
  %s2 = inlined_call_operand.vmem [shape: f32[1,256], index: 2, kind: input, shape index: {}]
  %s3 = inlined_call_operand.vmem [shape: bf16[256,128], index: 3, kind: input, shape index: {}]
  %s4 = inlined_call_operand.vmem [shape: f32[1,128], index: 4, kind: input, shape index: {}]
  %s5 = inlined_call_operand.vmem [shape: f32[32,128], index: 5, kind: output, shape index: {0}]
  %s6 = inlined_call_operand.vmem [shape: f32[2,8,128], index: 6, kind: output, shape index: {1}]
  %7 = xla_tuple %s5, %s6
  %s8 = sld [smem:[#allocation0]]
  $region61: #{deeper_gcn_forward.23} parent=0
    _
  %s10 = ssub.s32 1, %s8
  %s11 = scalar_select 0, %s10, %s8
  loop: start=0, step=1, limit=4
  $region2: #{deeper_gcn_forward.23} parent=0 // loop_pre_header
    _
  $region3: #{deeper_gcn_forward.23} parent=0 // loop_header
    %s13 = sphi 0, %s17
    %p14 = scmp.ge.s32.totalorder %s13, 4
    %s23 = sphi 0, %s25
    %s26 = sphi 0, %s23
    %s27 = sphi 0, %s26
    %s43 = sphi 0, %s27
    %s47 = sphi 0, %s47
    %s49 = sphi 0, %s47
    %s50 = sphi 0, %s49
    %s64 = sphi 0, %s50
    %s68 = sphi 0, %s68
    %s70 = sphi 0, %s68
    %s71 = sphi 0, %s70
    %s85 = sphi 0, %s71
    %s89 = sphi 0, %s89
    %s91 = sphi 0, %s89
    %s92 = sphi 0, %s91
    %s106 = sphi 0, %s92
    %s110 = sphi 0, %s110
    %s112 = sphi 0, %s110
    %s113 = sphi 0, %s112
    %s127 = sphi 0, %s113
    %s133 = sphi 0, %s135
    %s136 = sphi 0, %s133
    %s137 = sphi 0, %s136
    %s153 = sphi 0, %s137
    %s159 = sphi 0, %s161
    %s162 = sphi 0, %s159
    %s163 = sphi 0, %s162
    %s179 = sphi 0, %s163
  $region4: #{deeper_gcn_forward.23} parent=0 // loop_header_branch
    %16 = sbr.rel (%p14) target = $region8
  $region5: #{deeper_gcn_forward.23} parent=0 // loop_body
    %s18 = ssub.s32 %s13, 1
    %s19 = ssub.s32 %s13, 2
    %s20 = sadd.s32 %s13, 1
    %s21 = ssub.s32 %s13, %s20
    %p22 = scmp.eq.s32.totalorder %s21, 0
    %s24 = sadd.s32 %s23, 1
    %s25 = scalar_select %p22, %s23, %s24
    %p28 = pneg %p22
    %p29 = scmp.eq.s32.totalorder %s13, 1
    %p30 = por %p28, %p29
    %p31 = scmp.ne.s32.totalorder %s23, %s26
    %p32 = scmp.eq.s32.totalorder %s13, 0
    %p33 = por %p31, %p32
    %p34 = scmp.ne.s32.totalorder %s23, %s26
    %p35 = scmp.eq.s32.totalorder %s18, 1
    %p36 = por %p34, %p35
    %p37 = scmp.ne.s32.totalorder %s26, %s27
    %p38 = scmp.eq.s32.totalorder %s18, 0
    %p39 = por %p37, %p38
    %p40 = scmp.ne.s32.totalorder %s26, %s27
    %p41 = scmp.eq.s32.totalorder %s19, 1
    %p42 = por %p40, %p41
    %p44 = scmp.ne.s32.totalorder %s27, %s43
    %p45 = scmp.eq.s32.totalorder %s19, 0
    %p46 = por %p44, %p45
    %s48 = sadd.s32 %s47, 1
    %p51 = scmp.eq.s32.totalorder %s13, 1
    %p52 = scmp.ne.s32.totalorder %s47, %s49
    %p53 = scmp.eq.s32.totalorder %s13, 0
    %p54 = por %p52, %p53
    %p55 = scmp.ne.s32.totalorder %s47, %s49
    %p56 = scmp.eq.s32.totalorder %s18, 1
    %p57 = por %p55, %p56
    %p58 = scmp.ne.s32.totalorder %s49, %s50
    %p59 = scmp.eq.s32.totalorder %s18, 0
    %p60 = por %p58, %p59
    %p61 = scmp.ne.s32.totalorder %s49, %s50
    %p62 = scmp.eq.s32.totalorder %s19, 1
    %p63 = por %p61, %p62
    %p65 = scmp.ne.s32.totalorder %s50, %s64
    %p66 = scmp.eq.s32.totalorder %s19, 0
    %p67 = por %p65, %p66
    %s69 = sadd.s32 %s68, 1
    %p72 = scmp.eq.s32.totalorder %s13, 1
    %p73 = scmp.ne.s32.totalorder %s68, %s70
    %p74 = scmp.eq.s32.totalorder %s13, 0
    %p75 = por %p73, %p74
    %p76 = scmp.ne.s32.totalorder %s68, %s70
    %p77 = scmp.eq.s32.totalorder %s18, 1
    %p78 = por %p76, %p77
    %p79 = scmp.ne.s32.totalorder %s70, %s71
    %p80 = scmp.eq.s32.totalorder %s18, 0
    %p81 = por %p79, %p80
    %p82 = scmp.ne.s32.totalorder %s70, %s71
    %p83 = scmp.eq.s32.totalorder %s19, 1
    %p84 = por %p82, %p83
    %p86 = scmp.ne.s32.totalorder %s71, %s85
    %p87 = scmp.eq.s32.totalorder %s19, 0
    %p88 = por %p86, %p87
    %s90 = sadd.s32 %s89, 1
    %p93 = scmp.eq.s32.totalorder %s13, 1
    %p94 = scmp.ne.s32.totalorder %s89, %s91
    %p95 = scmp.eq.s32.totalorder %s13, 0
    %p96 = por %p94, %p95
    %p97 = scmp.ne.s32.totalorder %s89, %s91
    %p98 = scmp.eq.s32.totalorder %s18, 1
    %p99 = por %p97, %p98
    %p100 = scmp.ne.s32.totalorder %s91, %s92
    %p101 = scmp.eq.s32.totalorder %s18, 0
    %p102 = por %p100, %p101
    %p103 = scmp.ne.s32.totalorder %s91, %s92
    %p104 = scmp.eq.s32.totalorder %s19, 1
    %p105 = por %p103, %p104
    %p107 = scmp.ne.s32.totalorder %s92, %s106
    %p108 = scmp.eq.s32.totalorder %s19, 0
    %p109 = por %p107, %p108
    %s111 = sadd.s32 %s110, 1
    %p114 = scmp.eq.s32.totalorder %s13, 1
    %p115 = scmp.ne.s32.totalorder %s110, %s112
    %p116 = scmp.eq.s32.totalorder %s13, 0
    %p117 = por %p115, %p116
    %p118 = scmp.ne.s32.totalorder %s110, %s112
    %p119 = scmp.eq.s32.totalorder %s18, 1
    %p120 = por %p118, %p119
    %p121 = scmp.ne.s32.totalorder %s112, %s113
    %p122 = scmp.eq.s32.totalorder %s18, 0
    %p123 = por %p121, %p122
    %p124 = scmp.ne.s32.totalorder %s112, %s113
    %p125 = scmp.eq.s32.totalorder %s19, 1
    %p126 = por %p124, %p125
    %p128 = scmp.ne.s32.totalorder %s113, %s127
    %p129 = scmp.eq.s32.totalorder %s19, 0
    %p130 = por %p128, %p129
    %s131 = ssub.s32 %s13, %s20
    %p132 = scmp.eq.s32.totalorder %s131, 0
    %s134 = sadd.s32 %s133, 1
    %s135 = scalar_select %p132, %s133, %s134
    %p138 = pneg %p132
    %p139 = scmp.eq.s32.totalorder %s13, 1
    %p140 = por %p138, %p139
    %p141 = scmp.ne.s32.totalorder %s133, %s136
    %p142 = scmp.eq.s32.totalorder %s13, 0
    %p143 = por %p141, %p142
    %p144 = scmp.ne.s32.totalorder %s133, %s136
    %p145 = scmp.eq.s32.totalorder %s18, 1
    %p146 = por %p144, %p145
    %p147 = scmp.ne.s32.totalorder %s136, %s137
    %p148 = scmp.eq.s32.totalorder %s18, 0
    %p149 = por %p147, %p148
    %p150 = scmp.ne.s32.totalorder %s136, %s137
    %p151 = scmp.eq.s32.totalorder %s19, 1
    %p152 = por %p150, %p151
    %p154 = scmp.ne.s32.totalorder %s137, %s153
    %p155 = scmp.eq.s32.totalorder %s19, 0
    %p156 = por %p154, %p155
    %s157 = ssub.s32 %s13, %s20
    %p158 = scmp.eq.s32.totalorder %s157, 0
    %s160 = sadd.s32 %s159, 1
    %s161 = scalar_select %p158, %s159, %s160
    %p164 = pneg %p158
    %p165 = scmp.eq.s32.totalorder %s13, 1
    %p166 = por %p164, %p165
    %p167 = scmp.ne.s32.totalorder %s159, %s162
    %p168 = scmp.eq.s32.totalorder %s13, 0
    %p169 = por %p167, %p168
    %p170 = scmp.ne.s32.totalorder %s159, %s162
    %p171 = scmp.eq.s32.totalorder %s18, 1
    %p172 = por %p170, %p171
    %p173 = scmp.ne.s32.totalorder %s162, %s163
    %p174 = scmp.eq.s32.totalorder %s18, 0
    %p175 = por %p173, %p174
    %p176 = scmp.ne.s32.totalorder %s162, %s163
    %p177 = scmp.eq.s32.totalorder %s19, 1
    %p178 = por %p176, %p177
    %p180 = scmp.ne.s32.totalorder %s163, %s179
    %p181 = scmp.eq.s32.totalorder %s19, 0
    %p182 = por %p180, %p181
    %p183 = scmp.le.s32.totalorder 1, %s13
    %p184 = scmp.lt.s32.totalorder %s13, 3
    %p185 = pnand %p183, %p184
    %p186 = pneg %p185
    // Predicated region
    $region9: #{deeper_gcn_forward.23} parent=5 // pred_check
      _
    $region10: #{deeper_gcn_forward.23} parent=5 // pred_check_branch
      %188 = sbr.rel (%p185) target = $region12
    $region11: #{deeper_gcn_forward.23} parent=5 // pred_region
      %s189 = ssub.s32 %s13, 1
      // Predicated region
      $region13: #{deeper_gcn_forward.23} parent=11 // pred_check
        %p190 = pneg %p60
      $region14: #{deeper_gcn_forward.23} parent=11 // pred_check_branch
        %192 = sbr.rel (%p190) target = $region16
      $region15: #{deeper_gcn_forward.23} parent=11 // pred_region
        _
      $region16: #{deeper_gcn_forward.23} parent=11 // pred_fallthru
        _
      // Predicated region
      $region17: #{deeper_gcn_forward.23} parent=11 // pred_check
        %p193 = pneg %p81
      $region18: #{deeper_gcn_forward.23} parent=11 // pred_check_branch
        %195 = sbr.rel (%p193) target = $region20
      $region19: #{deeper_gcn_forward.23} parent=11 // pred_region
        _
      $region20: #{deeper_gcn_forward.23} parent=11 // pred_fallthru
        _
      // Predicated region
      $region21: #{deeper_gcn_forward.23} parent=11 // pred_check
        %p196 = pneg %p102
      $region22: #{deeper_gcn_forward.23} parent=11 // pred_check_branch
        %198 = sbr.rel (%p196) target = $region24
      $region23: #{deeper_gcn_forward.23} parent=11 // pred_region
        _
      $region24: #{deeper_gcn_forward.23} parent=11 // pred_fallthru
        _
      // Predicated region
      $region25: #{deeper_gcn_forward.23} parent=11 // pred_check
        %p199 = pneg %p123
      $region26: #{deeper_gcn_forward.23} parent=11 // pred_check_branch
        %201 = sbr.rel (%p199) target = $region28
      $region27: #{deeper_gcn_forward.23} parent=11 // pred_region
        _
      $region28: #{deeper_gcn_forward.23} parent=11 // pred_fallthru
        _
    $region12: #{deeper_gcn_forward.23} parent=5 // pred_fallthru
      _
    %p202 = scmp.lt.s32.totalorder %s13, 2
    // Predicated region
    $region29: #{deeper_gcn_forward.23} parent=5 // pred_check
      %p203 = pneg %p202
    $region30: #{deeper_gcn_forward.23} parent=5 // pred_check_branch
      %205 = sbr.rel (%p203) target = $region32
    $region31: #{deeper_gcn_forward.23} parent=5 // pred_region
      // Predicated region
      $region33: #{deeper_gcn_forward.23} parent=31 // pred_check
        %p206 = pneg %p33
      $region34: #{deeper_gcn_forward.23} parent=31 // pred_check_branch
        %208 = sbr.rel (%p206) target = $region36
      $region35: #{deeper_gcn_forward.23} parent=31 // pred_region
        %s209 = smul.u32 2, %s13
        %p210 = scmp.lt.s32.totalorder %s209, 3
        %s211 = scalar_select %p210, %s209, 3
        %s212 = smul.addr %s211, 2
        %s213 = smul.addr %s212, 4
        %s214 = scalar_lea.vmem %s0, %s213
        %s215 = smul.u32 2, %s13
      $region36: #{deeper_gcn_forward.23} parent=31 // pred_fallthru
        _
    $region32: #{deeper_gcn_forward.23} parent=5 // pred_fallthru
      _
    %p216 = scmp.le.s32.totalorder 1, %s13
    %p217 = scmp.lt.s32.totalorder %s13, 3
    %p218 = pnand %p216, %p217
    %p219 = pneg %p218
    // Predicated region
    $region37: #{deeper_gcn_forward.23} parent=5 // pred_check
      _
    $region38: #{deeper_gcn_forward.23} parent=5 // pred_check_branch
      %221 = sbr.rel (%p218) target = $region40
    $region39: #{deeper_gcn_forward.23} parent=5 // pred_region
      %s222 = ssub.s32 %s13, 1
      %s223 = smul.u32 2, %s18
      %p224 = scmp.lt.s32.totalorder %s223, 3
      %s225 = scalar_select %p224, %s223, 3
      %s226 = smul.addr %s225, 2
      %s227 = smul.addr %s226, 4
      %s228 = scalar_lea.vmem %s0, %s227
      %p229 = pneg %p39
      %p230 = pneg %p36
      %p231 = pneg %p60
      %p232 = pneg %p57
      %p233 = pneg %p81
      %p234 = pneg %p78
      %p235 = pneg %p102
      %p236 = pneg %p99
      %p237 = pneg %p123
      %p238 = pneg %p120
      %p239 = pneg %p149
      %p240 = pneg %p146
      %s241 = smul.u32 2, %s18
      %p242 = scmp.lt.s32.totalorder %s241, 3
      %s243 = scalar_select %p242, %s241, 3
      %s244 = smul.addr %s243, 8
      %s245 = scalar_lea.vmem %s5, %s244
      %p246 = pneg %p175
      %p247 = pneg %p172
      %p248 = scmp.lt.s32.totalorder %s18, 1
      %s249 = scalar_select %p248, %s18, 1
      %s250 = smul.addr %s249, 8
      %s251 = scalar_lea.vmem %s6, %s250
      %s252 = smul.u32 2, %s18
      %p253 = scmp.lt.s32.totalorder %s252, 3
      %s254 = scalar_select %p253, %s252, 3
      %s255 = smul.addr %s254, 2
      %s256 = smul.addr %s255, 4
      %s257 = scalar_lea.vmem %s0, %s256
      %s258 = smul.u32 2, %s18
      %s259 = smul.u32 2, %s18
      %p260 = scmp.lt.s32.totalorder %s259, 3
      %s261 = scalar_select %p260, %s259, 3
      %s262 = smul.addr %s261, 8
      %s263 = scalar_lea.vmem %s5, %s262
      %s264 = smul.u32 2, %s18
      %p265 = scmp.lt.s32.totalorder %s18, 1
      %s266 = scalar_select %p265, %s18, 1
      %s267 = smul.addr %s266, 8
      %s268 = scalar_lea.vmem %s6, %s267
      %v270 = vld [vmem:[%s257] sm:$0xff]
      %v271 = vld [vmem:[%s257 + $0x8] sm:$0xff]
      %v272 = vunpack.c.l.bf16 %v270
      %v273 = vunpack.c.h.bf16 %v270
      %v274 = vunpack.c.l.bf16 %v271
      %v275 = vunpack.c.h.bf16 %v271
      %v276 = vld [vmem:[%s1] sm:$0x3]
      %v278 = vlaneseq
      %v279 = vshrl.u32 %v278, 7
      %v280 = vsub.s32 0, %v279
      %v281 = vrot.slane %v276, %v280
      %v282 = vlaneseq
      %v283 = vshrl.u32 %v282, 7
      %v284 = vsub.s32 1, %v283
      %v285 = vrot.slane %v276, %v284
      %v288 = vmul.f32 %v272, %v281
      %v289 = vmul.f32 %v273, %v285
      %v290 = vmul.f32 %v274, %v281
      %v291 = vmul.f32 %v275, %v285
      %v292 = vld [vmem:[%s2] sm:$0x3]
      %v294 = vlaneseq
      %v295 = vshrl.u32 %v294, 7
      %v296 = vsub.s32 0, %v295
      %v297 = vrot.slane %v292, %v296
      %v298 = vlaneseq
      %v299 = vshrl.u32 %v298, 7
      %v300 = vsub.s32 1, %v299
      %v301 = vrot.slane %v292, %v300
      %v304 = vadd.f32 %v288, %v297
      %v305 = vadd.f32 %v289, %v301
      %v306 = vadd.f32 %v290, %v297
      %v307 = vadd.f32 %v291, %v301
      %v308 = vmax.f32 %v304, 0.0
      %v309 = vmax.f32 %v305, 0.0
      %v310 = vmax.f32 %v306, 0.0
      %v311 = vmax.f32 %v307, 0.0
      %v312 = vpack.c.bf16 %v310, %v308
      %v313 = vpack.c.bf16 %v311, %v309
      %v314 = vld [vmem:[%s3] sm:$0xf]
      %v315 = vld [vmem:[%s3 + $0x4] sm:$0xf]
      %v316 = vld [vmem:[%s3 + $0x8] sm:$0xf]
      %v317 = vld [vmem:[%s3 + $0xc] sm:$0xf]
      %v318 = vld [vmem:[%s3 + $0x10] sm:$0xf]
      %v319 = vld [vmem:[%s3 + $0x14] sm:$0xf]
      %v320 = vld [vmem:[%s3 + $0x18] sm:$0xf]
      %v321 = vld [vmem:[%s3 + $0x1c] sm:$0xf]
      %v322 = vld [vmem:[%s3 + $0x20] sm:$0xf]
      %v323 = vld [vmem:[%s3 + $0x24] sm:$0xf]
      %v324 = vld [vmem:[%s3 + $0x28] sm:$0xf]
      %v325 = vld [vmem:[%s3 + $0x2c] sm:$0xf]
      %v326 = vld [vmem:[%s3 + $0x30] sm:$0xf]
      %v327 = vld [vmem:[%s3 + $0x34] sm:$0xf]
      %v328 = vld [vmem:[%s3 + $0x38] sm:$0xf]
      %v329 = vld [vmem:[%s3 + $0x3c] sm:$0xf]
      %v330 = vld [vmem:[%s3 + $0x40] sm:$0xf]
      %v331 = vld [vmem:[%s3 + $0x44] sm:$0xf]
      %v332 = vld [vmem:[%s3 + $0x48] sm:$0xf]
      %v333 = vld [vmem:[%s3 + $0x4c] sm:$0xf]
      %v334 = vld [vmem:[%s3 + $0x50] sm:$0xf]
      %v335 = vld [vmem:[%s3 + $0x54] sm:$0xf]
      %v336 = vld [vmem:[%s3 + $0x58] sm:$0xf]
      %v337 = vld [vmem:[%s3 + $0x5c] sm:$0xf]
      %v338 = vld [vmem:[%s3 + $0x60] sm:$0xf]
      %v339 = vld [vmem:[%s3 + $0x64] sm:$0xf]
      %v340 = vld [vmem:[%s3 + $0x68] sm:$0xf]
      %v341 = vld [vmem:[%s3 + $0x6c] sm:$0xf]
      %v342 = vld [vmem:[%s3 + $0x70] sm:$0xf]
      %v343 = vld [vmem:[%s3 + $0x74] sm:$0xf]
      %v344 = vld [vmem:[%s3 + $0x78] sm:$0xf]
      %v345 = vld [vmem:[%s3 + $0x7c] sm:$0xf]
      %v346 = vld [vmem:[%s4] sm:$0x1]
      %v348 = vlaneseq
      %v349 = vshrl.u32 %v348, 7
      %v350 = vsub.s32 0, %v349
      %v351 = vrot.slane %v346, %v350
      %v385 = vunpack.c.l.b16 %v314
      %v386 = vunpack.c.l.b16 %v315
      %v387 = vunpack.c.l.b16 %v316
      %v388 = vunpack.c.l.b16 %v317
      %v389 = vunpack.c.l.b16 %v318
      %v390 = vunpack.c.l.b16 %v319
      %v391 = vunpack.c.l.b16 %v320
      %v392 = vunpack.c.l.b16 %v321
      %v393 = vunpack.c.l.b16 %v322
      %v394 = vunpack.c.l.b16 %v323
      %v395 = vunpack.c.l.b16 %v324
      %v396 = vunpack.c.l.b16 %v325
      %v397 = vunpack.c.l.b16 %v326
      %v398 = vunpack.c.l.b16 %v327
      %v399 = vunpack.c.l.b16 %v328
      %v400 = vunpack.c.l.b16 %v329
      %v401 = vunpack.c.l.b16 %v330
      %v402 = vunpack.c.l.b16 %v331
      %v403 = vunpack.c.l.b16 %v332
      %v404 = vunpack.c.l.b16 %v333
      %v405 = vunpack.c.l.b16 %v334
      %v406 = vunpack.c.l.b16 %v335
      %v407 = vunpack.c.l.b16 %v336
      %v408 = vunpack.c.l.b16 %v337
      %v409 = vunpack.c.l.b16 %v338
      %v410 = vunpack.c.l.b16 %v339
      %v411 = vunpack.c.l.b16 %v340
      %v412 = vunpack.c.l.b16 %v341
      %v413 = vunpack.c.l.b16 %v342
      %v414 = vunpack.c.l.b16 %v343
      %v415 = vunpack.c.l.b16 %v344
      %v416 = vunpack.c.l.b16 %v345
      %v417 = vpack.c.b16 %v386, %v385
      %v418 = vpack.c.b16 %v388, %v387
      %v419 = vpack.c.b16 %v390, %v389
      %v420 = vpack.c.b16 %v392, %v391
      %v421 = vpack.c.b16 %v394, %v393
      %v422 = vpack.c.b16 %v396, %v395
      %v423 = vpack.c.b16 %v398, %v397
      %v424 = vpack.c.b16 %v400, %v399
      %v425 = vpack.c.b16 %v402, %v401
      %v426 = vpack.c.b16 %v404, %v403
      %v427 = vpack.c.b16 %v406, %v405
      %v428 = vpack.c.b16 %v408, %v407
      %v429 = vpack.c.b16 %v410, %v409
      %v430 = vpack.c.b16 %v412, %v411
      %v431 = vpack.c.b16 %v414, %v413
      %v432 = vpack.c.b16 %v416, %v415
      %449 = vmatprep.subr.bf16.mxu0 0
      %450 = vmatpush1.bf16.msra.mxu0 %v424
      %451 = vmatprep.subr.bf16.mxu0 0
      %452 = vmatpush1.bf16.msra.mxu0 %v423
      %453 = vmatprep.subr.bf16.mxu0 0
      %454 = vmatpush1.bf16.msra.mxu0 %v422
      %455 = vmatprep.subr.bf16.mxu0 0
      %456 = vmatpush1.bf16.msra.mxu0 %v421
      %457 = vmatprep.subr.bf16.mxu0 0
      %458 = vmatpush1.bf16.msra.mxu0 %v420
      %459 = vmatprep.subr.bf16.mxu0 0
      %460 = vmatpush1.bf16.msra.mxu0 %v419
      %461 = vmatprep.subr.bf16.mxu0 0
      %462 = vmatpush1.bf16.msra.mxu0 %v418
      %463 = vmatprep.subr.bf16.mxu0 0
      %464 = vmatpush1.bf16.msra.mxu0 %v417
      %465 = vmatprep.subr.bf16.mxu0 0
      %466 = vmatpush2.bf16.msra.mxu0 %v432
      %467 = vmatprep.subr.bf16.mxu0 0
      %468 = vmatpush2.bf16.msra.mxu0 %v431
      %469 = vmatprep.subr.bf16.mxu0 0
      %470 = vmatpush2.bf16.msra.mxu0 %v430
      %471 = vmatprep.subr.bf16.mxu0 0
      %472 = vmatpush2.bf16.msra.mxu0 %v429
      %473 = vmatprep.subr.bf16.mxu0 0
      %474 = vmatpush2.bf16.msra.mxu0 %v428
      %475 = vmatprep.subr.bf16.mxu0 0
      %476 = vmatpush2.bf16.msra.mxu0 %v427
      %477 = vmatprep.subr.bf16.mxu0 0
      %478 = vmatpush2.bf16.msra.mxu0 %v426
      %479 = vmatprep.subr.bf16.mxu0 0
      %480 = vmatpush2.bf16.msra.mxu0 %v425
      %481 = vmatprep.mubr.bf16.mxu0 %v313
      %482 = vmatmul.mubr.bf16.gmra.mxu0 %v312
      %v483 = vpop.f32.mrf.mxu0
      %v484 = vadd.f32 %v351, %v483
      %v485 = vpop.f32.mrf.mxu0
      %v486 = vpop.f32.mrf.mxu0
      %v487 = vadd.f32 %v351, %v486
      %v488 = vpop.f32.mrf.mxu0
      %489 = vdwg.mxu0
      %490 = vst [vmem:[%s263] sm:$0xff] %v484
      %491 = vst [vmem:[%s263 + $0x8] sm:$0xff] %v487
      %s492 = smul.u32 %s18, 16
      %v493 = vlaneseq
      %v494 = vshrl.u32 %v493, 7
      %v495 = vadd.s32 %v494, 8
      %v496 = vstv %s492
      %v497 = vadd.s32 %v496, %v494
      %v498 = vadd.s32 %v496, %v495
      %vm499 = vcmp.lt.s32.totalorder %v497, 32
      %vm500 = vcmp.lt.s32.totalorder %v498, 32
      %v501 = vsel %vm499, 1, 0
      %v502 = vsel %vm500, 1, 0
      %vm503 = vcmp.eq.s32.totalorder %v501, 1
      %vm504 = vcmp.eq.s32.totalorder %v502, 1
      %v505 = vsel %vm503, %v484, 0.0
      %v506 = vsel %vm504, %v487, 0.0
      %v507 = vadd.f32 %v505, %v506
      %v508 = vrot.slane %v507, 4
      %v509 = vadd.f32 %v507, %v508
      %v510 = vrot.slane %v509, 2
      %v511 = vadd.f32 %v509, %v510
      %v512 = vrot.slane %v511, 1
      %v513 = vadd.f32 %v511, %v512
      %v514 = vmul.f32 %v505, %v505
      %v515 = vmul.f32 %v506, %v506
      %v516 = vadd.f32 %v514, %v515
      %v517 = vrot.slane %v516, 4
      %v518 = vadd.f32 %v516, %v517
      %v519 = vrot.slane %v518, 2
      %v520 = vadd.f32 %v518, %v519
      %v521 = vrot.slane %v520, 1
      %v522 = vadd.f32 %v520, %v521
      %vm523 = vcmp.eq.s32.totalorder %v494, 0
      %vm524 = vcmp.eq.s32.totalorder %v494, 1
      %v525 = vsel %vm524, %v522, 0.0
      %v526 = vsel %vm523, %v513, %v525
      %527 = vst [vmem:[%s268] sm:$0xff] %v526
      %s528 = smul.u32 2, %s18
      %p529 = scmp.lt.s32.totalorder %s528, 3
      %s530 = scalar_select %p529, %s528, 3
      %s531 = smul.addr %s530, 8
      %s532 = scalar_lea.vmem %s5, %s531
      %p533 = scmp.lt.s32.totalorder %s18, 1
      %s534 = scalar_select %p533, %s18, 1
      %s535 = smul.addr %s534, 8
      %s536 = scalar_lea.vmem %s6, %s535
      // Predicated region
      $region41: #{deeper_gcn_forward.23} parent=39 // pred_check
        %p537 = pneg %p146
      $region42: #{deeper_gcn_forward.23} parent=39 // pred_check_branch
        %539 = sbr.rel (%p537) target = $region44
      $region43: #{deeper_gcn_forward.23} parent=39 // pred_region
        %s540 = smul.u32 2, %s18
      $region44: #{deeper_gcn_forward.23} parent=39 // pred_fallthru
        _
      // Predicated region
      $region45: #{deeper_gcn_forward.23} parent=39 // pred_check
        %p541 = pneg %p172
      $region46: #{deeper_gcn_forward.23} parent=39 // pred_check_branch
        %543 = sbr.rel (%p541) target = $region48
      $region47: #{deeper_gcn_forward.23} parent=39 // pred_region
        _
      $region48: #{deeper_gcn_forward.23} parent=39 // pred_fallthru
        _
    $region40: #{deeper_gcn_forward.23} parent=5 // pred_fallthru
      _
    %p544 = scmp.le.s32.totalorder 2, %s13
    // Predicated region
    $region49: #{deeper_gcn_forward.23} parent=5 // pred_check
      %p545 = pneg %p544
    $region50: #{deeper_gcn_forward.23} parent=5 // pred_check_branch
      %547 = sbr.rel (%p545) target = $region52
    $region51: #{deeper_gcn_forward.23} parent=5 // pred_region
      %s548 = ssub.s32 %s13, 2
      // Predicated region
      $region53: #{deeper_gcn_forward.23} parent=51 // pred_check
        %p549 = pneg %p152
      $region54: #{deeper_gcn_forward.23} parent=51 // pred_check_branch
        %551 = sbr.rel (%p549) target = $region56
      $region55: #{deeper_gcn_forward.23} parent=51 // pred_region
        %s552 = smul.u32 2, %s19
        %p553 = scmp.lt.s32.totalorder %s552, 3
        %s554 = scalar_select %p553, %s552, 3
        %s555 = smul.addr %s554, 8
        %s556 = scalar_lea.vmem %s5, %s555
      $region56: #{deeper_gcn_forward.23} parent=51 // pred_fallthru
        _
      // Predicated region
      $region57: #{deeper_gcn_forward.23} parent=51 // pred_check
        %p557 = pneg %p178
      $region58: #{deeper_gcn_forward.23} parent=51 // pred_check_branch
        %559 = sbr.rel (%p557) target = $region60
      $region59: #{deeper_gcn_forward.23} parent=51 // pred_region
        %p560 = scmp.lt.s32.totalorder %s19, 1
        %s561 = scalar_select %p560, %s19, 1
        %s562 = smul.addr %s561, 8
        %s563 = scalar_lea.vmem %s6, %s562
      $region60: #{deeper_gcn_forward.23} parent=51 // pred_fallthru
        _
    $region52: #{deeper_gcn_forward.23} parent=5 // pred_fallthru
      _
  $region6: #{deeper_gcn_forward.23} parent=0 // loop_footer
    %s17 = sadd.s32 1, %s13
  $region7: #{deeper_gcn_forward.23} parent=0 // loop_footer_branch
    %12 = sbr.rel target = $region3
  $region8: #{deeper_gcn_forward.23} parent=0 // loop_exit
    _

// kernel: deeper_gcn_forward.24
$region0: #{deeper_gcn_forward.24}
  #allocation0 [shape = 'u32[]', space=smem, size = 0x4, offset = 0x4, fixed_abs, tag = 'smem constant byte address 0x4 - core index']
  #allocation1 [shape = 'u32[144,128]{1,0:T(1,128)}', space=vmem, size = 0x12000, scoped, tag = 'internal scratch']
  %s0 = inlined_call_operand.vmem [shape: f32[32,128], index: 0, kind: input, shape index: {}]
  %s1 = inlined_call_operand.vmem [shape: f32[1,128], index: 1, kind: input, shape index: {}]
  %s2 = inlined_call_operand.vmem [shape: f32[1,128], index: 2, kind: input, shape index: {}]
  %s3 = inlined_call_operand.vmem [shape: f32[32,128], index: 3, kind: output, shape index: {}]
  %s4 = sld [smem:[#allocation0]]
  $region45: #{deeper_gcn_forward.24} parent=0
    _
  %s6 = ssub.s32 1, %s4
  %s7 = scalar_select 0, %s6, %s4
  loop: start=0, step=1, limit=4
  $region2: #{deeper_gcn_forward.24} parent=0 // loop_pre_header
    _
  $region3: #{deeper_gcn_forward.24} parent=0 // loop_header
    %s9 = sphi 0, %s13
    %p10 = scmp.ge.s32.totalorder %s9, 4
    %s19 = sphi 0, %s21
    %s22 = sphi 0, %s19
    %s23 = sphi 0, %s22
    %s39 = sphi 0, %s23
    %s43 = sphi 0, %s43
    %s45 = sphi 0, %s43
    %s46 = sphi 0, %s45
    %s60 = sphi 0, %s46
    %s64 = sphi 0, %s64
    %s66 = sphi 0, %s64
    %s67 = sphi 0, %s66
    %s81 = sphi 0, %s67
    %s87 = sphi 0, %s89
    %s90 = sphi 0, %s87
    %s91 = sphi 0, %s90
    %s107 = sphi 0, %s91
  $region4: #{deeper_gcn_forward.24} parent=0 // loop_header_branch
    %12 = sbr.rel (%p10) target = $region8
  $region5: #{deeper_gcn_forward.24} parent=0 // loop_body
    %s14 = ssub.s32 %s9, 1
    %s15 = ssub.s32 %s9, 2
    %s16 = sadd.s32 %s9, 1
    %s17 = ssub.s32 %s9, %s16
    %p18 = scmp.eq.s32.totalorder %s17, 0
    %s20 = sadd.s32 %s19, 1
    %s21 = scalar_select %p18, %s19, %s20
    %p24 = pneg %p18
    %p25 = scmp.eq.s32.totalorder %s9, 1
    %p26 = por %p24, %p25
    %p27 = scmp.ne.s32.totalorder %s19, %s22
    %p28 = scmp.eq.s32.totalorder %s9, 0
    %p29 = por %p27, %p28
    %p30 = scmp.ne.s32.totalorder %s19, %s22
    %p31 = scmp.eq.s32.totalorder %s14, 1
    %p32 = por %p30, %p31
    %p33 = scmp.ne.s32.totalorder %s22, %s23
    %p34 = scmp.eq.s32.totalorder %s14, 0
    %p35 = por %p33, %p34
    %p36 = scmp.ne.s32.totalorder %s22, %s23
    %p37 = scmp.eq.s32.totalorder %s15, 1
    %p38 = por %p36, %p37
    %p40 = scmp.ne.s32.totalorder %s23, %s39
    %p41 = scmp.eq.s32.totalorder %s15, 0
    %p42 = por %p40, %p41
    %s44 = sadd.s32 %s43, 1
    %p47 = scmp.eq.s32.totalorder %s9, 1
    %p48 = scmp.ne.s32.totalorder %s43, %s45
    %p49 = scmp.eq.s32.totalorder %s9, 0
    %p50 = por %p48, %p49
    %p51 = scmp.ne.s32.totalorder %s43, %s45
    %p52 = scmp.eq.s32.totalorder %s14, 1
    %p53 = por %p51, %p52
    %p54 = scmp.ne.s32.totalorder %s45, %s46
    %p55 = scmp.eq.s32.totalorder %s14, 0
    %p56 = por %p54, %p55
    %p57 = scmp.ne.s32.totalorder %s45, %s46
    %p58 = scmp.eq.s32.totalorder %s15, 1
    %p59 = por %p57, %p58
    %p61 = scmp.ne.s32.totalorder %s46, %s60
    %p62 = scmp.eq.s32.totalorder %s15, 0
    %p63 = por %p61, %p62
    %s65 = sadd.s32 %s64, 1
    %p68 = scmp.eq.s32.totalorder %s9, 1
    %p69 = scmp.ne.s32.totalorder %s64, %s66
    %p70 = scmp.eq.s32.totalorder %s9, 0
    %p71 = por %p69, %p70
    %p72 = scmp.ne.s32.totalorder %s64, %s66
    %p73 = scmp.eq.s32.totalorder %s14, 1
    %p74 = por %p72, %p73
    %p75 = scmp.ne.s32.totalorder %s66, %s67
    %p76 = scmp.eq.s32.totalorder %s14, 0
    %p77 = por %p75, %p76
    %p78 = scmp.ne.s32.totalorder %s66, %s67
    %p79 = scmp.eq.s32.totalorder %s15, 1
    %p80 = por %p78, %p79
    %p82 = scmp.ne.s32.totalorder %s67, %s81
    %p83 = scmp.eq.s32.totalorder %s15, 0
    %p84 = por %p82, %p83
    %s85 = ssub.s32 %s9, %s16
    %p86 = scmp.eq.s32.totalorder %s85, 0
    %s88 = sadd.s32 %s87, 1
    %s89 = scalar_select %p86, %s87, %s88
    %p92 = pneg %p86
    %p93 = scmp.eq.s32.totalorder %s9, 1
    %p94 = por %p92, %p93
    %p95 = scmp.ne.s32.totalorder %s87, %s90
    %p96 = scmp.eq.s32.totalorder %s9, 0
    %p97 = por %p95, %p96
    %p98 = scmp.ne.s32.totalorder %s87, %s90
    %p99 = scmp.eq.s32.totalorder %s14, 1
    %p100 = por %p98, %p99
    %p101 = scmp.ne.s32.totalorder %s90, %s91
    %p102 = scmp.eq.s32.totalorder %s14, 0
    %p103 = por %p101, %p102
    %p104 = scmp.ne.s32.totalorder %s90, %s91
    %p105 = scmp.eq.s32.totalorder %s15, 1
    %p106 = por %p104, %p105
    %p108 = scmp.ne.s32.totalorder %s91, %s107
    %p109 = scmp.eq.s32.totalorder %s15, 0
    %p110 = por %p108, %p109
    %p111 = scmp.le.s32.totalorder 1, %s9
    %p112 = scmp.lt.s32.totalorder %s9, 3
    %p113 = pnand %p111, %p112
    %p114 = pneg %p113
    // Predicated region
    $region9: #{deeper_gcn_forward.24} parent=5 // pred_check
      _
    $region10: #{deeper_gcn_forward.24} parent=5 // pred_check_branch
      %116 = sbr.rel (%p113) target = $region12
    $region11: #{deeper_gcn_forward.24} parent=5 // pred_region
      %s117 = ssub.s32 %s9, 1
      // Predicated region
      $region13: #{deeper_gcn_forward.24} parent=11 // pred_check
        %p118 = pneg %p56
      $region14: #{deeper_gcn_forward.24} parent=11 // pred_check_branch
        %120 = sbr.rel (%p118) target = $region16
      $region15: #{deeper_gcn_forward.24} parent=11 // pred_region
        _
      $region16: #{deeper_gcn_forward.24} parent=11 // pred_fallthru
        _
      // Predicated region
      $region17: #{deeper_gcn_forward.24} parent=11 // pred_check
        %p121 = pneg %p77
      $region18: #{deeper_gcn_forward.24} parent=11 // pred_check_branch
        %123 = sbr.rel (%p121) target = $region20
      $region19: #{deeper_gcn_forward.24} parent=11 // pred_region
        _
      $region20: #{deeper_gcn_forward.24} parent=11 // pred_fallthru
        _
    $region12: #{deeper_gcn_forward.24} parent=5 // pred_fallthru
      _
    %p124 = scmp.lt.s32.totalorder %s9, 2
    // Predicated region
    $region21: #{deeper_gcn_forward.24} parent=5 // pred_check
      %p125 = pneg %p124
    $region22: #{deeper_gcn_forward.24} parent=5 // pred_check_branch
      %127 = sbr.rel (%p125) target = $region24
    $region23: #{deeper_gcn_forward.24} parent=5 // pred_region
      // Predicated region
      $region25: #{deeper_gcn_forward.24} parent=23 // pred_check
        %p128 = pneg %p29
      $region26: #{deeper_gcn_forward.24} parent=23 // pred_check_branch
        %130 = sbr.rel (%p128) target = $region28
      $region27: #{deeper_gcn_forward.24} parent=23 // pred_region
        %s131 = smul.u32 2, %s9
        %p132 = scmp.lt.s32.totalorder %s131, 3
        %s133 = scalar_select %p132, %s131, 3
        %s134 = smul.addr %s133, 8
        %s135 = scalar_lea.vmem %s0, %s134
        %s136 = smul.u32 2, %s9
      $region28: #{deeper_gcn_forward.24} parent=23 // pred_fallthru
        _
    $region24: #{deeper_gcn_forward.24} parent=5 // pred_fallthru
      _
    %p137 = scmp.le.s32.totalorder 1, %s9
    %p138 = scmp.lt.s32.totalorder %s9, 3
    %p139 = pnand %p137, %p138
    %p140 = pneg %p139
    // Predicated region
    $region29: #{deeper_gcn_forward.24} parent=5 // pred_check
      _
    $region30: #{deeper_gcn_forward.24} parent=5 // pred_check_branch
      %142 = sbr.rel (%p139) target = $region32
    $region31: #{deeper_gcn_forward.24} parent=5 // pred_region
      %s143 = ssub.s32 %s9, 1
      %s144 = smul.u32 2, %s14
      %p145 = scmp.lt.s32.totalorder %s144, 3
      %s146 = scalar_select %p145, %s144, 3
      %s147 = smul.addr %s146, 8
      %s148 = scalar_lea.vmem %s0, %s147
      %p149 = pneg %p35
      %p150 = pneg %p32
      %p151 = pneg %p56
      %p152 = pneg %p53
      %p153 = pneg %p77
      %p154 = pneg %p74
      %p155 = pneg %p103
      %p156 = pneg %p100
      %s157 = smul.u32 2, %s14
      %p158 = scmp.lt.s32.totalorder %s157, 3
      %s159 = scalar_select %p158, %s157, 3
      %s160 = smul.addr %s159, 8
      %s161 = scalar_lea.vmem %s3, %s160
      %s162 = smul.u32 2, %s14
      %p163 = scmp.lt.s32.totalorder %s162, 3
      %s164 = scalar_select %p163, %s162, 3
      %s165 = smul.addr %s164, 8
      %s166 = scalar_lea.vmem %s0, %s165
      %s167 = smul.u32 2, %s14
      %s168 = smul.u32 2, %s14
      %p169 = scmp.lt.s32.totalorder %s168, 3
      %s170 = scalar_select %p169, %s168, 3
      %s171 = smul.addr %s170, 8
      %s172 = scalar_lea.vmem %s3, %s171
      %s173 = smul.u32 2, %s14
      %v174 = vld [vmem:[%s166] sm:$0xff]
      %v175 = vld [vmem:[%s166 + $0x8] sm:$0xff]
      %v176 = vld [vmem:[%s1] sm:$0x1]
      %v178 = vlaneseq
      %v179 = vshrl.u32 %v178, 7
      %v180 = vsub.s32 0, %v179
      %v181 = vrot.slane %v176, %v180
      %v183 = vmul.f32 %v174, %v181
      %v184 = vmul.f32 %v175, %v181
      %v185 = vld [vmem:[%s2] sm:$0x1]
      %v187 = vlaneseq
      %v188 = vshrl.u32 %v187, 7
      %v189 = vsub.s32 0, %v188
      %v190 = vrot.slane %v185, %v189
      %v192 = vadd.f32 %v183, %v190
      %v193 = vadd.f32 %v184, %v190
      %v194 = vmax.f32 %v192, 0.0
      %v195 = vmax.f32 %v193, 0.0
      %196 = vst [vmem:[%s172] sm:$0xff] %v194
      %197 = vst [vmem:[%s172 + $0x8] sm:$0xff] %v195
      %s198 = smul.u32 2, %s14
      %p199 = scmp.lt.s32.totalorder %s198, 3
      %s200 = scalar_select %p199, %s198, 3
      %s201 = smul.addr %s200, 8
      %s202 = scalar_lea.vmem %s3, %s201
      // Predicated region
      $region33: #{deeper_gcn_forward.24} parent=31 // pred_check
        %p203 = pneg %p100
      $region34: #{deeper_gcn_forward.24} parent=31 // pred_check_branch
        %205 = sbr.rel (%p203) target = $region36
      $region35: #{deeper_gcn_forward.24} parent=31 // pred_region
        %s206 = smul.u32 2, %s14
      $region36: #{deeper_gcn_forward.24} parent=31 // pred_fallthru
        _
    $region32: #{deeper_gcn_forward.24} parent=5 // pred_fallthru
      _
    %p207 = scmp.le.s32.totalorder 2, %s9
    // Predicated region
    $region37: #{deeper_gcn_forward.24} parent=5 // pred_check
      %p208 = pneg %p207
    $region38: #{deeper_gcn_forward.24} parent=5 // pred_check_branch
      %210 = sbr.rel (%p208) target = $region40
    $region39: #{deeper_gcn_forward.24} parent=5 // pred_region
      %s211 = ssub.s32 %s9, 2
      // Predicated region
      $region41: #{deeper_gcn_forward.24} parent=39 // pred_check
        %p212 = pneg %p106
      $region42: #{deeper_gcn_forward.24} parent=39 // pred_check_branch
        %214 = sbr.rel (%p212) target = $region44
      $region43: #{deeper_gcn_forward.24} parent=39 // pred_region
        %s215 = smul.u32 2, %s15
        %p216 = scmp.lt.s32.totalorder %s215, 3
        %s217 = scalar_select %p216, %s215, 3
        %s218 = smul.addr %s217, 8
        %s219 = scalar_lea.vmem %s3, %s218
      $region44: #{deeper_gcn_forward.24} parent=39 // pred_fallthru
        _
    $region40: #{deeper_gcn_forward.24} parent=5 // pred_fallthru
      _
  $region6: #{deeper_gcn_forward.24} parent=0 // loop_footer
    %s13 = sadd.s32 1, %s9
  $region7: #{deeper_gcn_forward.24} parent=0 // loop_footer_branch
    %8 = sbr.rel target = $region3
  $region8: #{deeper_gcn_forward.24} parent=0 // loop_exit
    _

// kernel: deeper_gcn_forward.28
$region0: #{deeper_gcn_forward.28}
  #allocation0 [shape = 'u32[]', space=smem, size = 0x4, offset = 0x4, fixed_abs, tag = 'smem constant byte address 0x4 - core index']
  #allocation1 [shape = 'u32[144,128]{1,0:T(1,128)}', space=vmem, size = 0x12000, scoped, tag = 'internal scratch']
  %s0 = inlined_call_operand.vmem [shape: bf16[32,256], index: 0, kind: input, shape index: {}]
  %s1 = inlined_call_operand.vmem [shape: f32[1,256], index: 1, kind: input, shape index: {}]
  %s2 = inlined_call_operand.vmem [shape: f32[1,256], index: 2, kind: input, shape index: {}]
  %s3 = inlined_call_operand.vmem [shape: bf16[256,128], index: 3, kind: input, shape index: {}]
  %s4 = inlined_call_operand.vmem [shape: f32[1,128], index: 4, kind: input, shape index: {}]
  %s5 = inlined_call_operand.vmem [shape: f32[32,128], index: 5, kind: input, shape index: {}, may-alias: {5,6}]
  %s6 = inlined_call_operand.vmem [shape: f32[32,128], index: 6, kind: output, shape index: {0}, may-alias: {5,6}]
  %s7 = inlined_call_operand.vmem [shape: f32[2,8,128], index: 7, kind: output, shape index: {1}]
  %8 = xla_tuple %s6, %s7
  %s9 = sld [smem:[#allocation0]]
  $region65: #{deeper_gcn_forward.28} parent=0
    _
  %s11 = ssub.s32 1, %s9
  %s12 = scalar_select 0, %s11, %s9
  loop: start=0, step=1, limit=4
  $region2: #{deeper_gcn_forward.28} parent=0 // loop_pre_header
    _
  $region3: #{deeper_gcn_forward.28} parent=0 // loop_header
    %s14 = sphi 0, %s18
    %p15 = scmp.ge.s32.totalorder %s14, 4
    %s24 = sphi 0, %s26
    %s27 = sphi 0, %s24
    %s28 = sphi 0, %s27
    %s44 = sphi 0, %s28
    %s48 = sphi 0, %s48
    %s50 = sphi 0, %s48
    %s51 = sphi 0, %s50
    %s65 = sphi 0, %s51
    %s69 = sphi 0, %s69
    %s71 = sphi 0, %s69
    %s72 = sphi 0, %s71
    %s86 = sphi 0, %s72
    %s90 = sphi 0, %s90
    %s92 = sphi 0, %s90
    %s93 = sphi 0, %s92
    %s107 = sphi 0, %s93
    %s111 = sphi 0, %s111
    %s113 = sphi 0, %s111
    %s114 = sphi 0, %s113
    %s128 = sphi 0, %s114
    %s134 = sphi 0, %s136
    %s137 = sphi 0, %s134
    %s138 = sphi 0, %s137
    %s154 = sphi 0, %s138
    %s160 = sphi 0, %s162
    %s163 = sphi 0, %s160
    %s164 = sphi 0, %s163
    %s180 = sphi 0, %s164
    %s186 = sphi 0, %s188
    %s189 = sphi 0, %s186
    %s190 = sphi 0, %s189
    %s206 = sphi 0, %s190
  $region4: #{deeper_gcn_forward.28} parent=0 // loop_header_branch
    %17 = sbr.rel (%p15) target = $region8
  $region5: #{deeper_gcn_forward.28} parent=0 // loop_body
    %s19 = ssub.s32 %s14, 1
    %s20 = ssub.s32 %s14, 2
    %s21 = sadd.s32 %s14, 1
    %s22 = ssub.s32 %s14, %s21
    %p23 = scmp.eq.s32.totalorder %s22, 0
    %s25 = sadd.s32 %s24, 1
    %s26 = scalar_select %p23, %s24, %s25
    %p29 = pneg %p23
    %p30 = scmp.eq.s32.totalorder %s14, 1
    %p31 = por %p29, %p30
    %p32 = scmp.ne.s32.totalorder %s24, %s27
    %p33 = scmp.eq.s32.totalorder %s14, 0
    %p34 = por %p32, %p33
    %p35 = scmp.ne.s32.totalorder %s24, %s27
    %p36 = scmp.eq.s32.totalorder %s19, 1
    %p37 = por %p35, %p36
    %p38 = scmp.ne.s32.totalorder %s27, %s28
    %p39 = scmp.eq.s32.totalorder %s19, 0
    %p40 = por %p38, %p39
    %p41 = scmp.ne.s32.totalorder %s27, %s28
    %p42 = scmp.eq.s32.totalorder %s20, 1
    %p43 = por %p41, %p42
    %p45 = scmp.ne.s32.totalorder %s28, %s44
    %p46 = scmp.eq.s32.totalorder %s20, 0
    %p47 = por %p45, %p46
    %s49 = sadd.s32 %s48, 1
    %p52 = scmp.eq.s32.totalorder %s14, 1
    %p53 = scmp.ne.s32.totalorder %s48, %s50
    %p54 = scmp.eq.s32.totalorder %s14, 0
    %p55 = por %p53, %p54
    %p56 = scmp.ne.s32.totalorder %s48, %s50
    %p57 = scmp.eq.s32.totalorder %s19, 1
    %p58 = por %p56, %p57
    %p59 = scmp.ne.s32.totalorder %s50, %s51
    %p60 = scmp.eq.s32.totalorder %s19, 0
    %p61 = por %p59, %p60
    %p62 = scmp.ne.s32.totalorder %s50, %s51
    %p63 = scmp.eq.s32.totalorder %s20, 1
    %p64 = por %p62, %p63
    %p66 = scmp.ne.s32.totalorder %s51, %s65
    %p67 = scmp.eq.s32.totalorder %s20, 0
    %p68 = por %p66, %p67
    %s70 = sadd.s32 %s69, 1
    %p73 = scmp.eq.s32.totalorder %s14, 1
    %p74 = scmp.ne.s32.totalorder %s69, %s71
    %p75 = scmp.eq.s32.totalorder %s14, 0
    %p76 = por %p74, %p75
    %p77 = scmp.ne.s32.totalorder %s69, %s71
    %p78 = scmp.eq.s32.totalorder %s19, 1
    %p79 = por %p77, %p78
    %p80 = scmp.ne.s32.totalorder %s71, %s72
    %p81 = scmp.eq.s32.totalorder %s19, 0
    %p82 = por %p80, %p81
    %p83 = scmp.ne.s32.totalorder %s71, %s72
    %p84 = scmp.eq.s32.totalorder %s20, 1
    %p85 = por %p83, %p84
    %p87 = scmp.ne.s32.totalorder %s72, %s86
    %p88 = scmp.eq.s32.totalorder %s20, 0
    %p89 = por %p87, %p88
    %s91 = sadd.s32 %s90, 1
    %p94 = scmp.eq.s32.totalorder %s14, 1
    %p95 = scmp.ne.s32.totalorder %s90, %s92
    %p96 = scmp.eq.s32.totalorder %s14, 0
    %p97 = por %p95, %p96
    %p98 = scmp.ne.s32.totalorder %s90, %s92
    %p99 = scmp.eq.s32.totalorder %s19, 1
    %p100 = por %p98, %p99
    %p101 = scmp.ne.s32.totalorder %s92, %s93
    %p102 = scmp.eq.s32.totalorder %s19, 0
    %p103 = por %p101, %p102
    %p104 = scmp.ne.s32.totalorder %s92, %s93
    %p105 = scmp.eq.s32.totalorder %s20, 1
    %p106 = por %p104, %p105
    %p108 = scmp.ne.s32.totalorder %s93, %s107
    %p109 = scmp.eq.s32.totalorder %s20, 0
    %p110 = por %p108, %p109
    %s112 = sadd.s32 %s111, 1
    %p115 = scmp.eq.s32.totalorder %s14, 1
    %p116 = scmp.ne.s32.totalorder %s111, %s113
    %p117 = scmp.eq.s32.totalorder %s14, 0
    %p118 = por %p116, %p117
    %p119 = scmp.ne.s32.totalorder %s111, %s113
    %p120 = scmp.eq.s32.totalorder %s19, 1
    %p121 = por %p119, %p120
    %p122 = scmp.ne.s32.totalorder %s113, %s114
    %p123 = scmp.eq.s32.totalorder %s19, 0
    %p124 = por %p122, %p123
    %p125 = scmp.ne.s32.totalorder %s113, %s114
    %p126 = scmp.eq.s32.totalorder %s20, 1
    %p127 = por %p125, %p126
    %p129 = scmp.ne.s32.totalorder %s114, %s128
    %p130 = scmp.eq.s32.totalorder %s20, 0
    %p131 = por %p129, %p130
    %s132 = ssub.s32 %s14, %s21
    %p133 = scmp.eq.s32.totalorder %s132, 0
    %s135 = sadd.s32 %s134, 1
    %s136 = scalar_select %p133, %s134, %s135
    %p139 = pneg %p133
    %p140 = scmp.eq.s32.totalorder %s14, 1
    %p141 = por %p139, %p140
    %p142 = scmp.ne.s32.totalorder %s134, %s137
    %p143 = scmp.eq.s32.totalorder %s14, 0
    %p144 = por %p142, %p143
    %p145 = scmp.ne.s32.totalorder %s134, %s137
    %p146 = scmp.eq.s32.totalorder %s19, 1
    %p147 = por %p145, %p146
    %p148 = scmp.ne.s32.totalorder %s137, %s138
    %p149 = scmp.eq.s32.totalorder %s19, 0
    %p150 = por %p148, %p149
    %p151 = scmp.ne.s32.totalorder %s137, %s138
    %p152 = scmp.eq.s32.totalorder %s20, 1
    %p153 = por %p151, %p152
    %p155 = scmp.ne.s32.totalorder %s138, %s154
    %p156 = scmp.eq.s32.totalorder %s20, 0
    %p157 = por %p155, %p156
    %s158 = ssub.s32 %s14, %s21
    %p159 = scmp.eq.s32.totalorder %s158, 0
    %s161 = sadd.s32 %s160, 1
    %s162 = scalar_select %p159, %s160, %s161
    %p165 = pneg %p159
    %p166 = scmp.eq.s32.totalorder %s14, 1
    %p167 = por %p165, %p166
    %p168 = scmp.ne.s32.totalorder %s160, %s163
    %p169 = scmp.eq.s32.totalorder %s14, 0
    %p170 = por %p168, %p169
    %p171 = scmp.ne.s32.totalorder %s160, %s163
    %p172 = scmp.eq.s32.totalorder %s19, 1
    %p173 = por %p171, %p172
    %p174 = scmp.ne.s32.totalorder %s163, %s164
    %p175 = scmp.eq.s32.totalorder %s19, 0
    %p176 = por %p174, %p175
    %p177 = scmp.ne.s32.totalorder %s163, %s164
    %p178 = scmp.eq.s32.totalorder %s20, 1
    %p179 = por %p177, %p178
    %p181 = scmp.ne.s32.totalorder %s164, %s180
    %p182 = scmp.eq.s32.totalorder %s20, 0
    %p183 = por %p181, %p182
    %s184 = ssub.s32 %s14, %s21
    %p185 = scmp.eq.s32.totalorder %s184, 0
    %s187 = sadd.s32 %s186, 1
    %s188 = scalar_select %p185, %s186, %s187
    %p191 = pneg %p185
    %p192 = scmp.eq.s32.totalorder %s14, 1
    %p193 = por %p191, %p192
    %p194 = scmp.ne.s32.totalorder %s186, %s189
    %p195 = scmp.eq.s32.totalorder %s14, 0
    %p196 = por %p194, %p195
    %p197 = scmp.ne.s32.totalorder %s186, %s189
    %p198 = scmp.eq.s32.totalorder %s19, 1
    %p199 = por %p197, %p198
    %p200 = scmp.ne.s32.totalorder %s189, %s190
    %p201 = scmp.eq.s32.totalorder %s19, 0
    %p202 = por %p200, %p201
    %p203 = scmp.ne.s32.totalorder %s189, %s190
    %p204 = scmp.eq.s32.totalorder %s20, 1
    %p205 = por %p203, %p204
    %p207 = scmp.ne.s32.totalorder %s190, %s206
    %p208 = scmp.eq.s32.totalorder %s20, 0
    %p209 = por %p207, %p208
    %p210 = scmp.le.s32.totalorder 1, %s14
    %p211 = scmp.lt.s32.totalorder %s14, 3
    %p212 = pnand %p210, %p211
    %p213 = pneg %p212
    // Predicated region
    $region9: #{deeper_gcn_forward.28} parent=5 // pred_check
      _
    $region10: #{deeper_gcn_forward.28} parent=5 // pred_check_branch
      %215 = sbr.rel (%p212) target = $region12
    $region11: #{deeper_gcn_forward.28} parent=5 // pred_region
      %s216 = ssub.s32 %s14, 1
      // Predicated region
      $region13: #{deeper_gcn_forward.28} parent=11 // pred_check
        %p217 = pneg %p61
      $region14: #{deeper_gcn_forward.28} parent=11 // pred_check_branch
        %219 = sbr.rel (%p217) target = $region16
      $region15: #{deeper_gcn_forward.28} parent=11 // pred_region
        _
      $region16: #{deeper_gcn_forward.28} parent=11 // pred_fallthru
        _
      // Predicated region
      $region17: #{deeper_gcn_forward.28} parent=11 // pred_check
        %p220 = pneg %p82
      $region18: #{deeper_gcn_forward.28} parent=11 // pred_check_branch
        %222 = sbr.rel (%p220) target = $region20
      $region19: #{deeper_gcn_forward.28} parent=11 // pred_region
        _
      $region20: #{deeper_gcn_forward.28} parent=11 // pred_fallthru
        _
      // Predicated region
      $region21: #{deeper_gcn_forward.28} parent=11 // pred_check
        %p223 = pneg %p103
      $region22: #{deeper_gcn_forward.28} parent=11 // pred_check_branch
        %225 = sbr.rel (%p223) target = $region24
      $region23: #{deeper_gcn_forward.28} parent=11 // pred_region
        _
      $region24: #{deeper_gcn_forward.28} parent=11 // pred_fallthru
        _
      // Predicated region
      $region25: #{deeper_gcn_forward.28} parent=11 // pred_check
        %p226 = pneg %p124
      $region26: #{deeper_gcn_forward.28} parent=11 // pred_check_branch
        %228 = sbr.rel (%p226) target = $region28
      $region27: #{deeper_gcn_forward.28} parent=11 // pred_region
        _
      $region28: #{deeper_gcn_forward.28} parent=11 // pred_fallthru
        _
    $region12: #{deeper_gcn_forward.28} parent=5 // pred_fallthru
      _
    %p229 = scmp.lt.s32.totalorder %s14, 2
    // Predicated region
    $region29: #{deeper_gcn_forward.28} parent=5 // pred_check
      %p230 = pneg %p229
    $region30: #{deeper_gcn_forward.28} parent=5 // pred_check_branch
      %232 = sbr.rel (%p230) target = $region32
    $region31: #{deeper_gcn_forward.28} parent=5 // pred_region
      // Predicated region
      $region33: #{deeper_gcn_forward.28} parent=31 // pred_check
        %p233 = pneg %p34
      $region34: #{deeper_gcn_forward.28} parent=31 // pred_check_branch
        %235 = sbr.rel (%p233) target = $region36
      $region35: #{deeper_gcn_forward.28} parent=31 // pred_region
        %s236 = smul.u32 2, %s14
        %p237 = scmp.lt.s32.totalorder %s236, 3
        %s238 = scalar_select %p237, %s236, 3
        %s239 = smul.addr %s238, 2
        %s240 = smul.addr %s239, 4
        %s241 = scalar_lea.vmem %s0, %s240
        %s242 = smul.u32 2, %s14
      $region36: #{deeper_gcn_forward.28} parent=31 // pred_fallthru
        _
      // Predicated region
      $region37: #{deeper_gcn_forward.28} parent=31 // pred_check
        %p243 = pneg %p144
      $region38: #{deeper_gcn_forward.28} parent=31 // pred_check_branch
        %245 = sbr.rel (%p243) target = $region40
      $region39: #{deeper_gcn_forward.28} parent=31 // pred_region
        %s246 = smul.u32 2, %s14
        %p247 = scmp.lt.s32.totalorder %s246, 3
        %s248 = scalar_select %p247, %s246, 3
        %s249 = smul.addr %s248, 8
        %s250 = scalar_lea.vmem %s5, %s249
        %s251 = smul.u32 2, %s14
      $region40: #{deeper_gcn_forward.28} parent=31 // pred_fallthru
        _
    $region32: #{deeper_gcn_forward.28} parent=5 // pred_fallthru
      _
    %p252 = scmp.le.s32.totalorder 1, %s14
    %p253 = scmp.lt.s32.totalorder %s14, 3
    %p254 = pnand %p252, %p253
    %p255 = pneg %p254
    // Predicated region
    $region41: #{deeper_gcn_forward.28} parent=5 // pred_check
      _
    $region42: #{deeper_gcn_forward.28} parent=5 // pred_check_branch
      %257 = sbr.rel (%p254) target = $region44
    $region43: #{deeper_gcn_forward.28} parent=5 // pred_region
      %s258 = ssub.s32 %s14, 1
      %s259 = smul.u32 2, %s19
      %p260 = scmp.lt.s32.totalorder %s259, 3
      %s261 = scalar_select %p260, %s259, 3
      %s262 = smul.addr %s261, 2
      %s263 = smul.addr %s262, 4
      %s264 = scalar_lea.vmem %s0, %s263
      %p265 = pneg %p40
      %p266 = pneg %p37
      %p267 = pneg %p61
      %p268 = pneg %p58
      %p269 = pneg %p82
      %p270 = pneg %p79
      %p271 = pneg %p103
      %p272 = pneg %p100
      %p273 = pneg %p124
      %p274 = pneg %p121
      %s275 = smul.u32 2, %s19
      %p276 = scmp.lt.s32.totalorder %s275, 3
      %s277 = scalar_select %p276, %s275, 3
      %s278 = smul.addr %s277, 8
      %s279 = scalar_lea.vmem %s5, %s278
      %p280 = pneg %p150
      %p281 = pneg %p147
      %p282 = pneg %p176
      %p283 = pneg %p173
      %s284 = smul.u32 2, %s19
      %p285 = scmp.lt.s32.totalorder %s284, 3
      %s286 = scalar_select %p285, %s284, 3
      %s287 = smul.addr %s286, 8
      %s288 = scalar_lea.vmem %s6, %s287
      %p289 = pneg %p202
      %p290 = pneg %p199
      %p291 = scmp.lt.s32.totalorder %s19, 1
      %s292 = scalar_select %p291, %s19, 1
      %s293 = smul.addr %s292, 8
      %s294 = scalar_lea.vmem %s7, %s293
      %s295 = smul.u32 2, %s19
      %p296 = scmp.lt.s32.totalorder %s295, 3
      %s297 = scalar_select %p296, %s295, 3
      %s298 = smul.addr %s297, 2
      %s299 = smul.addr %s298, 4
      %s300 = scalar_lea.vmem %s0, %s299
      %s301 = smul.u32 2, %s19
      %s302 = smul.u32 2, %s19
      %p303 = scmp.lt.s32.totalorder %s302, 3
      %s304 = scalar_select %p303, %s302, 3
      %s305 = smul.addr %s304, 8
      %s306 = scalar_lea.vmem %s5, %s305
      %s307 = smul.u32 2, %s19
      %s308 = smul.u32 2, %s19
      %p309 = scmp.lt.s32.totalorder %s308, 3
      %s310 = scalar_select %p309, %s308, 3
      %s311 = smul.addr %s310, 8
      %s312 = scalar_lea.vmem %s6, %s311
      %s313 = smul.u32 2, %s19
      %p314 = scmp.lt.s32.totalorder %s19, 1
      %s315 = scalar_select %p314, %s19, 1
      %s316 = smul.addr %s315, 8
      %s317 = scalar_lea.vmem %s7, %s316
      %v319 = vld [vmem:[%s300] sm:$0xff]
      %v320 = vld [vmem:[%s300 + $0x8] sm:$0xff]
      %v321 = vunpack.c.l.bf16 %v319
      %v322 = vunpack.c.h.bf16 %v319
      %v323 = vunpack.c.l.bf16 %v320
      %v324 = vunpack.c.h.bf16 %v320
      %v325 = vld [vmem:[%s1] sm:$0x3]
      %v327 = vlaneseq
      %v328 = vshrl.u32 %v327, 7
      %v329 = vsub.s32 0, %v328
      %v330 = vrot.slane %v325, %v329
      %v331 = vlaneseq
      %v332 = vshrl.u32 %v331, 7
      %v333 = vsub.s32 1, %v332
      %v334 = vrot.slane %v325, %v333
      %v337 = vmul.f32 %v321, %v330
      %v338 = vmul.f32 %v322, %v334
      %v339 = vmul.f32 %v323, %v330
      %v340 = vmul.f32 %v324, %v334
      %v341 = vld [vmem:[%s2] sm:$0x3]
      %v343 = vlaneseq
      %v344 = vshrl.u32 %v343, 7
      %v345 = vsub.s32 0, %v344
      %v346 = vrot.slane %v341, %v345
      %v347 = vlaneseq
      %v348 = vshrl.u32 %v347, 7
      %v349 = vsub.s32 1, %v348
      %v350 = vrot.slane %v341, %v349
      %v353 = vadd.f32 %v337, %v346
      %v354 = vadd.f32 %v338, %v350
      %v355 = vadd.f32 %v339, %v346
      %v356 = vadd.f32 %v340, %v350
      %v357 = vmax.f32 %v353, 0.0
      %v358 = vmax.f32 %v354, 0.0
      %v359 = vmax.f32 %v355, 0.0
      %v360 = vmax.f32 %v356, 0.0
      %v361 = vpack.c.bf16 %v359, %v357
      %v362 = vpack.c.bf16 %v360, %v358
      %v363 = vld [vmem:[%s3] sm:$0xf]
      %v364 = vld [vmem:[%s3 + $0x4] sm:$0xf]
      %v365 = vld [vmem:[%s3 + $0x8] sm:$0xf]
      %v366 = vld [vmem:[%s3 + $0xc] sm:$0xf]
      %v367 = vld [vmem:[%s3 + $0x10] sm:$0xf]
      %v368 = vld [vmem:[%s3 + $0x14] sm:$0xf]
      %v369 = vld [vmem:[%s3 + $0x18] sm:$0xf]
      %v370 = vld [vmem:[%s3 + $0x1c] sm:$0xf]
      %v371 = vld [vmem:[%s3 + $0x20] sm:$0xf]
      %v372 = vld [vmem:[%s3 + $0x24] sm:$0xf]
      %v373 = vld [vmem:[%s3 + $0x28] sm:$0xf]
      %v374 = vld [vmem:[%s3 + $0x2c] sm:$0xf]
      %v375 = vld [vmem:[%s3 + $0x30] sm:$0xf]
      %v376 = vld [vmem:[%s3 + $0x34] sm:$0xf]
      %v377 = vld [vmem:[%s3 + $0x38] sm:$0xf]
      %v378 = vld [vmem:[%s3 + $0x3c] sm:$0xf]
      %v379 = vld [vmem:[%s3 + $0x40] sm:$0xf]
      %v380 = vld [vmem:[%s3 + $0x44] sm:$0xf]
      %v381 = vld [vmem:[%s3 + $0x48] sm:$0xf]
      %v382 = vld [vmem:[%s3 + $0x4c] sm:$0xf]
      %v383 = vld [vmem:[%s3 + $0x50] sm:$0xf]
      %v384 = vld [vmem:[%s3 + $0x54] sm:$0xf]
      %v385 = vld [vmem:[%s3 + $0x58] sm:$0xf]
      %v386 = vld [vmem:[%s3 + $0x5c] sm:$0xf]
      %v387 = vld [vmem:[%s3 + $0x60] sm:$0xf]
      %v388 = vld [vmem:[%s3 + $0x64] sm:$0xf]
      %v389 = vld [vmem:[%s3 + $0x68] sm:$0xf]
      %v390 = vld [vmem:[%s3 + $0x6c] sm:$0xf]
      %v391 = vld [vmem:[%s3 + $0x70] sm:$0xf]
      %v392 = vld [vmem:[%s3 + $0x74] sm:$0xf]
      %v393 = vld [vmem:[%s3 + $0x78] sm:$0xf]
      %v394 = vld [vmem:[%s3 + $0x7c] sm:$0xf]
      %v395 = vld [vmem:[%s4] sm:$0x1]
      %v397 = vlaneseq
      %v398 = vshrl.u32 %v397, 7
      %v399 = vsub.s32 0, %v398
      %v400 = vrot.slane %v395, %v399
      %v434 = vunpack.c.l.b16 %v363
      %v435 = vunpack.c.l.b16 %v364
      %v436 = vunpack.c.l.b16 %v365
      %v437 = vunpack.c.l.b16 %v366
      %v438 = vunpack.c.l.b16 %v367
      %v439 = vunpack.c.l.b16 %v368
      %v440 = vunpack.c.l.b16 %v369
      %v441 = vunpack.c.l.b16 %v370
      %v442 = vunpack.c.l.b16 %v371
      %v443 = vunpack.c.l.b16 %v372
      %v444 = vunpack.c.l.b16 %v373
      %v445 = vunpack.c.l.b16 %v374
      %v446 = vunpack.c.l.b16 %v375
      %v447 = vunpack.c.l.b16 %v376
      %v448 = vunpack.c.l.b16 %v377
      %v449 = vunpack.c.l.b16 %v378
      %v450 = vunpack.c.l.b16 %v379
      %v451 = vunpack.c.l.b16 %v380
      %v452 = vunpack.c.l.b16 %v381
      %v453 = vunpack.c.l.b16 %v382
      %v454 = vunpack.c.l.b16 %v383
      %v455 = vunpack.c.l.b16 %v384
      %v456 = vunpack.c.l.b16 %v385
      %v457 = vunpack.c.l.b16 %v386
      %v458 = vunpack.c.l.b16 %v387
      %v459 = vunpack.c.l.b16 %v388
      %v460 = vunpack.c.l.b16 %v389
      %v461 = vunpack.c.l.b16 %v390
      %v462 = vunpack.c.l.b16 %v391
      %v463 = vunpack.c.l.b16 %v392
      %v464 = vunpack.c.l.b16 %v393
      %v465 = vunpack.c.l.b16 %v394
      %v466 = vpack.c.b16 %v435, %v434
      %v467 = vpack.c.b16 %v437, %v436
      %v468 = vpack.c.b16 %v439, %v438
      %v469 = vpack.c.b16 %v441, %v440
      %v470 = vpack.c.b16 %v443, %v442
      %v471 = vpack.c.b16 %v445, %v444
      %v472 = vpack.c.b16 %v447, %v446
      %v473 = vpack.c.b16 %v449, %v448
      %v474 = vpack.c.b16 %v451, %v450
      %v475 = vpack.c.b16 %v453, %v452
      %v476 = vpack.c.b16 %v455, %v454
      %v477 = vpack.c.b16 %v457, %v456
      %v478 = vpack.c.b16 %v459, %v458
      %v479 = vpack.c.b16 %v461, %v460
      %v480 = vpack.c.b16 %v463, %v462
      %v481 = vpack.c.b16 %v465, %v464
      %498 = vmatprep.subr.bf16.mxu0 0
      %499 = vmatpush1.bf16.msra.mxu0 %v473
      %500 = vmatprep.subr.bf16.mxu0 0
      %501 = vmatpush1.bf16.msra.mxu0 %v472
      %502 = vmatprep.subr.bf16.mxu0 0
      %503 = vmatpush1.bf16.msra.mxu0 %v471
      %504 = vmatprep.subr.bf16.mxu0 0
      %505 = vmatpush1.bf16.msra.mxu0 %v470
      %506 = vmatprep.subr.bf16.mxu0 0
      %507 = vmatpush1.bf16.msra.mxu0 %v469
      %508 = vmatprep.subr.bf16.mxu0 0
      %509 = vmatpush1.bf16.msra.mxu0 %v468
      %510 = vmatprep.subr.bf16.mxu0 0
      %511 = vmatpush1.bf16.msra.mxu0 %v467
      %512 = vmatprep.subr.bf16.mxu0 0
      %513 = vmatpush1.bf16.msra.mxu0 %v466
      %514 = vmatprep.subr.bf16.mxu0 0
      %515 = vmatpush2.bf16.msra.mxu0 %v481
      %516 = vmatprep.subr.bf16.mxu0 0
      %517 = vmatpush2.bf16.msra.mxu0 %v480
      %518 = vmatprep.subr.bf16.mxu0 0
      %519 = vmatpush2.bf16.msra.mxu0 %v479
      %520 = vmatprep.subr.bf16.mxu0 0
      %521 = vmatpush2.bf16.msra.mxu0 %v478
      %522 = vmatprep.subr.bf16.mxu0 0
      %523 = vmatpush2.bf16.msra.mxu0 %v477
      %524 = vmatprep.subr.bf16.mxu0 0
      %525 = vmatpush2.bf16.msra.mxu0 %v476
      %526 = vmatprep.subr.bf16.mxu0 0
      %527 = vmatpush2.bf16.msra.mxu0 %v475
      %528 = vmatprep.subr.bf16.mxu0 0
      %529 = vmatpush2.bf16.msra.mxu0 %v474
      %530 = vmatprep.mubr.bf16.mxu0 %v362
      %531 = vmatmul.mubr.bf16.gmra.mxu0 %v361
      %v532 = vpop.f32.mrf.mxu0
      %v533 = vadd.f32 %v400, %v532
      %v534 = vpop.f32.mrf.mxu0
      %v535 = vpop.f32.mrf.mxu0
      %v536 = vadd.f32 %v400, %v535
      %v537 = vpop.f32.mrf.mxu0
      %538 = vdwg.mxu0
      %v539 = vld [vmem:[%s306] sm:$0xff]
      %v540 = vld [vmem:[%s306 + $0x8] sm:$0xff]
      %v541 = vadd.f32 %v533, %v539
      %v542 = vadd.f32 %v536, %v540
      %543 = vst [vmem:[%s312] sm:$0xff] %v541
      %544 = vst [vmem:[%s312 + $0x8] sm:$0xff] %v542
      %s545 = smul.u32 %s19, 16
      %v546 = vlaneseq
      %v547 = vshrl.u32 %v546, 7
      %v548 = vadd.s32 %v547, 8
      %v549 = vstv %s545
      %v550 = vadd.s32 %v549, %v547
      %v551 = vadd.s32 %v549, %v548
      %vm552 = vcmp.lt.s32.totalorder %v550, 32
      %vm553 = vcmp.lt.s32.totalorder %v551, 32
      %v554 = vsel %vm552, 1, 0
      %v555 = vsel %vm553, 1, 0
      %vm556 = vcmp.eq.s32.totalorder %v554, 1
      %vm557 = vcmp.eq.s32.totalorder %v555, 1
      %v558 = vsel %vm556, %v541, 0.0
      %v559 = vsel %vm557, %v542, 0.0
      %v560 = vadd.f32 %v558, %v559
      %v561 = vrot.slane %v560, 4
      %v562 = vadd.f32 %v560, %v561
      %v563 = vrot.slane %v562, 2
      %v564 = vadd.f32 %v562, %v563
      %v565 = vrot.slane %v564, 1
      %v566 = vadd.f32 %v564, %v565
      %v567 = vmul.f32 %v558, %v558
      %v568 = vmul.f32 %v559, %v559
      %v569 = vadd.f32 %v567, %v568
      %v570 = vrot.slane %v569, 4
      %v571 = vadd.f32 %v569, %v570
      %v572 = vrot.slane %v571, 2
      %v573 = vadd.f32 %v571, %v572
      %v574 = vrot.slane %v573, 1
      %v575 = vadd.f32 %v573, %v574
      %vm576 = vcmp.eq.s32.totalorder %v547, 0
      %vm577 = vcmp.eq.s32.totalorder %v547, 1
      %v578 = vsel %vm577, %v575, 0.0
      %v579 = vsel %vm576, %v566, %v578
      %580 = vst [vmem:[%s317] sm:$0xff] %v579
      %s581 = smul.u32 2, %s19
      %p582 = scmp.lt.s32.totalorder %s581, 3
      %s583 = scalar_select %p582, %s581, 3
      %s584 = smul.addr %s583, 8
      %s585 = scalar_lea.vmem %s6, %s584
      %p586 = scmp.lt.s32.totalorder %s19, 1
      %s587 = scalar_select %p586, %s19, 1
      %s588 = smul.addr %s587, 8
      %s589 = scalar_lea.vmem %s7, %s588
      // Predicated region
      $region45: #{deeper_gcn_forward.28} parent=43 // pred_check
        %p590 = pneg %p173
      $region46: #{deeper_gcn_forward.28} parent=43 // pred_check_branch
        %592 = sbr.rel (%p590) target = $region48
      $region47: #{deeper_gcn_forward.28} parent=43 // pred_region
        %s593 = smul.u32 2, %s19
      $region48: #{deeper_gcn_forward.28} parent=43 // pred_fallthru
        _
      // Predicated region
      $region49: #{deeper_gcn_forward.28} parent=43 // pred_check
        %p594 = pneg %p199
      $region50: #{deeper_gcn_forward.28} parent=43 // pred_check_branch
        %596 = sbr.rel (%p594) target = $region52
      $region51: #{deeper_gcn_forward.28} parent=43 // pred_region
        _
      $region52: #{deeper_gcn_forward.28} parent=43 // pred_fallthru
        _
    $region44: #{deeper_gcn_forward.28} parent=5 // pred_fallthru
      _
    %p597 = scmp.le.s32.totalorder 2, %s14
    // Predicated region
    $region53: #{deeper_gcn_forward.28} parent=5 // pred_check
      %p598 = pneg %p597
    $region54: #{deeper_gcn_forward.28} parent=5 // pred_check_branch
      %600 = sbr.rel (%p598) target = $region56
    $region55: #{deeper_gcn_forward.28} parent=5 // pred_region
      %s601 = ssub.s32 %s14, 2
      // Predicated region
      $region57: #{deeper_gcn_forward.28} parent=55 // pred_check
        %p602 = pneg %p179
      $region58: #{deeper_gcn_forward.28} parent=55 // pred_check_branch
        %604 = sbr.rel (%p602) target = $region60
      $region59: #{deeper_gcn_forward.28} parent=55 // pred_region
        %s605 = smul.u32 2, %s20
        %p606 = scmp.lt.s32.totalorder %s605, 3
        %s607 = scalar_select %p606, %s605, 3
        %s608 = smul.addr %s607, 8
        %s609 = scalar_lea.vmem %s6, %s608
      $region60: #{deeper_gcn_forward.28} parent=55 // pred_fallthru
        _
      // Predicated region
      $region61: #{deeper_gcn_forward.28} parent=55 // pred_check
        %p610 = pneg %p205
      $region62: #{deeper_gcn_forward.28} parent=55 // pred_check_branch
        %612 = sbr.rel (%p610) target = $region64
      $region63: #{deeper_gcn_forward.28} parent=55 // pred_region
        %p613 = scmp.lt.s32.totalorder %s20, 1
        %s614 = scalar_select %p613, %s20, 1
        %s615 = smul.addr %s614, 8
        %s616 = scalar_lea.vmem %s7, %s615
      $region64: #{deeper_gcn_forward.28} parent=55 // pred_fallthru
        _
    $region56: #{deeper_gcn_forward.28} parent=5 // pred_fallthru
      _
  $region6: #{deeper_gcn_forward.28} parent=0 // loop_footer
    %s18 = sadd.s32 1, %s14
  $region7: #{deeper_gcn_forward.28} parent=0 // loop_footer_branch
    %13 = sbr.rel target = $region3
  $region8: #{deeper_gcn_forward.28} parent=0 // loop_exit
    _

// kernel: deeper_gcn_forward.39
$region0: #{deeper_gcn_forward.39}
  #allocation0 [shape = 'u32[]', space=smem, size = 0x4, offset = 0x4, fixed_abs, tag = 'smem constant byte address 0x4 - core index']
  #allocation1 [shape = 'u32[144,128]{1,0:T(1,128)}', space=vmem, size = 0x12000, scoped, tag = 'internal scratch']
  %s0 = inlined_call_operand.vmem [shape: f32[32,128], index: 0, kind: input, shape index: {}]
  %s1 = inlined_call_operand.vmem [shape: f32[1,128], index: 1, kind: input, shape index: {}]
  %s2 = inlined_call_operand.vmem [shape: f32[1,128], index: 2, kind: input, shape index: {}]
  %s3 = inlined_call_operand.vmem [shape: f32[32,128], index: 3, kind: output, shape index: {}]
  %s4 = sld [smem:[#allocation0]]
  $region45: #{deeper_gcn_forward.39} parent=0
    _
  %s6 = ssub.s32 1, %s4
  %s7 = scalar_select 0, %s6, %s4
  loop: start=0, step=1, limit=4
  $region2: #{deeper_gcn_forward.39} parent=0 // loop_pre_header
    _
  $region3: #{deeper_gcn_forward.39} parent=0 // loop_header
    %s9 = sphi 0, %s13
    %p10 = scmp.ge.s32.totalorder %s9, 4
    %s19 = sphi 0, %s21
    %s22 = sphi 0, %s19
    %s23 = sphi 0, %s22
    %s39 = sphi 0, %s23
    %s43 = sphi 0, %s43
    %s45 = sphi 0, %s43
    %s46 = sphi 0, %s45
    %s60 = sphi 0, %s46
    %s64 = sphi 0, %s64
    %s66 = sphi 0, %s64
    %s67 = sphi 0, %s66
    %s81 = sphi 0, %s67
    %s87 = sphi 0, %s89
    %s90 = sphi 0, %s87
    %s91 = sphi 0, %s90
    %s107 = sphi 0, %s91
  $region4: #{deeper_gcn_forward.39} parent=0 // loop_header_branch
    %12 = sbr.rel (%p10) target = $region8
  $region5: #{deeper_gcn_forward.39} parent=0 // loop_body
    %s14 = ssub.s32 %s9, 1
    %s15 = ssub.s32 %s9, 2
    %s16 = sadd.s32 %s9, 1
    %s17 = ssub.s32 %s9, %s16
    %p18 = scmp.eq.s32.totalorder %s17, 0
    %s20 = sadd.s32 %s19, 1
    %s21 = scalar_select %p18, %s19, %s20
    %p24 = pneg %p18
    %p25 = scmp.eq.s32.totalorder %s9, 1
    %p26 = por %p24, %p25
    %p27 = scmp.ne.s32.totalorder %s19, %s22
    %p28 = scmp.eq.s32.totalorder %s9, 0
    %p29 = por %p27, %p28
    %p30 = scmp.ne.s32.totalorder %s19, %s22
    %p31 = scmp.eq.s32.totalorder %s14, 1
    %p32 = por %p30, %p31
    %p33 = scmp.ne.s32.totalorder %s22, %s23
    %p34 = scmp.eq.s32.totalorder %s14, 0
    %p35 = por %p33, %p34
    %p36 = scmp.ne.s32.totalorder %s22, %s23
    %p37 = scmp.eq.s32.totalorder %s15, 1
    %p38 = por %p36, %p37
    %p40 = scmp.ne.s32.totalorder %s23, %s39
    %p41 = scmp.eq.s32.totalorder %s15, 0
    %p42 = por %p40, %p41
    %s44 = sadd.s32 %s43, 1
    %p47 = scmp.eq.s32.totalorder %s9, 1
    %p48 = scmp.ne.s32.totalorder %s43, %s45
    %p49 = scmp.eq.s32.totalorder %s9, 0
    %p50 = por %p48, %p49
    %p51 = scmp.ne.s32.totalorder %s43, %s45
    %p52 = scmp.eq.s32.totalorder %s14, 1
    %p53 = por %p51, %p52
    %p54 = scmp.ne.s32.totalorder %s45, %s46
    %p55 = scmp.eq.s32.totalorder %s14, 0
    %p56 = por %p54, %p55
    %p57 = scmp.ne.s32.totalorder %s45, %s46
    %p58 = scmp.eq.s32.totalorder %s15, 1
    %p59 = por %p57, %p58
    %p61 = scmp.ne.s32.totalorder %s46, %s60
    %p62 = scmp.eq.s32.totalorder %s15, 0
    %p63 = por %p61, %p62
    %s65 = sadd.s32 %s64, 1
    %p68 = scmp.eq.s32.totalorder %s9, 1
    %p69 = scmp.ne.s32.totalorder %s64, %s66
    %p70 = scmp.eq.s32.totalorder %s9, 0
    %p71 = por %p69, %p70
    %p72 = scmp.ne.s32.totalorder %s64, %s66
    %p73 = scmp.eq.s32.totalorder %s14, 1
    %p74 = por %p72, %p73
    %p75 = scmp.ne.s32.totalorder %s66, %s67
    %p76 = scmp.eq.s32.totalorder %s14, 0
    %p77 = por %p75, %p76
    %p78 = scmp.ne.s32.totalorder %s66, %s67
    %p79 = scmp.eq.s32.totalorder %s15, 1
    %p80 = por %p78, %p79
    %p82 = scmp.ne.s32.totalorder %s67, %s81
    %p83 = scmp.eq.s32.totalorder %s15, 0
    %p84 = por %p82, %p83
    %s85 = ssub.s32 %s9, %s16
    %p86 = scmp.eq.s32.totalorder %s85, 0
    %s88 = sadd.s32 %s87, 1
    %s89 = scalar_select %p86, %s87, %s88
    %p92 = pneg %p86
    %p93 = scmp.eq.s32.totalorder %s9, 1
    %p94 = por %p92, %p93
    %p95 = scmp.ne.s32.totalorder %s87, %s90
    %p96 = scmp.eq.s32.totalorder %s9, 0
    %p97 = por %p95, %p96
    %p98 = scmp.ne.s32.totalorder %s87, %s90
    %p99 = scmp.eq.s32.totalorder %s14, 1
    %p100 = por %p98, %p99
    %p101 = scmp.ne.s32.totalorder %s90, %s91
    %p102 = scmp.eq.s32.totalorder %s14, 0
    %p103 = por %p101, %p102
    %p104 = scmp.ne.s32.totalorder %s90, %s91
    %p105 = scmp.eq.s32.totalorder %s15, 1
    %p106 = por %p104, %p105
    %p108 = scmp.ne.s32.totalorder %s91, %s107
    %p109 = scmp.eq.s32.totalorder %s15, 0
    %p110 = por %p108, %p109
    %p111 = scmp.le.s32.totalorder 1, %s9
    %p112 = scmp.lt.s32.totalorder %s9, 3
    %p113 = pnand %p111, %p112
    %p114 = pneg %p113
    // Predicated region
    $region9: #{deeper_gcn_forward.39} parent=5 // pred_check
      _
    $region10: #{deeper_gcn_forward.39} parent=5 // pred_check_branch
      %116 = sbr.rel (%p113) target = $region12
    $region11: #{deeper_gcn_forward.39} parent=5 // pred_region
      %s117 = ssub.s32 %s9, 1
      // Predicated region
      $region13: #{deeper_gcn_forward.39} parent=11 // pred_check
        %p118 = pneg %p56
      $region14: #{deeper_gcn_forward.39} parent=11 // pred_check_branch
        %120 = sbr.rel (%p118) target = $region16
      $region15: #{deeper_gcn_forward.39} parent=11 // pred_region
        _
      $region16: #{deeper_gcn_forward.39} parent=11 // pred_fallthru
        _
      // Predicated region
      $region17: #{deeper_gcn_forward.39} parent=11 // pred_check
        %p121 = pneg %p77
      $region18: #{deeper_gcn_forward.39} parent=11 // pred_check_branch
        %123 = sbr.rel (%p121) target = $region20
      $region19: #{deeper_gcn_forward.39} parent=11 // pred_region
        _
      $region20: #{deeper_gcn_forward.39} parent=11 // pred_fallthru
        _
    $region12: #{deeper_gcn_forward.39} parent=5 // pred_fallthru
      _
    %p124 = scmp.lt.s32.totalorder %s9, 2
    // Predicated region
    $region21: #{deeper_gcn_forward.39} parent=5 // pred_check
      %p125 = pneg %p124
    $region22: #{deeper_gcn_forward.39} parent=5 // pred_check_branch
      %127 = sbr.rel (%p125) target = $region24
    $region23: #{deeper_gcn_forward.39} parent=5 // pred_region
      // Predicated region
      $region25: #{deeper_gcn_forward.39} parent=23 // pred_check
        %p128 = pneg %p29
      $region26: #{deeper_gcn_forward.39} parent=23 // pred_check_branch
        %130 = sbr.rel (%p128) target = $region28
      $region27: #{deeper_gcn_forward.39} parent=23 // pred_region
        %s131 = smul.u32 2, %s9
        %p132 = scmp.lt.s32.totalorder %s131, 3
        %s133 = scalar_select %p132, %s131, 3
        %s134 = smul.addr %s133, 8
        %s135 = scalar_lea.vmem %s0, %s134
        %s136 = smul.u32 2, %s9
      $region28: #{deeper_gcn_forward.39} parent=23 // pred_fallthru
        _
    $region24: #{deeper_gcn_forward.39} parent=5 // pred_fallthru
      _
    %p137 = scmp.le.s32.totalorder 1, %s9
    %p138 = scmp.lt.s32.totalorder %s9, 3
    %p139 = pnand %p137, %p138
    %p140 = pneg %p139
    // Predicated region
    $region29: #{deeper_gcn_forward.39} parent=5 // pred_check
      _
    $region30: #{deeper_gcn_forward.39} parent=5 // pred_check_branch
      %142 = sbr.rel (%p139) target = $region32
    $region31: #{deeper_gcn_forward.39} parent=5 // pred_region
      %s143 = ssub.s32 %s9, 1
      %s144 = smul.u32 2, %s14
      %p145 = scmp.lt.s32.totalorder %s144, 3
      %s146 = scalar_select %p145, %s144, 3
      %s147 = smul.addr %s146, 8
      %s148 = scalar_lea.vmem %s0, %s147
      %p149 = pneg %p35
      %p150 = pneg %p32
      %p151 = pneg %p56
      %p152 = pneg %p53
      %p153 = pneg %p77
      %p154 = pneg %p74
      %p155 = pneg %p103
      %p156 = pneg %p100
      %s157 = smul.u32 2, %s14
      %p158 = scmp.lt.s32.totalorder %s157, 3
      %s159 = scalar_select %p158, %s157, 3
      %s160 = smul.addr %s159, 8
      %s161 = scalar_lea.vmem %s3, %s160
      %s162 = smul.u32 2, %s14
      %p163 = scmp.lt.s32.totalorder %s162, 3
      %s164 = scalar_select %p163, %s162, 3
      %s165 = smul.addr %s164, 8
      %s166 = scalar_lea.vmem %s0, %s165
      %s167 = smul.u32 2, %s14
      %s168 = smul.u32 2, %s14
      %p169 = scmp.lt.s32.totalorder %s168, 3
      %s170 = scalar_select %p169, %s168, 3
      %s171 = smul.addr %s170, 8
      %s172 = scalar_lea.vmem %s3, %s171
      %s173 = smul.u32 2, %s14
      %v174 = vld [vmem:[%s166] sm:$0xff]
      %v175 = vld [vmem:[%s166 + $0x8] sm:$0xff]
      %v176 = vld [vmem:[%s1] sm:$0x1]
      %v178 = vlaneseq
      %v179 = vshrl.u32 %v178, 7
      %v180 = vsub.s32 0, %v179
      %v181 = vrot.slane %v176, %v180
      %v183 = vmul.f32 %v174, %v181
      %v184 = vmul.f32 %v175, %v181
      %v185 = vld [vmem:[%s2] sm:$0x1]
      %v187 = vlaneseq
      %v188 = vshrl.u32 %v187, 7
      %v189 = vsub.s32 0, %v188
      %v190 = vrot.slane %v185, %v189
      %v192 = vadd.f32 %v183, %v190
      %v193 = vadd.f32 %v184, %v190
      %194 = vst [vmem:[%s172] sm:$0xff] %v192
      %195 = vst [vmem:[%s172 + $0x8] sm:$0xff] %v193
      %s196 = smul.u32 2, %s14
      %p197 = scmp.lt.s32.totalorder %s196, 3
      %s198 = scalar_select %p197, %s196, 3
      %s199 = smul.addr %s198, 8
      %s200 = scalar_lea.vmem %s3, %s199
      // Predicated region
      $region33: #{deeper_gcn_forward.39} parent=31 // pred_check
        %p201 = pneg %p100
      $region34: #{deeper_gcn_forward.39} parent=31 // pred_check_branch
        %203 = sbr.rel (%p201) target = $region36
      $region35: #{deeper_gcn_forward.39} parent=31 // pred_region
        %s204 = smul.u32 2, %s14
      $region36: #{deeper_gcn_forward.39} parent=31 // pred_fallthru
        _
    $region32: #{deeper_gcn_forward.39} parent=5 // pred_fallthru
      _
    %p205 = scmp.le.s32.totalorder 2, %s9
    // Predicated region
    $region37: #{deeper_gcn_forward.39} parent=5 // pred_check
      %p206 = pneg %p205
    $region38: #{deeper_gcn_forward.39} parent=5 // pred_check_branch
      %208 = sbr.rel (%p206) target = $region40
    $region39: #{deeper_gcn_forward.39} parent=5 // pred_region
      %s209 = ssub.s32 %s9, 2
      // Predicated region
      $region41: #{deeper_gcn_forward.39} parent=39 // pred_check
        %p210 = pneg %p106
      $region42: #{deeper_gcn_forward.39} parent=39 // pred_check_branch
        %212 = sbr.rel (%p210) target = $region44
      $region43: #{deeper_gcn_forward.39} parent=39 // pred_region
        %s213 = smul.u32 2, %s15
        %p214 = scmp.lt.s32.totalorder %s213, 3
        %s215 = scalar_select %p214, %s213, 3
        %s216 = smul.addr %s215, 8
        %s217 = scalar_lea.vmem %s3, %s216
      $region44: #{deeper_gcn_forward.39} parent=39 // pred_fallthru
        _
    $region40: #{deeper_gcn_forward.39} parent=5 // pred_fallthru
      _
  $region6: #{deeper_gcn_forward.39} parent=0 // loop_footer
    %s13 = sadd.s32 1, %s9
  $region7: #{deeper_gcn_forward.39} parent=0 // loop_footer_branch
    %8 = sbr.rel target = $region3
  $region8: #{deeper_gcn_forward.39} parent=0 // loop_exit
    _

</llo_original>
